<compile_context>
chip_gen: v5e
topology: v5e:2x2
jax: 0.10.0
libtpu: 0.0.40
codegen_flags: <defaults>
</compile_context>

<pallas_src>
import functools
import math

import jax
import jax.numpy as jnp
from jax.experimental import pallas as pl
from jax.experimental.pallas import tpu as pltpu

D_IN = 512
D_HID = 256


def _mlp_kernel(x_ref, w3_ref, b3_ref, w4_ref, b4_ref, o_ref, *, precision):
    # First linear: [tm, 512] @ [512, 256] -> [tm, 256] on the MXU, f32 acc.
    h = jnp.dot(x_ref[...], w3_ref[...],
                preferred_element_type=jnp.float32, precision=precision)
    h = jnp.maximum(h + b3_ref[...], 0.0)          # bias + ReLU in f32 (VPU)
    # Second linear: [tm, 256] @ [256, 512] -> [tm, 512] on the MXU, f32 acc.
    out = jnp.dot(h.astype(w4_ref.dtype), w4_ref[...],
                  preferred_element_type=jnp.float32, precision=precision)
    o_ref[...] = (out + b4_ref[...]).astype(o_ref.dtype)


@functools.lru_cache(maxsize=1)
def _vmem_limit_bytes():
    """Generation-aware scoped-VMEM budget (48 MiB on v7x, 96 MiB on v5e/v6e)."""
    cap = None
    try:
        info = pltpu.get_tpu_info()
        for name in ("vmem_capacity_bytes", "vmem_bytes", "vmem_size_bytes"):
            cap = getattr(info, name, None)
            if cap:
                break
    except Exception:
        cap = None
    if not cap:
        return 48 << 20                       # safe under v7x's 64 MiB physical
    return min(int(cap) * 3 // 4, 96 << 20)   # 48 MiB on v7x, 96 MiB on v5e/v6e


def _choose_tm(rows, tm_hint):
    """Row-tile selection: big tiles for DMA efficiency, >=4 grid steps for
    megacore balance, (8,·)-aligned whenever the block doesn't span all rows."""
    if rows <= 1024:
        return rows                           # single full-extent block (legal)
    tm_eff = min(tm_hint, rows)
    while tm_eff > 1024 and pl.cdiv(rows, tm_eff) < 4:
        tm_eff //= 2                          # keep both v7x TCs fed
    if tm_eff < rows:
        tm_eff = max(8, (tm_eff // 8) * 8)    # sublane alignment for partial grids
    return tm_eff


@functools.partial(jax.jit, static_argnames=("tm", "compute_dtype"))
def local_attention_mlp(x, w3, b3, w4, b4, *, tm=None, compute_dtype=jnp.bfloat16):
    """x: [..., 512] -> [..., 512].  Weights are [in, out] (x @ W + b).

    compute_dtype: dtype of the MXU operands.  Default bf16 (fast path on
    v5e/v6e/v7x, f32 accumulation, f32 bias+ReLU).  Pass jnp.float32 for exact
    parity with the PyTorch module (dots then run at precision=HIGHEST).
    """
    orig_shape = x.shape
    orig_dtype = x.dtype
    rows = math.prod(orig_shape[:-1]) if len(orig_shape) > 1 else 1

    compute_dtype = jnp.dtype(compute_dtype)
    precision = (jax.lax.Precision.HIGHEST if compute_dtype == jnp.float32
                 else jax.lax.Precision.DEFAULT)

    x2 = x.reshape(rows, D_IN).astype(compute_dtype)
    w3c = w3.astype(compute_dtype)
    w4c = w4.astype(compute_dtype)
    # Biases stay f32 (tiny); shaped (1, D) so the BlockSpec equals full dims.
    b3_2d = b3.reshape(1, D_HID).astype(jnp.float32)
    b4_2d = b4.reshape(1, D_IN).astype(jnp.float32)

    # Tile / VMEM budget, generation aware.
    vmem_limit = _vmem_limit_bytes()
    if tm is None:
        tm = 4096 if vmem_limit >= (96 << 20) else 2048
    tm_eff = _choose_tm(rows, tm)
    grid = (pl.cdiv(rows, tm_eff),)

    in_itemsize = compute_dtype.itemsize
    out_itemsize = jnp.dtype(orig_dtype).itemsize
    cost = pl.CostEstimate(
        flops=4 * rows * D_IN * D_HID,                 # two matmuls, 2*M*N*K each
        transcendentals=0,
        bytes_accessed=(rows * D_IN * (in_itemsize + out_itemsize)   # x read + out write
                        + 2 * D_IN * D_HID * in_itemsize             # W3 + W4
                        + (D_HID + D_IN) * 4),                       # biases (f32)
    )

    out = pl.pallas_call(
        functools.partial(_mlp_kernel, precision=precision),
        out_shape=jax.ShapeDtypeStruct((rows, D_IN), orig_dtype),
        grid_spec=pl.GridSpec(
            grid=grid,
            in_specs=[
                pl.BlockSpec((tm_eff, D_IN), lambda i: (i, 0)),   # x tile
                pl.BlockSpec((D_IN, D_HID), lambda i: (0, 0)),    # W3 (resident)
                pl.BlockSpec((1, D_HID), lambda i: (0, 0)),       # b3 (resident)
                pl.BlockSpec((D_HID, D_IN), lambda i: (0, 0)),    # W4 (resident)
                pl.BlockSpec((1, D_IN), lambda i: (0, 0)),        # b4 (resident)
            ],
            out_specs=pl.BlockSpec((tm_eff, D_IN), lambda i: (i, 0)),
        ),
        compiler_params=pltpu.CompilerParams(
            dimension_semantics=("parallel",),      # shards steps across v7x's 2 TCs
            vmem_limit_bytes=vmem_limit,
        ),
        cost_estimate=cost,
    )(x2, w3c, b3_2d, w4c, b4_2d)

    return out.reshape(orig_shape)


def init_params(key):
    """Deterministic init mirroring nn.Linear's U(-1/sqrt(fan_in), 1/sqrt(fan_in))."""
    k3w, k3b, k4w, k4b = jax.random.split(key, 4)
    bound3 = 1.0 / jnp.sqrt(float(D_IN))
    bound4 = 1.0 / jnp.sqrt(float(D_HID))
    # Stored as [in, out] (transpose of PyTorch's [out, in]) for direct x @ W.
    w3 = jax.random.uniform(k3w, (D_IN, D_HID), jnp.float32, -bound3, bound3)
    b3 = jax.random.uniform(k3b, (D_HID,), jnp.float32, -bound3, bound3)
    w4 = jax.random.uniform(k4w, (D_HID, D_IN), jnp.float32, -bound4, bound4)
    b4 = jax.random.uniform(k4b, (D_IN,), jnp.float32, -bound4, bound4)
    return w3, b3, w4, b4


def _ref_mlp(x, w3, b3, w4, b4):
    """True-f32 reference (explicit HIGHEST precision so the MXU doesn't truncate)."""
    hi = jax.lax.Precision.HIGHEST
    h = jnp.maximum(jnp.matmul(x, w3, precision=hi) + b3, 0.0)
    return jnp.matmul(h, w4, precision=hi) + b4


if __name__ == "__main__":
    key = jax.random.PRNGKey(0)
    kx, kx2, kp = jax.random.split(key, 3)
    w3, b3, w4, b4 = init_params(kp)

    # --- Case 1: small shape matching the module interface, exact f32 path.
    x = jax.random.normal(kx, (2, 8, D_IN), jnp.float32)
    ref = _ref_mlp(x, w3, b3, w4, b4)
    out_f32 = local_attention_mlp(x, w3, b3, w4, b4, compute_dtype=jnp.float32)
    jax.block_until_ready(out_f32)
    assert out_f32.shape == x.shape and out_f32.dtype == x.dtype
    assert jnp.allclose(out_f32, ref, atol=1e-4, rtol=1e-4), "f32 parity mismatch"

    # --- Case 2: default fast path (bf16 MXU operands, f32 acc + bias/ReLU).
    out_fast = local_attention_mlp(x, w3, b3, w4, b4)
    jax.block_until_ready(out_fast)
    assert out_fast.shape == x.shape and out_fast.dtype == x.dtype
    assert jnp.allclose(out_fast, ref, atol=5e-2, rtol=5e-2), "bf16 fast-path mismatch"

    # --- Case 3: rows > 1024 and not a multiple of the tile -> exercises tm
    #             clamping, the partial last block, and the multi-step grid.
    xb = jax.random.normal(kx2, (4, 300, D_IN), jnp.float32)
    refb = _ref_mlp(xb, w3, b3, w4, b4)
    outb = local_attention_mlp(xb, w3, b3, w4, b4, compute_dtype=jnp.float32)
    jax.block_until_ready(outb)
    assert jnp.allclose(outb, refb, atol=1e-4, rtol=1e-4), "f32 mismatch (partial block)"

    outb_fast = local_attention_mlp(xb, w3, b3, w4, b4)
    jax.block_until_ready(outb_fast)
    assert jnp.allclose(outb_fast, refb, atol=5e-2, rtol=5e-2), "bf16 mismatch (partial block)"

    print("KERNEL_OK")
</pallas_src>

<mosaic_0001>
module attributes {stable_mosaic.version = 11 : i64} {
  func.func @_mlp_kernel(%arg0: i32, %arg1: memref<16x512xf32, #tpu.memory_space<vmem>>, %arg2: memref<512x256xf32, #tpu.memory_space<vmem>>, %arg3: memref<1x256xf32, #tpu.memory_space<vmem>>, %arg4: memref<256x512xf32, #tpu.memory_space<vmem>>, %arg5: memref<1x512xf32, #tpu.memory_space<vmem>>, %arg6: memref<16x512xf32, #tpu.memory_space<vmem>>) attributes {dimension_semantics = [#tpu.dimension_semantics<parallel>], iteration_bounds = array<i64: 1>, scalar_prefetch = 0 : i64, scratch_operands = 0 : i64, tpu.core_type = #tpu.core_type<tc>, window_params = [{transform_indices = @transform_0, window_bounds = array<i64: 16, 512>}, {pipeline_mode = #tpu.pipeline_mode<synchronous>, transform_indices = @transform_1, window_bounds = array<i64: 512, 256>}, {pipeline_mode = #tpu.pipeline_mode<synchronous>, transform_indices = @transform_2, window_bounds = array<i64: 1, 256>}, {pipeline_mode = #tpu.pipeline_mode<synchronous>, transform_indices = @transform_3, window_bounds = array<i64: 256, 512>}, {pipeline_mode = #tpu.pipeline_mode<synchronous>, transform_indices = @transform_4, window_bounds = array<i64: 1, 512>}, {transform_indices = @transform_5, window_bounds = array<i64: 16, 512>}]} {
    %c0 = arith.constant 0 : index
    %c0_0 = arith.constant 0 : index
    %0 = vector.load %arg1[%c0, %c0_0] : memref<16x512xf32, #tpu.memory_space<vmem>>, vector<16x512xf32>
    %c0_1 = arith.constant 0 : index
    %c0_2 = arith.constant 0 : index
    %1 = vector.load %arg2[%c0_1, %c0_2] : memref<512x256xf32, #tpu.memory_space<vmem>>, vector<512x256xf32>
    %cst = arith.constant dense<0.000000e+00> : vector<16x256xf32>
    %2 = tpu.matmul %0, %1, %cst {dimension_numbers = #tpu.dot_dimension_numbers<[1], [0], [0], [1], [0, 0, 1, 1], [], []>, precision = #tpu.contract_precision<fp32>} : vector<16x512xf32>, vector<512x256xf32>, vector<16x256xf32> -> vector<16x256xf32>
    %c0_3 = arith.constant 0 : index
    %c0_4 = arith.constant 0 : index
    %3 = vector.load %arg3[%c0_3, %c0_4] : memref<1x256xf32, #tpu.memory_space<vmem>>, vector<1x256xf32>
    %4 = vector.broadcast %3 : vector<1x256xf32> to vector<16x256xf32>
    %5 = arith.addf %2, %4 : vector<16x256xf32>
    %cst_5 = arith.constant 0.000000e+00 : f32
    %6 = vector.broadcast %cst_5 : f32 to vector<16x256xf32>
    %7 = arith.maximumf %5, %6 : vector<16x256xf32>
    %c0_6 = arith.constant 0 : index
    %c0_7 = arith.constant 0 : index
    %8 = vector.load %arg4[%c0_6, %c0_7] : memref<256x512xf32, #tpu.memory_space<vmem>>, vector<256x512xf32>
    %cst_8 = arith.constant dense<0.000000e+00> : vector<16x512xf32>
    %9 = tpu.matmul %7, %8, %cst_8 {dimension_numbers = #tpu.dot_dimension_numbers<[1], [0], [0], [1], [0, 0, 1, 1], [], []>, precision = #tpu.contract_precision<fp32>} : vector<16x256xf32>, vector<256x512xf32>, vector<16x512xf32> -> vector<16x512xf32>
    %c0_9 = arith.constant 0 : index
    %c0_10 = arith.constant 0 : index
    %10 = vector.load %arg5[%c0_9, %c0_10] : memref<1x512xf32, #tpu.memory_space<vmem>>, vector<1x512xf32>
    %11 = vector.broadcast %10 : vector<1x512xf32> to vector<16x512xf32>
    %12 = arith.addf %9, %11 : vector<16x512xf32>
    %c0_11 = arith.constant 0 : index
    %c0_12 = arith.constant 0 : index
    %13 = vector.load %arg6[%c0_11, %c0_12] : memref<16x512xf32, #tpu.memory_space<vmem>>, vector<16x512xf32>
    tpu.vector_store %arg6[%c0_11, %c0_12], %12 {strides = array<i32>} : memref<16x512xf32, #tpu.memory_space<vmem>>, vector<16x512xf32>,
    return
  }
  func.func @transform_0(%arg0: i32) -> (i32, i32) {
    %c0_i32 = arith.constant 0 : i32
    %c0_i32_0 = arith.constant 0 : i32
    return %arg0, %c0_i32 : i32, i32
  }
  func.func @transform_1(%arg0: i32) -> (i32, i32) {
    %c0_i32 = arith.constant 0 : i32
    %c0_i32_0 = arith.constant 0 : i32
    %c0_i32_1 = arith.constant 0 : i32
    return %c0_i32, %c0_i32_0 : i32, i32
  }
  func.func @transform_2(%arg0: i32) -> (i32, i32) {
    %c0_i32 = arith.constant 0 : i32
    %c0_i32_0 = arith.constant 0 : i32
    %c0_i32_1 = arith.constant 0 : i32
    return %c0_i32, %c0_i32_0 : i32, i32
  }
  func.func @transform_3(%arg0: i32) -> (i32, i32) {
    %c0_i32 = arith.constant 0 : i32
    %c0_i32_0 = arith.constant 0 : i32
    %c0_i32_1 = arith.constant 0 : i32
    return %c0_i32, %c0_i32_0 : i32, i32
  }
  func.func @transform_4(%arg0: i32) -> (i32, i32) {
    %c0_i32 = arith.constant 0 : i32
    %c0_i32_0 = arith.constant 0 : i32
    %c0_i32_1 = arith.constant 0 : i32
    return %c0_i32, %c0_i32_0 : i32, i32
  }
  func.func @transform_5(%arg0: i32) -> (i32, i32) {
    %c0_i32 = arith.constant 0 : i32
    %c0_i32_0 = arith.constant 0 : i32
    return %arg0, %c0_i32 : i32, i32
  }
}

</mosaic_0001>

<llo_original>
// kernel: local_attention_mlp.1
$region0: #{local_attention_mlp.1}
  #allocation0 [shape = 'u32[]', space=smem, size = 0x4, offset = 0x4, fixed_abs, tag = 'smem constant byte address 0x4 - core index']
  #allocation1 [shape = 'u32[72,128]{1,0:T(1,128)}', space=vmem, size = 0x9000, scoped, tag = 'internal scratch']
  %s0 = inlined_call_operand.hbm [shape: f32[16,512], index: 0, kind: input, shape index: {}]
  %s1 = inlined_call_operand.hbm [shape: f32[512,256], index: 1, kind: input, shape index: {}]
  %s2 = inlined_call_operand.vmem [shape: f32[1,256], index: 2, kind: input, shape index: {}]
  %s3 = inlined_call_operand.hbm [shape: f32[256,512], index: 3, kind: input, shape index: {}]
  %s4 = inlined_call_operand.vmem [shape: f32[1,512], index: 4, kind: input, shape index: {}]
  %s5 = inlined_call_operand.hbm [shape: f32[16,512], index: 5, kind: output, shape index: {}]
  %s6 = sld [smem:[#allocation0]]
  $region42: #{local_attention_mlp.1} parent=0
    _
  %s8 = ssub.s32 1, %s6
  %s9 = scalar_select 0, %s8, %s6
  $region1: #{local_attention_mlp.1} parent=0
    #allocation2 [shape = 'u8[32768]{0}', space=vmem, size = 0x8000, scoped, tag = 'input window, operand 0, single buffered']
    #allocation3 [shape = 's32[1]{0}', space=sflag, size = 0x4, scoped, tag = 'scoped memory for local_attention_mlp.1']
    #allocation4 [shape = 's32[1]{0}', space=sflag, size = 0x4, scoped, tag = 'scoped memory for local_attention_mlp.1']
    #allocation5 [shape = 'u8[524288]{0}', space=vmem, size = 0x80000, scoped, tag = 'input window, operand 1, single buffered']
    #allocation6 [shape = 's32[1]{0}', space=sflag, size = 0x4, scoped, tag = 'scoped memory for local_attention_mlp.1']
    #allocation7 [shape = 'u8[524288]{0}', space=vmem, size = 0x80000, scoped, tag = 'input window, operand 3, single buffered']
    #allocation8 [shape = 'u8[32768]{0}', space=vmem, size = 0x8000, scoped, tag = 'output window, operand 0, single buffered']
    %10 = vsyncpa [#allocation3], 0
    %11 = vsyncpa [#allocation6], 0
    %12 = vsyncpa [#allocation4], 0
    // Predicated region
    $region2: #{local_attention_mlp.1} parent=1 // pred_check
      _
    $region3: #{local_attention_mlp.1} parent=1 // pred_check_branch
      %14 = sbr.rel (0) target = $region5
    $region4: #{local_attention_mlp.1} parent=1 // pred_region
      %16 = vsyncadd [#allocation3], 0
      %s17 = sshll.u32 %s0, 4
      %s18 = int_to_ptr.hbm [resolvable:$true] %s17
      %s19 = sshll.u32 [#allocation2], 4
      %s20 = int_to_ptr.vmem [resolvable:$true] %s19
      %25 = dma.hbm_to_vmem [thread:$0]  %s18, 1024, %s20, [#allocation3], 512, 512, 32
    $region5: #{local_attention_mlp.1} parent=1 // pred_fallthru
      _
    // Predicated region
    $region6: #{local_attention_mlp.1} parent=1 // pred_check
      _
    $region7: #{local_attention_mlp.1} parent=1 // pred_check_branch
      %27 = sbr.rel (0) target = $region9
    $region8: #{local_attention_mlp.1} parent=1 // pred_region
      %29 = vsyncadd [#allocation6], 0
      %s30 = sshll.u32 %s1, 4
      %s31 = int_to_ptr.hbm [resolvable:$true] %s30
      %s32 = sshll.u32 [#allocation5], 4
      %s33 = int_to_ptr.vmem [resolvable:$true] %s32
      %38 = dma.hbm_to_vmem [thread:$0]  %s31, 16384, %s33, [#allocation6], 256, 256, 16
    $region9: #{local_attention_mlp.1} parent=1 // pred_fallthru
      _
    // Predicated region
    $region10: #{local_attention_mlp.1} parent=1 // pred_check
      _
    $region11: #{local_attention_mlp.1} parent=1 // pred_check_branch
      %40 = sbr.rel (0) target = $region13
    $region12: #{local_attention_mlp.1} parent=1 // pred_region
      _
    $region13: #{local_attention_mlp.1} parent=1 // pred_fallthru
      _
    // Predicated region
    $region14: #{local_attention_mlp.1} parent=1 // pred_check
      _
    $region15: #{local_attention_mlp.1} parent=1 // pred_check_branch
      %42 = sbr.rel (0) target = $region17
    $region16: #{local_attention_mlp.1} parent=1 // pred_region
      %44 = vsyncadd [#allocation6], 0
      %s45 = sshll.u32 %s3, 4
      %s46 = int_to_ptr.hbm [resolvable:$true] %s45
      %s47 = sshll.u32 [#allocation7], 4
      %s48 = int_to_ptr.vmem [resolvable:$true] %s47
      %53 = dma.hbm_to_vmem [thread:$0]  %s46, 16384, %s48, [#allocation6], 512, 512, 32
    $region17: #{local_attention_mlp.1} parent=1 // pred_fallthru
      _
    // Predicated region
    $region18: #{local_attention_mlp.1} parent=1 // pred_check
      _
    $region19: #{local_attention_mlp.1} parent=1 // pred_check_branch
      %55 = sbr.rel (0) target = $region21
    $region20: #{local_attention_mlp.1} parent=1 // pred_region
      _
    $region21: #{local_attention_mlp.1} parent=1 // pred_fallthru
      _
    // Predicated region
    $region22: #{local_attention_mlp.1} parent=1 // pred_check
      _
    $region23: #{local_attention_mlp.1} parent=1 // pred_check_branch
      %57 = sbr.rel (0) target = $region25
    $region24: #{local_attention_mlp.1} parent=1 // pred_region
      %59 = dma.done [#allocation3], 1024
    $region25: #{local_attention_mlp.1} parent=1 // pred_fallthru
      _
    // Predicated region
    $region26: #{local_attention_mlp.1} parent=1 // pred_check
      _
    $region27: #{local_attention_mlp.1} parent=1 // pred_check_branch
      %61 = sbr.rel (0) target = $region29
    $region28: #{local_attention_mlp.1} parent=1 // pred_region
      %63 = dma.done [#allocation6], 16384
    $region29: #{local_attention_mlp.1} parent=1 // pred_fallthru
      _
    // Predicated region
    $region30: #{local_attention_mlp.1} parent=1 // pred_check
      _
    $region31: #{local_attention_mlp.1} parent=1 // pred_check_branch
      %65 = sbr.rel (0) target = $region33
    $region32: #{local_attention_mlp.1} parent=1 // pred_region
      %67 = dma.done [#allocation6], 16384
    $region33: #{local_attention_mlp.1} parent=1 // pred_fallthru
      _
    %v68 = vld [vmem:[#allocation2] sm:$0xff]
    %v69 = vld [vmem:[#allocation2 + $0x8] sm:$0xff]
    %v70 = vld [vmem:[#allocation2 + $0x10] sm:$0xff]
    %v71 = vld [vmem:[#allocation2 + $0x18] sm:$0xff]
    %v72 = vld [vmem:[#allocation2 + $0x20] sm:$0xff]
    %v73 = vld [vmem:[#allocation2 + $0x28] sm:$0xff]
    %v74 = vld [vmem:[#allocation2 + $0x30] sm:$0xff]
    %v75 = vld [vmem:[#allocation2 + $0x38] sm:$0xff]
    %v76 = vld [vmem:[#allocation5] sm:$0xff]
    %v77 = vld [vmem:[#allocation5 + $0x8] sm:$0xff]
    %v78 = vld [vmem:[#allocation5 + $0x10] sm:$0xff]
    %v79 = vld [vmem:[#allocation5 + $0x18] sm:$0xff]
    %v80 = vld [vmem:[#allocation5 + $0x20] sm:$0xff]
    %v81 = vld [vmem:[#allocation5 + $0x28] sm:$0xff]
    %v82 = vld [vmem:[#allocation5 + $0x30] sm:$0xff]
    %v83 = vld [vmem:[#allocation5 + $0x38] sm:$0xff]
    %v84 = vld [vmem:[#allocation5 + $0x40] sm:$0xff]
    %v85 = vld [vmem:[#allocation5 + $0x48] sm:$0xff]
    %v86 = vld [vmem:[#allocation5 + $0x50] sm:$0xff]
    %v87 = vld [vmem:[#allocation5 + $0x58] sm:$0xff]
    %v88 = vld [vmem:[#allocation5 + $0x60] sm:$0xff]
    %v89 = vld [vmem:[#allocation5 + $0x68] sm:$0xff]
    %v90 = vld [vmem:[#allocation5 + $0x70] sm:$0xff]
    %v91 = vld [vmem:[#allocation5 + $0x78] sm:$0xff]
    %v92 = vld [vmem:[#allocation5 + $0x80] sm:$0xff]
    %v93 = vld [vmem:[#allocation5 + $0x88] sm:$0xff]
    %v94 = vld [vmem:[#allocation5 + $0x90] sm:$0xff]
    %v95 = vld [vmem:[#allocation5 + $0x98] sm:$0xff]
    %v96 = vld [vmem:[#allocation5 + $0xa0] sm:$0xff]
    %v97 = vld [vmem:[#allocation5 + $0xa8] sm:$0xff]
    %v98 = vld [vmem:[#allocation5 + $0xb0] sm:$0xff]
    %v99 = vld [vmem:[#allocation5 + $0xb8] sm:$0xff]
    %v100 = vld [vmem:[#allocation5 + $0xc0] sm:$0xff]
    %v101 = vld [vmem:[#allocation5 + $0xc8] sm:$0xff]
    %v102 = vld [vmem:[#allocation5 + $0xd0] sm:$0xff]
    %v103 = vld [vmem:[#allocation5 + $0xd8] sm:$0xff]
    %v104 = vld [vmem:[#allocation5 + $0xe0] sm:$0xff]
    %v105 = vld [vmem:[#allocation5 + $0xe8] sm:$0xff]
    %v106 = vld [vmem:[#allocation5 + $0xf0] sm:$0xff]
    %v107 = vld [vmem:[#allocation5 + $0xf8] sm:$0xff]
    %v108 = vld [vmem:[#allocation5 + $0x100] sm:$0xff]
    %v109 = vld [vmem:[#allocation5 + $0x108] sm:$0xff]
    %v110 = vld [vmem:[#allocation5 + $0x110] sm:$0xff]
    %v111 = vld [vmem:[#allocation5 + $0x118] sm:$0xff]
    %v112 = vld [vmem:[#allocation5 + $0x120] sm:$0xff]
    %v113 = vld [vmem:[#allocation5 + $0x128] sm:$0xff]
    %v114 = vld [vmem:[#allocation5 + $0x130] sm:$0xff]
    %v115 = vld [vmem:[#allocation5 + $0x138] sm:$0xff]
    %v116 = vld [vmem:[#allocation5 + $0x140] sm:$0xff]
    %v117 = vld [vmem:[#allocation5 + $0x148] sm:$0xff]
    %v118 = vld [vmem:[#allocation5 + $0x150] sm:$0xff]
    %v119 = vld [vmem:[#allocation5 + $0x158] sm:$0xff]
    %v120 = vld [vmem:[#allocation5 + $0x160] sm:$0xff]
    %v121 = vld [vmem:[#allocation5 + $0x168] sm:$0xff]
    %v122 = vld [vmem:[#allocation5 + $0x170] sm:$0xff]
    %v123 = vld [vmem:[#allocation5 + $0x178] sm:$0xff]
    %v124 = vld [vmem:[#allocation5 + $0x180] sm:$0xff]
    %v125 = vld [vmem:[#allocation5 + $0x188] sm:$0xff]
    %v126 = vld [vmem:[#allocation5 + $0x190] sm:$0xff]
    %v127 = vld [vmem:[#allocation5 + $0x198] sm:$0xff]
    %v128 = vld [vmem:[#allocation5 + $0x1a0] sm:$0xff]
    %v129 = vld [vmem:[#allocation5 + $0x1a8] sm:$0xff]
    %v130 = vld [vmem:[#allocation5 + $0x1b0] sm:$0xff]
    %v131 = vld [vmem:[#allocation5 + $0x1b8] sm:$0xff]
    %v132 = vld [vmem:[#allocation5 + $0x1c0] sm:$0xff]
    %v133 = vld [vmem:[#allocation5 + $0x1c8] sm:$0xff]
    %v134 = vld [vmem:[#allocation5 + $0x1d0] sm:$0xff]
    %v135 = vld [vmem:[#allocation5 + $0x1d8] sm:$0xff]
    %v136 = vld [vmem:[#allocation5 + $0x1e0] sm:$0xff]
    %v137 = vld [vmem:[#allocation5 + $0x1e8] sm:$0xff]
    %v138 = vld [vmem:[#allocation5 + $0x1f0] sm:$0xff]
    %v139 = vld [vmem:[#allocation5 + $0x1f8] sm:$0xff]
    %v140 = vld [vmem:[#allocation5 + $0x200] sm:$0xff]
    %v141 = vld [vmem:[#allocation5 + $0x208] sm:$0xff]
    %v142 = vld [vmem:[#allocation5 + $0x210] sm:$0xff]
    %v143 = vld [vmem:[#allocation5 + $0x218] sm:$0xff]
    %v144 = vld [vmem:[#allocation5 + $0x220] sm:$0xff]
    %v145 = vld [vmem:[#allocation5 + $0x228] sm:$0xff]
    %v146 = vld [vmem:[#allocation5 + $0x230] sm:$0xff]
    %v147 = vld [vmem:[#allocation5 + $0x238] sm:$0xff]
    %v148 = vld [vmem:[#allocation5 + $0x240] sm:$0xff]
    %v149 = vld [vmem:[#allocation5 + $0x248] sm:$0xff]
    %v150 = vld [vmem:[#allocation5 + $0x250] sm:$0xff]
    %v151 = vld [vmem:[#allocation5 + $0x258] sm:$0xff]
    %v152 = vld [vmem:[#allocation5 + $0x260] sm:$0xff]
    %v153 = vld [vmem:[#allocation5 + $0x268] sm:$0xff]
    %v154 = vld [vmem:[#allocation5 + $0x270] sm:$0xff]
    %v155 = vld [vmem:[#allocation5 + $0x278] sm:$0xff]
    %v156 = vld [vmem:[#allocation5 + $0x280] sm:$0xff]
    %v157 = vld [vmem:[#allocation5 + $0x288] sm:$0xff]
    %v158 = vld [vmem:[#allocation5 + $0x290] sm:$0xff]
    %v159 = vld [vmem:[#allocation5 + $0x298] sm:$0xff]
    %v160 = vld [vmem:[#allocation5 + $0x2a0] sm:$0xff]
    %v161 = vld [vmem:[#allocation5 + $0x2a8] sm:$0xff]
    %v162 = vld [vmem:[#allocation5 + $0x2b0] sm:$0xff]
    %v163 = vld [vmem:[#allocation5 + $0x2b8] sm:$0xff]
    %v164 = vld [vmem:[#allocation5 + $0x2c0] sm:$0xff]
    %v165 = vld [vmem:[#allocation5 + $0x2c8] sm:$0xff]
    %v166 = vld [vmem:[#allocation5 + $0x2d0] sm:$0xff]
    %v167 = vld [vmem:[#allocation5 + $0x2d8] sm:$0xff]
    %v168 = vld [vmem:[#allocation5 + $0x2e0] sm:$0xff]
    %v169 = vld [vmem:[#allocation5 + $0x2e8] sm:$0xff]
    %v170 = vld [vmem:[#allocation5 + $0x2f0] sm:$0xff]
    %v171 = vld [vmem:[#allocation5 + $0x2f8] sm:$0xff]
    %v172 = vld [vmem:[#allocation5 + $0x300] sm:$0xff]
    %v173 = vld [vmem:[#allocation5 + $0x308] sm:$0xff]
    %v174 = vld [vmem:[#allocation5 + $0x310] sm:$0xff]
    %v175 = vld [vmem:[#allocation5 + $0x318] sm:$0xff]
    %v176 = vld [vmem:[#allocation5 + $0x320] sm:$0xff]
    %v177 = vld [vmem:[#allocation5 + $0x328] sm:$0xff]
    %v178 = vld [vmem:[#allocation5 + $0x330] sm:$0xff]
    %v179 = vld [vmem:[#allocation5 + $0x338] sm:$0xff]
    %v180 = vld [vmem:[#allocation5 + $0x340] sm:$0xff]
    %v181 = vld [vmem:[#allocation5 + $0x348] sm:$0xff]
    %v182 = vld [vmem:[#allocation5 + $0x350] sm:$0xff]
    %v183 = vld [vmem:[#allocation5 + $0x358] sm:$0xff]
    %v184 = vld [vmem:[#allocation5 + $0x360] sm:$0xff]
    %v185 = vld [vmem:[#allocation5 + $0x368] sm:$0xff]
    %v186 = vld [vmem:[#allocation5 + $0x370] sm:$0xff]
    %v187 = vld [vmem:[#allocation5 + $0x378] sm:$0xff]
    %v188 = vld [vmem:[#allocation5 + $0x380] sm:$0xff]
    %v189 = vld [vmem:[#allocation5 + $0x388] sm:$0xff]
    %v190 = vld [vmem:[#allocation5 + $0x390] sm:$0xff]
    %v191 = vld [vmem:[#allocation5 + $0x398] sm:$0xff]
    %v192 = vld [vmem:[#allocation5 + $0x3a0] sm:$0xff]
    %v193 = vld [vmem:[#allocation5 + $0x3a8] sm:$0xff]
    %v194 = vld [vmem:[#allocation5 + $0x3b0] sm:$0xff]
    %v195 = vld [vmem:[#allocation5 + $0x3b8] sm:$0xff]
    %v196 = vld [vmem:[#allocation5 + $0x3c0] sm:$0xff]
    %v197 = vld [vmem:[#allocation5 + $0x3c8] sm:$0xff]
    %v198 = vld [vmem:[#allocation5 + $0x3d0] sm:$0xff]
    %v199 = vld [vmem:[#allocation5 + $0x3d8] sm:$0xff]
    %v200 = vld [vmem:[#allocation5 + $0x3e0] sm:$0xff]
    %v201 = vld [vmem:[#allocation5 + $0x3e8] sm:$0xff]
    %v202 = vld [vmem:[#allocation5 + $0x3f0] sm:$0xff]
    %v203 = vld [vmem:[#allocation5 + $0x3f8] sm:$0xff]
    %v204 = vld [vmem:[%s2] sm:$0x3]
    %v206 = vperm.slane %v204, 0
    %v207 = vperm.slane %v204, 1
    %v210 = vand.u32 %v106, 4294901760
    %211 = vmatpush.msra.mxu0 %v210
    %v212 = vand.u32 %v104, 4294901760
    %213 = vmatpush.msra.mxu0 %v212
    %v214 = vand.u32 %v102, 4294901760
    %215 = vmatpush.msra.mxu0 %v214
    %v216 = vand.u32 %v100, 4294901760
    %217 = vmatpush.msra.mxu0 %v216
    %v218 = vand.u32 %v98, 4294901760
    %219 = vmatpush.msra.mxu0 %v218
    %v220 = vand.u32 %v96, 4294901760
    %221 = vmatpush.msra.mxu0 %v220
    %v222 = vand.u32 %v94, 4294901760
    %223 = vmatpush.msra.mxu0 %v222
    %v224 = vand.u32 %v92, 4294901760
    %225 = vmatpush.msra.mxu0 %v224
    %v226 = vand.u32 %v90, 4294901760
    %227 = vmatpush.msra.mxu0 %v226
    %v228 = vand.u32 %v88, 4294901760
    %229 = vmatpush.msra.mxu0 %v228
    %v230 = vand.u32 %v86, 4294901760
    %231 = vmatpush.msra.mxu0 %v230
    %v232 = vand.u32 %v84, 4294901760
    %233 = vmatpush.msra.mxu0 %v232
    %v234 = vand.u32 %v82, 4294901760
    %235 = vmatpush.msra.mxu0 %v234
    %v236 = vand.u32 %v80, 4294901760
    %237 = vmatpush.msra.mxu0 %v236
    %v238 = vand.u32 %v78, 4294901760
    %239 = vmatpush.msra.mxu0 %v238
    %v240 = vand.u32 %v76, 4294901760
    %241 = vmatpush.msra.mxu0 %v240
    %v242 = vand.u32 %v68, 4294901760
    %v243 = vsub.f32 %v68, %v242
    %v244 = vand.u32 %v243, 4294901760
    %v245 = vsub.f32 %v243, %v244
    %v246 = vand.u32 %v245, 4294901760
    %247 = vmatmul.f32.gmra.mxu0 %v246
    %v248 = vpop.f32.mrf.mxu0
    %v249 = vadd.f32 %v206, %v248
    %v250 = vand.u32 %v72, 4294901760
    %v251 = vsub.f32 %v72, %v250
    %v252 = vand.u32 %v251, 4294901760
    %v253 = vsub.f32 %v251, %v252
    %v254 = vand.u32 %v253, 4294901760
    %255 = vmatmul.f32.gmra.mxu0 %v254
    %v256 = vpop.f32.mrf.mxu0
    %v257 = vadd.f32 %v206, %v256
    %258 = vdwg.mxu0
    %v259 = vand.u32 %v106, 4294901760
    %v260 = vsub.f32 %v106, %v259
    %v261 = vand.u32 %v260, 4294901760
    %v262 = vsub.f32 %v260, %v261
    %v263 = vand.u32 %v262, 4294901760
    %264 = vmatpush.msra.mxu0 %v263
    %v265 = vand.u32 %v104, 4294901760
    %v266 = vsub.f32 %v104, %v265
    %v267 = vand.u32 %v266, 4294901760
    %v268 = vsub.f32 %v266, %v267
    %v269 = vand.u32 %v268, 4294901760
    %270 = vmatpush.msra.mxu0 %v269
    %v271 = vand.u32 %v102, 4294901760
    %v272 = vsub.f32 %v102, %v271
    %v273 = vand.u32 %v272, 4294901760
    %v274 = vsub.f32 %v272, %v273
    %v275 = vand.u32 %v274, 4294901760
    %276 = vmatpush.msra.mxu0 %v275
    %v277 = vand.u32 %v100, 4294901760
    %v278 = vsub.f32 %v100, %v277
    %v279 = vand.u32 %v278, 4294901760
    %v280 = vsub.f32 %v278, %v279
    %v281 = vand.u32 %v280, 4294901760
    %282 = vmatpush.msra.mxu0 %v281
    %v283 = vand.u32 %v98, 4294901760
    %v284 = vsub.f32 %v98, %v283
    %v285 = vand.u32 %v284, 4294901760
    %v286 = vsub.f32 %v284, %v285
    %v287 = vand.u32 %v286, 4294901760
    %288 = vmatpush.msra.mxu0 %v287
    %v289 = vand.u32 %v96, 4294901760
    %v290 = vsub.f32 %v96, %v289
    %v291 = vand.u32 %v290, 4294901760
    %v292 = vsub.f32 %v290, %v291
    %v293 = vand.u32 %v292, 4294901760
    %294 = vmatpush.msra.mxu0 %v293
    %v295 = vand.u32 %v94, 4294901760
    %v296 = vsub.f32 %v94, %v295
    %v297 = vand.u32 %v296, 4294901760
    %v298 = vsub.f32 %v296, %v297
    %v299 = vand.u32 %v298, 4294901760
    %300 = vmatpush.msra.mxu0 %v299
    %v301 = vand.u32 %v92, 4294901760
    %v302 = vsub.f32 %v92, %v301
    %v303 = vand.u32 %v302, 4294901760
    %v304 = vsub.f32 %v302, %v303
    %v305 = vand.u32 %v304, 4294901760
    %306 = vmatpush.msra.mxu0 %v305
    %v307 = vand.u32 %v90, 4294901760
    %v308 = vsub.f32 %v90, %v307
    %v309 = vand.u32 %v308, 4294901760
    %v310 = vsub.f32 %v308, %v309
    %v311 = vand.u32 %v310, 4294901760
    %312 = vmatpush.msra.mxu0 %v311
    %v313 = vand.u32 %v88, 4294901760
    %v314 = vsub.f32 %v88, %v313
    %v315 = vand.u32 %v314, 4294901760
    %v316 = vsub.f32 %v314, %v315
    %v317 = vand.u32 %v316, 4294901760
    %318 = vmatpush.msra.mxu0 %v317
    %v319 = vand.u32 %v86, 4294901760
    %v320 = vsub.f32 %v86, %v319
    %v321 = vand.u32 %v320, 4294901760
    %v322 = vsub.f32 %v320, %v321
    %v323 = vand.u32 %v322, 4294901760
    %324 = vmatpush.msra.mxu0 %v323
    %v325 = vand.u32 %v84, 4294901760
    %v326 = vsub.f32 %v84, %v325
    %v327 = vand.u32 %v326, 4294901760
    %v328 = vsub.f32 %v326, %v327
    %v329 = vand.u32 %v328, 4294901760
    %330 = vmatpush.msra.mxu0 %v329
    %v331 = vand.u32 %v82, 4294901760
    %v332 = vsub.f32 %v82, %v331
    %v333 = vand.u32 %v332, 4294901760
    %v334 = vsub.f32 %v332, %v333
    %v335 = vand.u32 %v334, 4294901760
    %336 = vmatpush.msra.mxu0 %v335
    %v337 = vand.u32 %v80, 4294901760
    %v338 = vsub.f32 %v80, %v337
    %v339 = vand.u32 %v338, 4294901760
    %v340 = vsub.f32 %v338, %v339
    %v341 = vand.u32 %v340, 4294901760
    %342 = vmatpush.msra.mxu0 %v341
    %v343 = vand.u32 %v78, 4294901760
    %v344 = vsub.f32 %v78, %v343
    %v345 = vand.u32 %v344, 4294901760
    %v346 = vsub.f32 %v344, %v345
    %v347 = vand.u32 %v346, 4294901760
    %348 = vmatpush.msra.mxu0 %v347
    %v349 = vand.u32 %v76, 4294901760
    %v350 = vsub.f32 %v76, %v349
    %v351 = vand.u32 %v350, 4294901760
    %v352 = vsub.f32 %v350, %v351
    %v353 = vand.u32 %v352, 4294901760
    %354 = vmatpush.msra.mxu0 %v353
    %v355 = vand.u32 %v68, 4294901760
    %356 = vmatmul.f32.gmra.mxu0 %v355
    %v357 = vpop.f32.mrf.mxu0
    %v358 = vadd.f32 %v249, %v357
    %v359 = vand.u32 %v72, 4294901760
    %360 = vmatmul.f32.gmra.mxu0 %v359
    %v361 = vpop.f32.mrf.mxu0
    %v362 = vadd.f32 %v257, %v361
    %363 = vdwg.mxu0
    %v364 = vand.u32 %v106, 4294901760
    %v365 = vsub.f32 %v106, %v364
    %366 = vmatpush.msra.mxu0 %v365
    %v367 = vand.u32 %v104, 4294901760
    %v368 = vsub.f32 %v104, %v367
    %369 = vmatpush.msra.mxu0 %v368
    %v370 = vand.u32 %v102, 4294901760
    %v371 = vsub.f32 %v102, %v370
    %372 = vmatpush.msra.mxu0 %v371
    %v373 = vand.u32 %v100, 4294901760
    %v374 = vsub.f32 %v100, %v373
    %375 = vmatpush.msra.mxu0 %v374
    %v376 = vand.u32 %v98, 4294901760
    %v377 = vsub.f32 %v98, %v376
    %378 = vmatpush.msra.mxu0 %v377
    %v379 = vand.u32 %v96, 4294901760
    %v380 = vsub.f32 %v96, %v379
    %381 = vmatpush.msra.mxu0 %v380
    %v382 = vand.u32 %v94, 4294901760
    %v383 = vsub.f32 %v94, %v382
    %384 = vmatpush.msra.mxu0 %v383
    %v385 = vand.u32 %v92, 4294901760
    %v386 = vsub.f32 %v92, %v385
    %387 = vmatpush.msra.mxu0 %v386
    %v388 = vand.u32 %v90, 4294901760
    %v389 = vsub.f32 %v90, %v388
    %390 = vmatpush.msra.mxu0 %v389
    %v391 = vand.u32 %v88, 4294901760
    %v392 = vsub.f32 %v88, %v391
    %393 = vmatpush.msra.mxu0 %v392
    %v394 = vand.u32 %v86, 4294901760
    %v395 = vsub.f32 %v86, %v394
    %396 = vmatpush.msra.mxu0 %v395
    %v397 = vand.u32 %v84, 4294901760
    %v398 = vsub.f32 %v84, %v397
    %399 = vmatpush.msra.mxu0 %v398
    %v400 = vand.u32 %v82, 4294901760
    %v401 = vsub.f32 %v82, %v400
    %402 = vmatpush.msra.mxu0 %v401
    %v403 = vand.u32 %v80, 4294901760
    %v404 = vsub.f32 %v80, %v403
    %405 = vmatpush.msra.mxu0 %v404
    %v406 = vand.u32 %v78, 4294901760
    %v407 = vsub.f32 %v78, %v406
    %408 = vmatpush.msra.mxu0 %v407
    %v409 = vand.u32 %v76, 4294901760
    %v410 = vsub.f32 %v76, %v409
    %411 = vmatpush.msra.mxu0 %v410
    %v412 = vand.u32 %v68, 4294901760
    %v413 = vsub.f32 %v68, %v412
    %414 = vmatmul.f32.gmra.mxu0 %v413
    %v415 = vpop.f32.mrf.mxu0
    %v416 = vadd.f32 %v358, %v415
    %v417 = vand.u32 %v72, 4294901760
    %v418 = vsub.f32 %v72, %v417
    %419 = vmatmul.f32.gmra.mxu0 %v418
    %v420 = vpop.f32.mrf.mxu0
    %v421 = vadd.f32 %v362, %v420
    %422 = vdwg.mxu0
    %v423 = vand.u32 %v106, 4294901760
    %424 = vmatpush.msra.mxu0 %v423
    %v425 = vand.u32 %v104, 4294901760
    %426 = vmatpush.msra.mxu0 %v425
    %v427 = vand.u32 %v102, 4294901760
    %428 = vmatpush.msra.mxu0 %v427
    %v429 = vand.u32 %v100, 4294901760
    %430 = vmatpush.msra.mxu0 %v429
    %v431 = vand.u32 %v98, 4294901760
    %432 = vmatpush.msra.mxu0 %v431
    %v433 = vand.u32 %v96, 4294901760
    %434 = vmatpush.msra.mxu0 %v433
    %v435 = vand.u32 %v94, 4294901760
    %436 = vmatpush.msra.mxu0 %v435
    %v437 = vand.u32 %v92, 4294901760
    %438 = vmatpush.msra.mxu0 %v437
    %v439 = vand.u32 %v90, 4294901760
    %440 = vmatpush.msra.mxu0 %v439
    %v441 = vand.u32 %v88, 4294901760
    %442 = vmatpush.msra.mxu0 %v441
    %v443 = vand.u32 %v86, 4294901760
    %444 = vmatpush.msra.mxu0 %v443
    %v445 = vand.u32 %v84, 4294901760
    %446 = vmatpush.msra.mxu0 %v445
    %v447 = vand.u32 %v82, 4294901760
    %448 = vmatpush.msra.mxu0 %v447
    %v449 = vand.u32 %v80, 4294901760
    %450 = vmatpush.msra.mxu0 %v449
    %v451 = vand.u32 %v78, 4294901760
    %452 = vmatpush.msra.mxu0 %v451
    %v453 = vand.u32 %v76, 4294901760
    %454 = vmatpush.msra.mxu0 %v453
    %v455 = vand.u32 %v68, 4294901760
    %v456 = vsub.f32 %v68, %v455
    %v457 = vand.u32 %v456, 4294901760
    %458 = vmatmul.f32.gmra.mxu0 %v457
    %v459 = vpop.f32.mrf.mxu0
    %v460 = vadd.f32 %v416, %v459
    %v461 = vand.u32 %v72, 4294901760
    %v462 = vsub.f32 %v72, %v461
    %v463 = vand.u32 %v462, 4294901760
    %464 = vmatmul.f32.gmra.mxu0 %v463
    %v465 = vpop.f32.mrf.mxu0
    %v466 = vadd.f32 %v421, %v465
    %467 = vdwg.mxu0
    %v468 = vand.u32 %v106, 4294901760
    %v469 = vsub.f32 %v106, %v468
    %v470 = vand.u32 %v469, 4294901760
    %471 = vmatpush.msra.mxu0 %v470
    %v472 = vand.u32 %v104, 4294901760
    %v473 = vsub.f32 %v104, %v472
    %v474 = vand.u32 %v473, 4294901760
    %475 = vmatpush.msra.mxu0 %v474
    %v476 = vand.u32 %v102, 4294901760
    %v477 = vsub.f32 %v102, %v476
    %v478 = vand.u32 %v477, 4294901760
    %479 = vmatpush.msra.mxu0 %v478
    %v480 = vand.u32 %v100, 4294901760
    %v481 = vsub.f32 %v100, %v480
    %v482 = vand.u32 %v481, 4294901760
    %483 = vmatpush.msra.mxu0 %v482
    %v484 = vand.u32 %v98, 4294901760
    %v485 = vsub.f32 %v98, %v484
    %v486 = vand.u32 %v485, 4294901760
    %487 = vmatpush.msra.mxu0 %v486
    %v488 = vand.u32 %v96, 4294901760
    %v489 = vsub.f32 %v96, %v488
    %v490 = vand.u32 %v489, 4294901760
    %491 = vmatpush.msra.mxu0 %v490
    %v492 = vand.u32 %v94, 4294901760
    %v493 = vsub.f32 %v94, %v492
    %v494 = vand.u32 %v493, 4294901760
    %495 = vmatpush.msra.mxu0 %v494
    %v496 = vand.u32 %v92, 4294901760
    %v497 = vsub.f32 %v92, %v496
    %v498 = vand.u32 %v497, 4294901760
    %499 = vmatpush.msra.mxu0 %v498
    %v500 = vand.u32 %v90, 4294901760
    %v501 = vsub.f32 %v90, %v500
    %v502 = vand.u32 %v501, 4294901760
    %503 = vmatpush.msra.mxu0 %v502
    %v504 = vand.u32 %v88, 4294901760
    %v505 = vsub.f32 %v88, %v504
    %v506 = vand.u32 %v505, 4294901760
    %507 = vmatpush.msra.mxu0 %v506
    %v508 = vand.u32 %v86, 4294901760
    %v509 = vsub.f32 %v86, %v508
    %v510 = vand.u32 %v509, 4294901760
    %511 = vmatpush.msra.mxu0 %v510
    %v512 = vand.u32 %v84, 4294901760
    %v513 = vsub.f32 %v84, %v512
    %v514 = vand.u32 %v513, 4294901760
    %515 = vmatpush.msra.mxu0 %v514
    %v516 = vand.u32 %v82, 4294901760
    %v517 = vsub.f32 %v82, %v516
    %v518 = vand.u32 %v517, 4294901760
    %519 = vmatpush.msra.mxu0 %v518
    %v520 = vand.u32 %v80, 4294901760
    %v521 = vsub.f32 %v80, %v520
    %v522 = vand.u32 %v521, 4294901760
    %523 = vmatpush.msra.mxu0 %v522
    %v524 = vand.u32 %v78, 4294901760
    %v525 = vsub.f32 %v78, %v524
    %v526 = vand.u32 %v525, 4294901760
    %527 = vmatpush.msra.mxu0 %v526
    %v528 = vand.u32 %v76, 4294901760
    %v529 = vsub.f32 %v76, %v528
    %v530 = vand.u32 %v529, 4294901760
    %531 = vmatpush.msra.mxu0 %v530
    %v532 = vand.u32 %v68, 4294901760
    %533 = vmatmul.f32.gmra.mxu0 %v532
    %v534 = vpop.f32.mrf.mxu0
    %v535 = vadd.f32 %v460, %v534
    %v536 = vand.u32 %v72, 4294901760
    %537 = vmatmul.f32.gmra.mxu0 %v536
    %v538 = vpop.f32.mrf.mxu0
    %v539 = vadd.f32 %v466, %v538
    %540 = vdwg.mxu0
    %v541 = vand.u32 %v106, 4294901760
    %542 = vmatpush.msra.mxu0 %v541
    %v543 = vand.u32 %v104, 4294901760
    %544 = vmatpush.msra.mxu0 %v543
    %v545 = vand.u32 %v102, 4294901760
    %546 = vmatpush.msra.mxu0 %v545
    %v547 = vand.u32 %v100, 4294901760
    %548 = vmatpush.msra.mxu0 %v547
    %v549 = vand.u32 %v98, 4294901760
    %550 = vmatpush.msra.mxu0 %v549
    %v551 = vand.u32 %v96, 4294901760
    %552 = vmatpush.msra.mxu0 %v551
    %v553 = vand.u32 %v94, 4294901760
    %554 = vmatpush.msra.mxu0 %v553
    %v555 = vand.u32 %v92, 4294901760
    %556 = vmatpush.msra.mxu0 %v555
    %v557 = vand.u32 %v90, 4294901760
    %558 = vmatpush.msra.mxu0 %v557
    %v559 = vand.u32 %v88, 4294901760
    %560 = vmatpush.msra.mxu0 %v559
    %v561 = vand.u32 %v86, 4294901760
    %562 = vmatpush.msra.mxu0 %v561
    %v563 = vand.u32 %v84, 4294901760
    %564 = vmatpush.msra.mxu0 %v563
    %v565 = vand.u32 %v82, 4294901760
    %566 = vmatpush.msra.mxu0 %v565
    %v567 = vand.u32 %v80, 4294901760
    %568 = vmatpush.msra.mxu0 %v567
    %v569 = vand.u32 %v78, 4294901760
    %570 = vmatpush.msra.mxu0 %v569
    %v571 = vand.u32 %v76, 4294901760
    %572 = vmatpush.msra.mxu0 %v571
    %v573 = vand.u32 %v68, 4294901760
    %574 = vmatmul.f32.gmra.mxu0 %v573
    %v575 = vpop.f32.mrf.mxu0
    %v576 = vadd.f32 %v535, %v575
    %v577 = vand.u32 %v72, 4294901760
    %578 = vmatmul.f32.gmra.mxu0 %v577
    %v579 = vpop.f32.mrf.mxu0
    %v580 = vadd.f32 %v539, %v579
    %581 = vdwg.mxu0
    %v582 = vand.u32 %v138, 4294901760
    %583 = vmatpush.msra.mxu0 %v582
    %v584 = vand.u32 %v136, 4294901760
    %585 = vmatpush.msra.mxu0 %v584
    %v586 = vand.u32 %v134, 4294901760
    %587 = vmatpush.msra.mxu0 %v586
    %v588 = vand.u32 %v132, 4294901760
    %589 = vmatpush.msra.mxu0 %v588
    %v590 = vand.u32 %v130, 4294901760
    %591 = vmatpush.msra.mxu0 %v590
    %v592 = vand.u32 %v128, 4294901760
    %593 = vmatpush.msra.mxu0 %v592
    %v594 = vand.u32 %v126, 4294901760
    %595 = vmatpush.msra.mxu0 %v594
    %v596 = vand.u32 %v124, 4294901760
    %597 = vmatpush.msra.mxu0 %v596
    %v598 = vand.u32 %v122, 4294901760
    %599 = vmatpush.msra.mxu0 %v598
    %v600 = vand.u32 %v120, 4294901760
    %601 = vmatpush.msra.mxu0 %v600
    %v602 = vand.u32 %v118, 4294901760
    %603 = vmatpush.msra.mxu0 %v602
    %v604 = vand.u32 %v116, 4294901760
    %605 = vmatpush.msra.mxu0 %v604
    %v606 = vand.u32 %v114, 4294901760
    %607 = vmatpush.msra.mxu0 %v606
    %v608 = vand.u32 %v112, 4294901760
    %609 = vmatpush.msra.mxu0 %v608
    %v610 = vand.u32 %v110, 4294901760
    %611 = vmatpush.msra.mxu0 %v610
    %v612 = vand.u32 %v108, 4294901760
    %613 = vmatpush.msra.mxu0 %v612
    %v614 = vand.u32 %v69, 4294901760
    %v615 = vsub.f32 %v69, %v614
    %v616 = vand.u32 %v615, 4294901760
    %v617 = vsub.f32 %v615, %v616
    %v618 = vand.u32 %v617, 4294901760
    %619 = vmatmul.f32.gmra.mxu0 %v618
    %v620 = vpop.f32.mrf.mxu0
    %v621 = vadd.f32 %v576, %v620
    %v622 = vand.u32 %v73, 4294901760
    %v623 = vsub.f32 %v73, %v622
    %v624 = vand.u32 %v623, 4294901760
    %v625 = vsub.f32 %v623, %v624
    %v626 = vand.u32 %v625, 4294901760
    %627 = vmatmul.f32.gmra.mxu0 %v626
    %v628 = vpop.f32.mrf.mxu0
    %v629 = vadd.f32 %v580, %v628
    %630 = vdwg.mxu0
    %v631 = vand.u32 %v138, 4294901760
    %v632 = vsub.f32 %v138, %v631
    %v633 = vand.u32 %v632, 4294901760
    %v634 = vsub.f32 %v632, %v633
    %v635 = vand.u32 %v634, 4294901760
    %636 = vmatpush.msra.mxu0 %v635
    %v637 = vand.u32 %v136, 4294901760
    %v638 = vsub.f32 %v136, %v637
    %v639 = vand.u32 %v638, 4294901760
    %v640 = vsub.f32 %v638, %v639
    %v641 = vand.u32 %v640, 4294901760
    %642 = vmatpush.msra.mxu0 %v641
    %v643 = vand.u32 %v134, 4294901760
    %v644 = vsub.f32 %v134, %v643
    %v645 = vand.u32 %v644, 4294901760
    %v646 = vsub.f32 %v644, %v645
    %v647 = vand.u32 %v646, 4294901760
    %648 = vmatpush.msra.mxu0 %v647
    %v649 = vand.u32 %v132, 4294901760
    %v650 = vsub.f32 %v132, %v649
    %v651 = vand.u32 %v650, 4294901760
    %v652 = vsub.f32 %v650, %v651
    %v653 = vand.u32 %v652, 4294901760
    %654 = vmatpush.msra.mxu0 %v653
    %v655 = vand.u32 %v130, 4294901760
    %v656 = vsub.f32 %v130, %v655
    %v657 = vand.u32 %v656, 4294901760
    %v658 = vsub.f32 %v656, %v657
    %v659 = vand.u32 %v658, 4294901760
    %660 = vmatpush.msra.mxu0 %v659
    %v661 = vand.u32 %v128, 4294901760
    %v662 = vsub.f32 %v128, %v661
    %v663 = vand.u32 %v662, 4294901760
    %v664 = vsub.f32 %v662, %v663
    %v665 = vand.u32 %v664, 4294901760
    %666 = vmatpush.msra.mxu0 %v665
    %v667 = vand.u32 %v126, 4294901760
    %v668 = vsub.f32 %v126, %v667
    %v669 = vand.u32 %v668, 4294901760
    %v670 = vsub.f32 %v668, %v669
    %v671 = vand.u32 %v670, 4294901760
    %672 = vmatpush.msra.mxu0 %v671
    %v673 = vand.u32 %v124, 4294901760
    %v674 = vsub.f32 %v124, %v673
    %v675 = vand.u32 %v674, 4294901760
    %v676 = vsub.f32 %v674, %v675
    %v677 = vand.u32 %v676, 4294901760
    %678 = vmatpush.msra.mxu0 %v677
    %v679 = vand.u32 %v122, 4294901760
    %v680 = vsub.f32 %v122, %v679
    %v681 = vand.u32 %v680, 4294901760
    %v682 = vsub.f32 %v680, %v681
    %v683 = vand.u32 %v682, 4294901760
    %684 = vmatpush.msra.mxu0 %v683
    %v685 = vand.u32 %v120, 4294901760
    %v686 = vsub.f32 %v120, %v685
    %v687 = vand.u32 %v686, 4294901760
    %v688 = vsub.f32 %v686, %v687
    %v689 = vand.u32 %v688, 4294901760
    %690 = vmatpush.msra.mxu0 %v689
    %v691 = vand.u32 %v118, 4294901760
    %v692 = vsub.f32 %v118, %v691
    %v693 = vand.u32 %v692, 4294901760
    %v694 = vsub.f32 %v692, %v693
    %v695 = vand.u32 %v694, 4294901760
    %696 = vmatpush.msra.mxu0 %v695
    %v697 = vand.u32 %v116, 4294901760
    %v698 = vsub.f32 %v116, %v697
    %v699 = vand.u32 %v698, 4294901760
    %v700 = vsub.f32 %v698, %v699
    %v701 = vand.u32 %v700, 4294901760
    %702 = vmatpush.msra.mxu0 %v701
    %v703 = vand.u32 %v114, 4294901760
    %v704 = vsub.f32 %v114, %v703
    %v705 = vand.u32 %v704, 4294901760
    %v706 = vsub.f32 %v704, %v705
    %v707 = vand.u32 %v706, 4294901760
    %708 = vmatpush.msra.mxu0 %v707
    %v709 = vand.u32 %v112, 4294901760
    %v710 = vsub.f32 %v112, %v709
    %v711 = vand.u32 %v710, 4294901760
    %v712 = vsub.f32 %v710, %v711
    %v713 = vand.u32 %v712, 4294901760
    %714 = vmatpush.msra.mxu0 %v713
    %v715 = vand.u32 %v110, 4294901760
    %v716 = vsub.f32 %v110, %v715
    %v717 = vand.u32 %v716, 4294901760
    %v718 = vsub.f32 %v716, %v717
    %v719 = vand.u32 %v718, 4294901760
    %720 = vmatpush.msra.mxu0 %v719
    %v721 = vand.u32 %v108, 4294901760
    %v722 = vsub.f32 %v108, %v721
    %v723 = vand.u32 %v722, 4294901760
    %v724 = vsub.f32 %v722, %v723
    %v725 = vand.u32 %v724, 4294901760
    %726 = vmatpush.msra.mxu0 %v725
    %v727 = vand.u32 %v69, 4294901760
    %728 = vmatmul.f32.gmra.mxu0 %v727
    %v729 = vpop.f32.mrf.mxu0
    %v730 = vadd.f32 %v621, %v729
    %v731 = vand.u32 %v73, 4294901760
    %732 = vmatmul.f32.gmra.mxu0 %v731
    %v733 = vpop.f32.mrf.mxu0
    %v734 = vadd.f32 %v629, %v733
    %735 = vdwg.mxu0
    %v736 = vand.u32 %v138, 4294901760
    %v737 = vsub.f32 %v138, %v736
    %738 = vmatpush.msra.mxu0 %v737
    %v739 = vand.u32 %v136, 4294901760
    %v740 = vsub.f32 %v136, %v739
    %741 = vmatpush.msra.mxu0 %v740
    %v742 = vand.u32 %v134, 4294901760
    %v743 = vsub.f32 %v134, %v742
    %744 = vmatpush.msra.mxu0 %v743
    %v745 = vand.u32 %v132, 4294901760
    %v746 = vsub.f32 %v132, %v745
    %747 = vmatpush.msra.mxu0 %v746
    %v748 = vand.u32 %v130, 4294901760
    %v749 = vsub.f32 %v130, %v748
    %750 = vmatpush.msra.mxu0 %v749
    %v751 = vand.u32 %v128, 4294901760
    %v752 = vsub.f32 %v128, %v751
    %753 = vmatpush.msra.mxu0 %v752
    %v754 = vand.u32 %v126, 4294901760
    %v755 = vsub.f32 %v126, %v754
    %756 = vmatpush.msra.mxu0 %v755
    %v757 = vand.u32 %v124, 4294901760
    %v758 = vsub.f32 %v124, %v757
    %759 = vmatpush.msra.mxu0 %v758
    %v760 = vand.u32 %v122, 4294901760
    %v761 = vsub.f32 %v122, %v760
    %762 = vmatpush.msra.mxu0 %v761
    %v763 = vand.u32 %v120, 4294901760
    %v764 = vsub.f32 %v120, %v763
    %765 = vmatpush.msra.mxu0 %v764
    %v766 = vand.u32 %v118, 4294901760
    %v767 = vsub.f32 %v118, %v766
    %768 = vmatpush.msra.mxu0 %v767
    %v769 = vand.u32 %v116, 4294901760
    %v770 = vsub.f32 %v116, %v769
    %771 = vmatpush.msra.mxu0 %v770
    %v772 = vand.u32 %v114, 4294901760
    %v773 = vsub.f32 %v114, %v772
    %774 = vmatpush.msra.mxu0 %v773
    %v775 = vand.u32 %v112, 4294901760
    %v776 = vsub.f32 %v112, %v775
    %777 = vmatpush.msra.mxu0 %v776
    %v778 = vand.u32 %v110, 4294901760
    %v779 = vsub.f32 %v110, %v778
    %780 = vmatpush.msra.mxu0 %v779
    %v781 = vand.u32 %v108, 4294901760
    %v782 = vsub.f32 %v108, %v781
    %783 = vmatpush.msra.mxu0 %v782
    %v784 = vand.u32 %v69, 4294901760
    %v785 = vsub.f32 %v69, %v784
    %786 = vmatmul.f32.gmra.mxu0 %v785
    %v787 = vpop.f32.mrf.mxu0
    %v788 = vadd.f32 %v730, %v787
    %v789 = vand.u32 %v73, 4294901760
    %v790 = vsub.f32 %v73, %v789
    %791 = vmatmul.f32.gmra.mxu0 %v790
    %v792 = vpop.f32.mrf.mxu0
    %v793 = vadd.f32 %v734, %v792
    %794 = vdwg.mxu0
    %v795 = vand.u32 %v138, 4294901760
    %796 = vmatpush.msra.mxu0 %v795
    %v797 = vand.u32 %v136, 4294901760
    %798 = vmatpush.msra.mxu0 %v797
    %v799 = vand.u32 %v134, 4294901760
    %800 = vmatpush.msra.mxu0 %v799
    %v801 = vand.u32 %v132, 4294901760
    %802 = vmatpush.msra.mxu0 %v801
    %v803 = vand.u32 %v130, 4294901760
    %804 = vmatpush.msra.mxu0 %v803
    %v805 = vand.u32 %v128, 4294901760
    %806 = vmatpush.msra.mxu0 %v805
    %v807 = vand.u32 %v126, 4294901760
    %808 = vmatpush.msra.mxu0 %v807
    %v809 = vand.u32 %v124, 4294901760
    %810 = vmatpush.msra.mxu0 %v809
    %v811 = vand.u32 %v122, 4294901760
    %812 = vmatpush.msra.mxu0 %v811
    %v813 = vand.u32 %v120, 4294901760
    %814 = vmatpush.msra.mxu0 %v813
    %v815 = vand.u32 %v118, 4294901760
    %816 = vmatpush.msra.mxu0 %v815
    %v817 = vand.u32 %v116, 4294901760
    %818 = vmatpush.msra.mxu0 %v817
    %v819 = vand.u32 %v114, 4294901760
    %820 = vmatpush.msra.mxu0 %v819
    %v821 = vand.u32 %v112, 4294901760
    %822 = vmatpush.msra.mxu0 %v821
    %v823 = vand.u32 %v110, 4294901760
    %824 = vmatpush.msra.mxu0 %v823
    %v825 = vand.u32 %v108, 4294901760
    %826 = vmatpush.msra.mxu0 %v825
    %v827 = vand.u32 %v69, 4294901760
    %v828 = vsub.f32 %v69, %v827
    %v829 = vand.u32 %v828, 4294901760
    %830 = vmatmul.f32.gmra.mxu0 %v829
    %v831 = vpop.f32.mrf.mxu0
    %v832 = vadd.f32 %v788, %v831
    %v833 = vand.u32 %v73, 4294901760
    %v834 = vsub.f32 %v73, %v833
    %v835 = vand.u32 %v834, 4294901760
    %836 = vmatmul.f32.gmra.mxu0 %v835
    %v837 = vpop.f32.mrf.mxu0
    %v838 = vadd.f32 %v793, %v837
    %839 = vdwg.mxu0
    %v840 = vand.u32 %v138, 4294901760
    %v841 = vsub.f32 %v138, %v840
    %v842 = vand.u32 %v841, 4294901760
    %843 = vmatpush.msra.mxu0 %v842
    %v844 = vand.u32 %v136, 4294901760
    %v845 = vsub.f32 %v136, %v844
    %v846 = vand.u32 %v845, 4294901760
    %847 = vmatpush.msra.mxu0 %v846
    %v848 = vand.u32 %v134, 4294901760
    %v849 = vsub.f32 %v134, %v848
    %v850 = vand.u32 %v849, 4294901760
    %851 = vmatpush.msra.mxu0 %v850
    %v852 = vand.u32 %v132, 4294901760
    %v853 = vsub.f32 %v132, %v852
    %v854 = vand.u32 %v853, 4294901760
    %855 = vmatpush.msra.mxu0 %v854
    %v856 = vand.u32 %v130, 4294901760
    %v857 = vsub.f32 %v130, %v856
    %v858 = vand.u32 %v857, 4294901760
    %859 = vmatpush.msra.mxu0 %v858
    %v860 = vand.u32 %v128, 4294901760
    %v861 = vsub.f32 %v128, %v860
    %v862 = vand.u32 %v861, 4294901760
    %863 = vmatpush.msra.mxu0 %v862
    %v864 = vand.u32 %v126, 4294901760
    %v865 = vsub.f32 %v126, %v864
    %v866 = vand.u32 %v865, 4294901760
    %867 = vmatpush.msra.mxu0 %v866
    %v868 = vand.u32 %v124, 4294901760
    %v869 = vsub.f32 %v124, %v868
    %v870 = vand.u32 %v869, 4294901760
    %871 = vmatpush.msra.mxu0 %v870
    %v872 = vand.u32 %v122, 4294901760
    %v873 = vsub.f32 %v122, %v872
    %v874 = vand.u32 %v873, 4294901760
    %875 = vmatpush.msra.mxu0 %v874
    %v876 = vand.u32 %v120, 4294901760
    %v877 = vsub.f32 %v120, %v876
    %v878 = vand.u32 %v877, 4294901760
    %879 = vmatpush.msra.mxu0 %v878
    %v880 = vand.u32 %v118, 4294901760
    %v881 = vsub.f32 %v118, %v880
    %v882 = vand.u32 %v881, 4294901760
    %883 = vmatpush.msra.mxu0 %v882
    %v884 = vand.u32 %v116, 4294901760
    %v885 = vsub.f32 %v116, %v884
    %v886 = vand.u32 %v885, 4294901760
    %887 = vmatpush.msra.mxu0 %v886
    %v888 = vand.u32 %v114, 4294901760
    %v889 = vsub.f32 %v114, %v888
    %v890 = vand.u32 %v889, 4294901760
    %891 = vmatpush.msra.mxu0 %v890
    %v892 = vand.u32 %v112, 4294901760
    %v893 = vsub.f32 %v112, %v892
    %v894 = vand.u32 %v893, 4294901760
    %895 = vmatpush.msra.mxu0 %v894
    %v896 = vand.u32 %v110, 4294901760
    %v897 = vsub.f32 %v110, %v896
    %v898 = vand.u32 %v897, 4294901760
    %899 = vmatpush.msra.mxu0 %v898
    %v900 = vand.u32 %v108, 4294901760
    %v901 = vsub.f32 %v108, %v900
    %v902 = vand.u32 %v901, 4294901760
    %903 = vmatpush.msra.mxu0 %v902
    %v904 = vand.u32 %v69, 4294901760
    %905 = vmatmul.f32.gmra.mxu0 %v904
    %v906 = vpop.f32.mrf.mxu0
    %v907 = vadd.f32 %v832, %v906
    %v908 = vand.u32 %v73, 4294901760
    %909 = vmatmul.f32.gmra.mxu0 %v908
    %v910 = vpop.f32.mrf.mxu0
    %v911 = vadd.f32 %v838, %v910
    %912 = vdwg.mxu0
    %v913 = vand.u32 %v138, 4294901760
    %914 = vmatpush.msra.mxu0 %v913
    %v915 = vand.u32 %v136, 4294901760
    %916 = vmatpush.msra.mxu0 %v915
    %v917 = vand.u32 %v134, 4294901760
    %918 = vmatpush.msra.mxu0 %v917
    %v919 = vand.u32 %v132, 4294901760
    %920 = vmatpush.msra.mxu0 %v919
    %v921 = vand.u32 %v130, 4294901760
    %922 = vmatpush.msra.mxu0 %v921
    %v923 = vand.u32 %v128, 4294901760
    %924 = vmatpush.msra.mxu0 %v923
    %v925 = vand.u32 %v126, 4294901760
    %926 = vmatpush.msra.mxu0 %v925
    %v927 = vand.u32 %v124, 4294901760
    %928 = vmatpush.msra.mxu0 %v927
    %v929 = vand.u32 %v122, 4294901760
    %930 = vmatpush.msra.mxu0 %v929
    %v931 = vand.u32 %v120, 4294901760
    %932 = vmatpush.msra.mxu0 %v931
    %v933 = vand.u32 %v118, 4294901760
    %934 = vmatpush.msra.mxu0 %v933
    %v935 = vand.u32 %v116, 4294901760
    %936 = vmatpush.msra.mxu0 %v935
    %v937 = vand.u32 %v114, 4294901760
    %938 = vmatpush.msra.mxu0 %v937
    %v939 = vand.u32 %v112, 4294901760
    %940 = vmatpush.msra.mxu0 %v939
    %v941 = vand.u32 %v110, 4294901760
    %942 = vmatpush.msra.mxu0 %v941
    %v943 = vand.u32 %v108, 4294901760
    %944 = vmatpush.msra.mxu0 %v943
    %v945 = vand.u32 %v69, 4294901760
    %946 = vmatmul.f32.gmra.mxu0 %v945
    %v947 = vpop.f32.mrf.mxu0
    %v948 = vadd.f32 %v907, %v947
    %v949 = vand.u32 %v73, 4294901760
    %950 = vmatmul.f32.gmra.mxu0 %v949
    %v951 = vpop.f32.mrf.mxu0
    %v952 = vadd.f32 %v911, %v951
    %953 = vdwg.mxu0
    %v954 = vand.u32 %v170, 4294901760
    %955 = vmatpush.msra.mxu0 %v954
    %v956 = vand.u32 %v168, 4294901760
    %957 = vmatpush.msra.mxu0 %v956
    %v958 = vand.u32 %v166, 4294901760
    %959 = vmatpush.msra.mxu0 %v958
    %v960 = vand.u32 %v164, 4294901760
    %961 = vmatpush.msra.mxu0 %v960
    %v962 = vand.u32 %v162, 4294901760
    %963 = vmatpush.msra.mxu0 %v962
    %v964 = vand.u32 %v160, 4294901760
    %965 = vmatpush.msra.mxu0 %v964
    %v966 = vand.u32 %v158, 4294901760
    %967 = vmatpush.msra.mxu0 %v966
    %v968 = vand.u32 %v156, 4294901760
    %969 = vmatpush.msra.mxu0 %v968
    %v970 = vand.u32 %v154, 4294901760
    %971 = vmatpush.msra.mxu0 %v970
    %v972 = vand.u32 %v152, 4294901760
    %973 = vmatpush.msra.mxu0 %v972
    %v974 = vand.u32 %v150, 4294901760
    %975 = vmatpush.msra.mxu0 %v974
    %v976 = vand.u32 %v148, 4294901760
    %977 = vmatpush.msra.mxu0 %v976
    %v978 = vand.u32 %v146, 4294901760
    %979 = vmatpush.msra.mxu0 %v978
    %v980 = vand.u32 %v144, 4294901760
    %981 = vmatpush.msra.mxu0 %v980
    %v982 = vand.u32 %v142, 4294901760
    %983 = vmatpush.msra.mxu0 %v982
    %v984 = vand.u32 %v140, 4294901760
    %985 = vmatpush.msra.mxu0 %v984
    %v986 = vand.u32 %v70, 4294901760
    %v987 = vsub.f32 %v70, %v986
    %v988 = vand.u32 %v987, 4294901760
    %v989 = vsub.f32 %v987, %v988
    %v990 = vand.u32 %v989, 4294901760
    %991 = vmatmul.f32.gmra.mxu0 %v990
    %v992 = vpop.f32.mrf.mxu0
    %v993 = vadd.f32 %v948, %v992
    %v994 = vand.u32 %v74, 4294901760
    %v995 = vsub.f32 %v74, %v994
    %v996 = vand.u32 %v995, 4294901760
    %v997 = vsub.f32 %v995, %v996
    %v998 = vand.u32 %v997, 4294901760
    %999 = vmatmul.f32.gmra.mxu0 %v998
    %v1000 = vpop.f32.mrf.mxu0
    %v1001 = vadd.f32 %v952, %v1000
    %1002 = vdwg.mxu0
    %v1003 = vand.u32 %v170, 4294901760
    %v1004 = vsub.f32 %v170, %v1003
    %v1005 = vand.u32 %v1004, 4294901760
    %v1006 = vsub.f32 %v1004, %v1005
    %v1007 = vand.u32 %v1006, 4294901760
    %1008 = vmatpush.msra.mxu0 %v1007
    %v1009 = vand.u32 %v168, 4294901760
    %v1010 = vsub.f32 %v168, %v1009
    %v1011 = vand.u32 %v1010, 4294901760
    %v1012 = vsub.f32 %v1010, %v1011
    %v1013 = vand.u32 %v1012, 4294901760
    %1014 = vmatpush.msra.mxu0 %v1013
    %v1015 = vand.u32 %v166, 4294901760
    %v1016 = vsub.f32 %v166, %v1015
    %v1017 = vand.u32 %v1016, 4294901760
    %v1018 = vsub.f32 %v1016, %v1017
    %v1019 = vand.u32 %v1018, 4294901760
    %1020 = vmatpush.msra.mxu0 %v1019
    %v1021 = vand.u32 %v164, 4294901760
    %v1022 = vsub.f32 %v164, %v1021
    %v1023 = vand.u32 %v1022, 4294901760
    %v1024 = vsub.f32 %v1022, %v1023
    %v1025 = vand.u32 %v1024, 4294901760
    %1026 = vmatpush.msra.mxu0 %v1025
    %v1027 = vand.u32 %v162, 4294901760
    %v1028 = vsub.f32 %v162, %v1027
    %v1029 = vand.u32 %v1028, 4294901760
    %v1030 = vsub.f32 %v1028, %v1029
    %v1031 = vand.u32 %v1030, 4294901760
    %1032 = vmatpush.msra.mxu0 %v1031
    %v1033 = vand.u32 %v160, 4294901760
    %v1034 = vsub.f32 %v160, %v1033
    %v1035 = vand.u32 %v1034, 4294901760
    %v1036 = vsub.f32 %v1034, %v1035
    %v1037 = vand.u32 %v1036, 4294901760
    %1038 = vmatpush.msra.mxu0 %v1037
    %v1039 = vand.u32 %v158, 4294901760
    %v1040 = vsub.f32 %v158, %v1039
    %v1041 = vand.u32 %v1040, 4294901760
    %v1042 = vsub.f32 %v1040, %v1041
    %v1043 = vand.u32 %v1042, 4294901760
    %1044 = vmatpush.msra.mxu0 %v1043
    %v1045 = vand.u32 %v156, 4294901760
    %v1046 = vsub.f32 %v156, %v1045
    %v1047 = vand.u32 %v1046, 4294901760
    %v1048 = vsub.f32 %v1046, %v1047
    %v1049 = vand.u32 %v1048, 4294901760
    %1050 = vmatpush.msra.mxu0 %v1049
    %v1051 = vand.u32 %v154, 4294901760
    %v1052 = vsub.f32 %v154, %v1051
    %v1053 = vand.u32 %v1052, 4294901760
    %v1054 = vsub.f32 %v1052, %v1053
    %v1055 = vand.u32 %v1054, 4294901760
    %1056 = vmatpush.msra.mxu0 %v1055
    %v1057 = vand.u32 %v152, 4294901760
    %v1058 = vsub.f32 %v152, %v1057
    %v1059 = vand.u32 %v1058, 4294901760
    %v1060 = vsub.f32 %v1058, %v1059
    %v1061 = vand.u32 %v1060, 4294901760
    %1062 = vmatpush.msra.mxu0 %v1061
    %v1063 = vand.u32 %v150, 4294901760
    %v1064 = vsub.f32 %v150, %v1063
    %v1065 = vand.u32 %v1064, 4294901760
    %v1066 = vsub.f32 %v1064, %v1065
    %v1067 = vand.u32 %v1066, 4294901760
    %1068 = vmatpush.msra.mxu0 %v1067
    %v1069 = vand.u32 %v148, 4294901760
    %v1070 = vsub.f32 %v148, %v1069
    %v1071 = vand.u32 %v1070, 4294901760
    %v1072 = vsub.f32 %v1070, %v1071
    %v1073 = vand.u32 %v1072, 4294901760
    %1074 = vmatpush.msra.mxu0 %v1073
    %v1075 = vand.u32 %v146, 4294901760
    %v1076 = vsub.f32 %v146, %v1075
    %v1077 = vand.u32 %v1076, 4294901760
    %v1078 = vsub.f32 %v1076, %v1077
    %v1079 = vand.u32 %v1078, 4294901760
    %1080 = vmatpush.msra.mxu0 %v1079
    %v1081 = vand.u32 %v144, 4294901760
    %v1082 = vsub.f32 %v144, %v1081
    %v1083 = vand.u32 %v1082, 4294901760
    %v1084 = vsub.f32 %v1082, %v1083
    %v1085 = vand.u32 %v1084, 4294901760
    %1086 = vmatpush.msra.mxu0 %v1085
    %v1087 = vand.u32 %v142, 4294901760
    %v1088 = vsub.f32 %v142, %v1087
    %v1089 = vand.u32 %v1088, 4294901760
    %v1090 = vsub.f32 %v1088, %v1089
    %v1091 = vand.u32 %v1090, 4294901760
    %1092 = vmatpush.msra.mxu0 %v1091
    %v1093 = vand.u32 %v140, 4294901760
    %v1094 = vsub.f32 %v140, %v1093
    %v1095 = vand.u32 %v1094, 4294901760
    %v1096 = vsub.f32 %v1094, %v1095
    %v1097 = vand.u32 %v1096, 4294901760
    %1098 = vmatpush.msra.mxu0 %v1097
    %v1099 = vand.u32 %v70, 4294901760
    %1100 = vmatmul.f32.gmra.mxu0 %v1099
    %v1101 = vpop.f32.mrf.mxu0
    %v1102 = vadd.f32 %v993, %v1101
    %v1103 = vand.u32 %v74, 4294901760
    %1104 = vmatmul.f32.gmra.mxu0 %v1103
    %v1105 = vpop.f32.mrf.mxu0
    %v1106 = vadd.f32 %v1001, %v1105
    %1107 = vdwg.mxu0
    %v1108 = vand.u32 %v170, 4294901760
    %v1109 = vsub.f32 %v170, %v1108
    %1110 = vmatpush.msra.mxu0 %v1109
    %v1111 = vand.u32 %v168, 4294901760
    %v1112 = vsub.f32 %v168, %v1111
    %1113 = vmatpush.msra.mxu0 %v1112
    %v1114 = vand.u32 %v166, 4294901760
    %v1115 = vsub.f32 %v166, %v1114
    %1116 = vmatpush.msra.mxu0 %v1115
    %v1117 = vand.u32 %v164, 4294901760
    %v1118 = vsub.f32 %v164, %v1117
    %1119 = vmatpush.msra.mxu0 %v1118
    %v1120 = vand.u32 %v162, 4294901760
    %v1121 = vsub.f32 %v162, %v1120
    %1122 = vmatpush.msra.mxu0 %v1121
    %v1123 = vand.u32 %v160, 4294901760
    %v1124 = vsub.f32 %v160, %v1123
    %1125 = vmatpush.msra.mxu0 %v1124
    %v1126 = vand.u32 %v158, 4294901760
    %v1127 = vsub.f32 %v158, %v1126
    %1128 = vmatpush.msra.mxu0 %v1127
    %v1129 = vand.u32 %v156, 4294901760
    %v1130 = vsub.f32 %v156, %v1129
    %1131 = vmatpush.msra.mxu0 %v1130
    %v1132 = vand.u32 %v154, 4294901760
    %v1133 = vsub.f32 %v154, %v1132
    %1134 = vmatpush.msra.mxu0 %v1133
    %v1135 = vand.u32 %v152, 4294901760
    %v1136 = vsub.f32 %v152, %v1135
    %1137 = vmatpush.msra.mxu0 %v1136
    %v1138 = vand.u32 %v150, 4294901760
    %v1139 = vsub.f32 %v150, %v1138
    %1140 = vmatpush.msra.mxu0 %v1139
    %v1141 = vand.u32 %v148, 4294901760
    %v1142 = vsub.f32 %v148, %v1141
    %1143 = vmatpush.msra.mxu0 %v1142
    %v1144 = vand.u32 %v146, 4294901760
    %v1145 = vsub.f32 %v146, %v1144
    %1146 = vmatpush.msra.mxu0 %v1145
    %v1147 = vand.u32 %v144, 4294901760
    %v1148 = vsub.f32 %v144, %v1147
    %1149 = vmatpush.msra.mxu0 %v1148
    %v1150 = vand.u32 %v142, 4294901760
    %v1151 = vsub.f32 %v142, %v1150
    %1152 = vmatpush.msra.mxu0 %v1151
    %v1153 = vand.u32 %v140, 4294901760
    %v1154 = vsub.f32 %v140, %v1153
    %1155 = vmatpush.msra.mxu0 %v1154
    %v1156 = vand.u32 %v70, 4294901760
    %v1157 = vsub.f32 %v70, %v1156
    %1158 = vmatmul.f32.gmra.mxu0 %v1157
    %v1159 = vpop.f32.mrf.mxu0
    %v1160 = vadd.f32 %v1102, %v1159
    %v1161 = vand.u32 %v74, 4294901760
    %v1162 = vsub.f32 %v74, %v1161
    %1163 = vmatmul.f32.gmra.mxu0 %v1162
    %v1164 = vpop.f32.mrf.mxu0
    %v1165 = vadd.f32 %v1106, %v1164
    %1166 = vdwg.mxu0
    %v1167 = vand.u32 %v170, 4294901760
    %1168 = vmatpush.msra.mxu0 %v1167
    %v1169 = vand.u32 %v168, 4294901760
    %1170 = vmatpush.msra.mxu0 %v1169
    %v1171 = vand.u32 %v166, 4294901760
    %1172 = vmatpush.msra.mxu0 %v1171
    %v1173 = vand.u32 %v164, 4294901760
    %1174 = vmatpush.msra.mxu0 %v1173
    %v1175 = vand.u32 %v162, 4294901760
    %1176 = vmatpush.msra.mxu0 %v1175
    %v1177 = vand.u32 %v160, 4294901760
    %1178 = vmatpush.msra.mxu0 %v1177
    %v1179 = vand.u32 %v158, 4294901760
    %1180 = vmatpush.msra.mxu0 %v1179
    %v1181 = vand.u32 %v156, 4294901760
    %1182 = vmatpush.msra.mxu0 %v1181
    %v1183 = vand.u32 %v154, 4294901760
    %1184 = vmatpush.msra.mxu0 %v1183
    %v1185 = vand.u32 %v152, 4294901760
    %1186 = vmatpush.msra.mxu0 %v1185
    %v1187 = vand.u32 %v150, 4294901760
    %1188 = vmatpush.msra.mxu0 %v1187
    %v1189 = vand.u32 %v148, 4294901760
    %1190 = vmatpush.msra.mxu0 %v1189
    %v1191 = vand.u32 %v146, 4294901760
    %1192 = vmatpush.msra.mxu0 %v1191
    %v1193 = vand.u32 %v144, 4294901760
    %1194 = vmatpush.msra.mxu0 %v1193
    %v1195 = vand.u32 %v142, 4294901760
    %1196 = vmatpush.msra.mxu0 %v1195
    %v1197 = vand.u32 %v140, 4294901760
    %1198 = vmatpush.msra.mxu0 %v1197
    %v1199 = vand.u32 %v70, 4294901760
    %v1200 = vsub.f32 %v70, %v1199
    %v1201 = vand.u32 %v1200, 4294901760
    %1202 = vmatmul.f32.gmra.mxu0 %v1201
    %v1203 = vpop.f32.mrf.mxu0
    %v1204 = vadd.f32 %v1160, %v1203
    %v1205 = vand.u32 %v74, 4294901760
    %v1206 = vsub.f32 %v74, %v1205
    %v1207 = vand.u32 %v1206, 4294901760
    %1208 = vmatmul.f32.gmra.mxu0 %v1207
    %v1209 = vpop.f32.mrf.mxu0
    %v1210 = vadd.f32 %v1165, %v1209
    %1211 = vdwg.mxu0
    %v1212 = vand.u32 %v170, 4294901760
    %v1213 = vsub.f32 %v170, %v1212
    %v1214 = vand.u32 %v1213, 4294901760
    %1215 = vmatpush.msra.mxu0 %v1214
    %v1216 = vand.u32 %v168, 4294901760
    %v1217 = vsub.f32 %v168, %v1216
    %v1218 = vand.u32 %v1217, 4294901760
    %1219 = vmatpush.msra.mxu0 %v1218
    %v1220 = vand.u32 %v166, 4294901760
    %v1221 = vsub.f32 %v166, %v1220
    %v1222 = vand.u32 %v1221, 4294901760
    %1223 = vmatpush.msra.mxu0 %v1222
    %v1224 = vand.u32 %v164, 4294901760
    %v1225 = vsub.f32 %v164, %v1224
    %v1226 = vand.u32 %v1225, 4294901760
    %1227 = vmatpush.msra.mxu0 %v1226
    %v1228 = vand.u32 %v162, 4294901760
    %v1229 = vsub.f32 %v162, %v1228
    %v1230 = vand.u32 %v1229, 4294901760
    %1231 = vmatpush.msra.mxu0 %v1230
    %v1232 = vand.u32 %v160, 4294901760
    %v1233 = vsub.f32 %v160, %v1232
    %v1234 = vand.u32 %v1233, 4294901760
    %1235 = vmatpush.msra.mxu0 %v1234
    %v1236 = vand.u32 %v158, 4294901760
    %v1237 = vsub.f32 %v158, %v1236
    %v1238 = vand.u32 %v1237, 4294901760
    %1239 = vmatpush.msra.mxu0 %v1238
    %v1240 = vand.u32 %v156, 4294901760
    %v1241 = vsub.f32 %v156, %v1240
    %v1242 = vand.u32 %v1241, 4294901760
    %1243 = vmatpush.msra.mxu0 %v1242
    %v1244 = vand.u32 %v154, 4294901760
    %v1245 = vsub.f32 %v154, %v1244
    %v1246 = vand.u32 %v1245, 4294901760
    %1247 = vmatpush.msra.mxu0 %v1246
    %v1248 = vand.u32 %v152, 4294901760
    %v1249 = vsub.f32 %v152, %v1248
    %v1250 = vand.u32 %v1249, 4294901760
    %1251 = vmatpush.msra.mxu0 %v1250
    %v1252 = vand.u32 %v150, 4294901760
    %v1253 = vsub.f32 %v150, %v1252
    %v1254 = vand.u32 %v1253, 4294901760
    %1255 = vmatpush.msra.mxu0 %v1254
    %v1256 = vand.u32 %v148, 4294901760
    %v1257 = vsub.f32 %v148, %v1256
    %v1258 = vand.u32 %v1257, 4294901760
    %1259 = vmatpush.msra.mxu0 %v1258
    %v1260 = vand.u32 %v146, 4294901760
    %v1261 = vsub.f32 %v146, %v1260
    %v1262 = vand.u32 %v1261, 4294901760
    %1263 = vmatpush.msra.mxu0 %v1262
    %v1264 = vand.u32 %v144, 4294901760
    %v1265 = vsub.f32 %v144, %v1264
    %v1266 = vand.u32 %v1265, 4294901760
    %1267 = vmatpush.msra.mxu0 %v1266
    %v1268 = vand.u32 %v142, 4294901760
    %v1269 = vsub.f32 %v142, %v1268
    %v1270 = vand.u32 %v1269, 4294901760
    %1271 = vmatpush.msra.mxu0 %v1270
    %v1272 = vand.u32 %v140, 4294901760
    %v1273 = vsub.f32 %v140, %v1272
    %v1274 = vand.u32 %v1273, 4294901760
    %1275 = vmatpush.msra.mxu0 %v1274
    %v1276 = vand.u32 %v70, 4294901760
    %1277 = vmatmul.f32.gmra.mxu0 %v1276
    %v1278 = vpop.f32.mrf.mxu0
    %v1279 = vadd.f32 %v1204, %v1278
    %v1280 = vand.u32 %v74, 4294901760
    %1281 = vmatmul.f32.gmra.mxu0 %v1280
    %v1282 = vpop.f32.mrf.mxu0
    %v1283 = vadd.f32 %v1210, %v1282
    %1284 = vdwg.mxu0
    %v1285 = vand.u32 %v170, 4294901760
    %1286 = vmatpush.msra.mxu0 %v1285
    %v1287 = vand.u32 %v168, 4294901760
    %1288 = vmatpush.msra.mxu0 %v1287
    %v1289 = vand.u32 %v166, 4294901760
    %1290 = vmatpush.msra.mxu0 %v1289
    %v1291 = vand.u32 %v164, 4294901760
    %1292 = vmatpush.msra.mxu0 %v1291
    %v1293 = vand.u32 %v162, 4294901760
    %1294 = vmatpush.msra.mxu0 %v1293
    %v1295 = vand.u32 %v160, 4294901760
    %1296 = vmatpush.msra.mxu0 %v1295
    %v1297 = vand.u32 %v158, 4294901760
    %1298 = vmatpush.msra.mxu0 %v1297
    %v1299 = vand.u32 %v156, 4294901760
    %1300 = vmatpush.msra.mxu0 %v1299
    %v1301 = vand.u32 %v154, 4294901760
    %1302 = vmatpush.msra.mxu0 %v1301
    %v1303 = vand.u32 %v152, 4294901760
    %1304 = vmatpush.msra.mxu0 %v1303
    %v1305 = vand.u32 %v150, 4294901760
    %1306 = vmatpush.msra.mxu0 %v1305
    %v1307 = vand.u32 %v148, 4294901760
    %1308 = vmatpush.msra.mxu0 %v1307
    %v1309 = vand.u32 %v146, 4294901760
    %1310 = vmatpush.msra.mxu0 %v1309
    %v1311 = vand.u32 %v144, 4294901760
    %1312 = vmatpush.msra.mxu0 %v1311
    %v1313 = vand.u32 %v142, 4294901760
    %1314 = vmatpush.msra.mxu0 %v1313
    %v1315 = vand.u32 %v140, 4294901760
    %1316 = vmatpush.msra.mxu0 %v1315
    %v1317 = vand.u32 %v70, 4294901760
    %1318 = vmatmul.f32.gmra.mxu0 %v1317
    %v1319 = vpop.f32.mrf.mxu0
    %v1320 = vadd.f32 %v1279, %v1319
    %v1321 = vand.u32 %v74, 4294901760
    %1322 = vmatmul.f32.gmra.mxu0 %v1321
    %v1323 = vpop.f32.mrf.mxu0
    %v1324 = vadd.f32 %v1283, %v1323
    %1325 = vdwg.mxu0
    %v1326 = vand.u32 %v202, 4294901760
    %1327 = vmatpush.msra.mxu0 %v1326
    %v1328 = vand.u32 %v200, 4294901760
    %1329 = vmatpush.msra.mxu0 %v1328
    %v1330 = vand.u32 %v198, 4294901760
    %1331 = vmatpush.msra.mxu0 %v1330
    %v1332 = vand.u32 %v196, 4294901760
    %1333 = vmatpush.msra.mxu0 %v1332
    %v1334 = vand.u32 %v194, 4294901760
    %1335 = vmatpush.msra.mxu0 %v1334
    %v1336 = vand.u32 %v192, 4294901760
    %1337 = vmatpush.msra.mxu0 %v1336
    %v1338 = vand.u32 %v190, 4294901760
    %1339 = vmatpush.msra.mxu0 %v1338
    %v1340 = vand.u32 %v188, 4294901760
    %1341 = vmatpush.msra.mxu0 %v1340
    %v1342 = vand.u32 %v186, 4294901760
    %1343 = vmatpush.msra.mxu0 %v1342
    %v1344 = vand.u32 %v184, 4294901760
    %1345 = vmatpush.msra.mxu0 %v1344
    %v1346 = vand.u32 %v182, 4294901760
    %1347 = vmatpush.msra.mxu0 %v1346
    %v1348 = vand.u32 %v180, 4294901760
    %1349 = vmatpush.msra.mxu0 %v1348
    %v1350 = vand.u32 %v178, 4294901760
    %1351 = vmatpush.msra.mxu0 %v1350
    %v1352 = vand.u32 %v176, 4294901760
    %1353 = vmatpush.msra.mxu0 %v1352
    %v1354 = vand.u32 %v174, 4294901760
    %1355 = vmatpush.msra.mxu0 %v1354
    %v1356 = vand.u32 %v172, 4294901760
    %1357 = vmatpush.msra.mxu0 %v1356
    %v1358 = vand.u32 %v71, 4294901760
    %v1359 = vsub.f32 %v71, %v1358
    %v1360 = vand.u32 %v1359, 4294901760
    %v1361 = vsub.f32 %v1359, %v1360
    %v1362 = vand.u32 %v1361, 4294901760
    %1363 = vmatmul.f32.gmra.mxu0 %v1362
    %v1364 = vpop.f32.mrf.mxu0
    %v1365 = vadd.f32 %v1320, %v1364
    %v1366 = vand.u32 %v75, 4294901760
    %v1367 = vsub.f32 %v75, %v1366
    %v1368 = vand.u32 %v1367, 4294901760
    %v1369 = vsub.f32 %v1367, %v1368
    %v1370 = vand.u32 %v1369, 4294901760
    %1371 = vmatmul.f32.gmra.mxu0 %v1370
    %v1372 = vpop.f32.mrf.mxu0
    %v1373 = vadd.f32 %v1324, %v1372
    %1374 = vdwg.mxu0
    %v1375 = vand.u32 %v202, 4294901760
    %v1376 = vsub.f32 %v202, %v1375
    %v1377 = vand.u32 %v1376, 4294901760
    %v1378 = vsub.f32 %v1376, %v1377
    %v1379 = vand.u32 %v1378, 4294901760
    %1380 = vmatpush.msra.mxu0 %v1379
    %v1381 = vand.u32 %v200, 4294901760
    %v1382 = vsub.f32 %v200, %v1381
    %v1383 = vand.u32 %v1382, 4294901760
    %v1384 = vsub.f32 %v1382, %v1383
    %v1385 = vand.u32 %v1384, 4294901760
    %1386 = vmatpush.msra.mxu0 %v1385
    %v1387 = vand.u32 %v198, 4294901760
    %v1388 = vsub.f32 %v198, %v1387
    %v1389 = vand.u32 %v1388, 4294901760
    %v1390 = vsub.f32 %v1388, %v1389
    %v1391 = vand.u32 %v1390, 4294901760
    %1392 = vmatpush.msra.mxu0 %v1391
    %v1393 = vand.u32 %v196, 4294901760
    %v1394 = vsub.f32 %v196, %v1393
    %v1395 = vand.u32 %v1394, 4294901760
    %v1396 = vsub.f32 %v1394, %v1395
    %v1397 = vand.u32 %v1396, 4294901760
    %1398 = vmatpush.msra.mxu0 %v1397
    %v1399 = vand.u32 %v194, 4294901760
    %v1400 = vsub.f32 %v194, %v1399
    %v1401 = vand.u32 %v1400, 4294901760
    %v1402 = vsub.f32 %v1400, %v1401
    %v1403 = vand.u32 %v1402, 4294901760
    %1404 = vmatpush.msra.mxu0 %v1403
    %v1405 = vand.u32 %v192, 4294901760
    %v1406 = vsub.f32 %v192, %v1405
    %v1407 = vand.u32 %v1406, 4294901760
    %v1408 = vsub.f32 %v1406, %v1407
    %v1409 = vand.u32 %v1408, 4294901760
    %1410 = vmatpush.msra.mxu0 %v1409
    %v1411 = vand.u32 %v190, 4294901760
    %v1412 = vsub.f32 %v190, %v1411
    %v1413 = vand.u32 %v1412, 4294901760
    %v1414 = vsub.f32 %v1412, %v1413
    %v1415 = vand.u32 %v1414, 4294901760
    %1416 = vmatpush.msra.mxu0 %v1415
    %v1417 = vand.u32 %v188, 4294901760
    %v1418 = vsub.f32 %v188, %v1417
    %v1419 = vand.u32 %v1418, 4294901760
    %v1420 = vsub.f32 %v1418, %v1419
    %v1421 = vand.u32 %v1420, 4294901760
    %1422 = vmatpush.msra.mxu0 %v1421
    %v1423 = vand.u32 %v186, 4294901760
    %v1424 = vsub.f32 %v186, %v1423
    %v1425 = vand.u32 %v1424, 4294901760
    %v1426 = vsub.f32 %v1424, %v1425
    %v1427 = vand.u32 %v1426, 4294901760
    %1428 = vmatpush.msra.mxu0 %v1427
    %v1429 = vand.u32 %v184, 4294901760
    %v1430 = vsub.f32 %v184, %v1429
    %v1431 = vand.u32 %v1430, 4294901760
    %v1432 = vsub.f32 %v1430, %v1431
    %v1433 = vand.u32 %v1432, 4294901760
    %1434 = vmatpush.msra.mxu0 %v1433
    %v1435 = vand.u32 %v182, 4294901760
    %v1436 = vsub.f32 %v182, %v1435
    %v1437 = vand.u32 %v1436, 4294901760
    %v1438 = vsub.f32 %v1436, %v1437
    %v1439 = vand.u32 %v1438, 4294901760
    %1440 = vmatpush.msra.mxu0 %v1439
    %v1441 = vand.u32 %v180, 4294901760
    %v1442 = vsub.f32 %v180, %v1441
    %v1443 = vand.u32 %v1442, 4294901760
    %v1444 = vsub.f32 %v1442, %v1443
    %v1445 = vand.u32 %v1444, 4294901760
    %1446 = vmatpush.msra.mxu0 %v1445
    %v1447 = vand.u32 %v178, 4294901760
    %v1448 = vsub.f32 %v178, %v1447
    %v1449 = vand.u32 %v1448, 4294901760
    %v1450 = vsub.f32 %v1448, %v1449
    %v1451 = vand.u32 %v1450, 4294901760
    %1452 = vmatpush.msra.mxu0 %v1451
    %v1453 = vand.u32 %v176, 4294901760
    %v1454 = vsub.f32 %v176, %v1453
    %v1455 = vand.u32 %v1454, 4294901760
    %v1456 = vsub.f32 %v1454, %v1455
    %v1457 = vand.u32 %v1456, 4294901760
    %1458 = vmatpush.msra.mxu0 %v1457
    %v1459 = vand.u32 %v174, 4294901760
    %v1460 = vsub.f32 %v174, %v1459
    %v1461 = vand.u32 %v1460, 4294901760
    %v1462 = vsub.f32 %v1460, %v1461
    %v1463 = vand.u32 %v1462, 4294901760
    %1464 = vmatpush.msra.mxu0 %v1463
    %v1465 = vand.u32 %v172, 4294901760
    %v1466 = vsub.f32 %v172, %v1465
    %v1467 = vand.u32 %v1466, 4294901760
    %v1468 = vsub.f32 %v1466, %v1467
    %v1469 = vand.u32 %v1468, 4294901760
    %1470 = vmatpush.msra.mxu0 %v1469
    %v1471 = vand.u32 %v71, 4294901760
    %1472 = vmatmul.f32.gmra.mxu0 %v1471
    %v1473 = vpop.f32.mrf.mxu0
    %v1474 = vadd.f32 %v1365, %v1473
    %v1475 = vand.u32 %v75, 4294901760
    %1476 = vmatmul.f32.gmra.mxu0 %v1475
    %v1477 = vpop.f32.mrf.mxu0
    %v1478 = vadd.f32 %v1373, %v1477
    %1479 = vdwg.mxu0
    %v1480 = vand.u32 %v202, 4294901760
    %v1481 = vsub.f32 %v202, %v1480
    %1482 = vmatpush.msra.mxu0 %v1481
    %v1483 = vand.u32 %v200, 4294901760
    %v1484 = vsub.f32 %v200, %v1483
    %1485 = vmatpush.msra.mxu0 %v1484
    %v1486 = vand.u32 %v198, 4294901760
    %v1487 = vsub.f32 %v198, %v1486
    %1488 = vmatpush.msra.mxu0 %v1487
    %v1489 = vand.u32 %v196, 4294901760
    %v1490 = vsub.f32 %v196, %v1489
    %1491 = vmatpush.msra.mxu0 %v1490
    %v1492 = vand.u32 %v194, 4294901760
    %v1493 = vsub.f32 %v194, %v1492
    %1494 = vmatpush.msra.mxu0 %v1493
    %v1495 = vand.u32 %v192, 4294901760
    %v1496 = vsub.f32 %v192, %v1495
    %1497 = vmatpush.msra.mxu0 %v1496
    %v1498 = vand.u32 %v190, 4294901760
    %v1499 = vsub.f32 %v190, %v1498
    %1500 = vmatpush.msra.mxu0 %v1499
    %v1501 = vand.u32 %v188, 4294901760
    %v1502 = vsub.f32 %v188, %v1501
    %1503 = vmatpush.msra.mxu0 %v1502
    %v1504 = vand.u32 %v186, 4294901760
    %v1505 = vsub.f32 %v186, %v1504
    %1506 = vmatpush.msra.mxu0 %v1505
    %v1507 = vand.u32 %v184, 4294901760
    %v1508 = vsub.f32 %v184, %v1507
    %1509 = vmatpush.msra.mxu0 %v1508
    %v1510 = vand.u32 %v182, 4294901760
    %v1511 = vsub.f32 %v182, %v1510
    %1512 = vmatpush.msra.mxu0 %v1511
    %v1513 = vand.u32 %v180, 4294901760
    %v1514 = vsub.f32 %v180, %v1513
    %1515 = vmatpush.msra.mxu0 %v1514
    %v1516 = vand.u32 %v178, 4294901760
    %v1517 = vsub.f32 %v178, %v1516
    %1518 = vmatpush.msra.mxu0 %v1517
    %v1519 = vand.u32 %v176, 4294901760
    %v1520 = vsub.f32 %v176, %v1519
    %1521 = vmatpush.msra.mxu0 %v1520
    %v1522 = vand.u32 %v174, 4294901760
    %v1523 = vsub.f32 %v174, %v1522
    %1524 = vmatpush.msra.mxu0 %v1523
    %v1525 = vand.u32 %v172, 4294901760
    %v1526 = vsub.f32 %v172, %v1525
    %1527 = vmatpush.msra.mxu0 %v1526
    %v1528 = vand.u32 %v71, 4294901760
    %v1529 = vsub.f32 %v71, %v1528
    %1530 = vmatmul.f32.gmra.mxu0 %v1529
    %v1531 = vpop.f32.mrf.mxu0
    %v1532 = vadd.f32 %v1474, %v1531
    %v1533 = vand.u32 %v75, 4294901760
    %v1534 = vsub.f32 %v75, %v1533
    %1535 = vmatmul.f32.gmra.mxu0 %v1534
    %v1536 = vpop.f32.mrf.mxu0
    %v1537 = vadd.f32 %v1478, %v1536
    %1538 = vdwg.mxu0
    %v1539 = vand.u32 %v202, 4294901760
    %1540 = vmatpush.msra.mxu0 %v1539
    %v1541 = vand.u32 %v200, 4294901760
    %1542 = vmatpush.msra.mxu0 %v1541
    %v1543 = vand.u32 %v198, 4294901760
    %1544 = vmatpush.msra.mxu0 %v1543
    %v1545 = vand.u32 %v196, 4294901760
    %1546 = vmatpush.msra.mxu0 %v1545
    %v1547 = vand.u32 %v194, 4294901760
    %1548 = vmatpush.msra.mxu0 %v1547
    %v1549 = vand.u32 %v192, 4294901760
    %1550 = vmatpush.msra.mxu0 %v1549
    %v1551 = vand.u32 %v190, 4294901760
    %1552 = vmatpush.msra.mxu0 %v1551
    %v1553 = vand.u32 %v188, 4294901760
    %1554 = vmatpush.msra.mxu0 %v1553
    %v1555 = vand.u32 %v186, 4294901760
    %1556 = vmatpush.msra.mxu0 %v1555
    %v1557 = vand.u32 %v184, 4294901760
    %1558 = vmatpush.msra.mxu0 %v1557
    %v1559 = vand.u32 %v182, 4294901760
    %1560 = vmatpush.msra.mxu0 %v1559
    %v1561 = vand.u32 %v180, 4294901760
    %1562 = vmatpush.msra.mxu0 %v1561
    %v1563 = vand.u32 %v178, 4294901760
    %1564 = vmatpush.msra.mxu0 %v1563
    %v1565 = vand.u32 %v176, 4294901760
    %1566 = vmatpush.msra.mxu0 %v1565
    %v1567 = vand.u32 %v174, 4294901760
    %1568 = vmatpush.msra.mxu0 %v1567
    %v1569 = vand.u32 %v172, 4294901760
    %1570 = vmatpush.msra.mxu0 %v1569
    %v1571 = vand.u32 %v71, 4294901760
    %v1572 = vsub.f32 %v71, %v1571
    %v1573 = vand.u32 %v1572, 4294901760
    %1574 = vmatmul.f32.gmra.mxu0 %v1573
    %v1575 = vpop.f32.mrf.mxu0
    %v1576 = vadd.f32 %v1532, %v1575
    %v1577 = vand.u32 %v75, 4294901760
    %v1578 = vsub.f32 %v75, %v1577
    %v1579 = vand.u32 %v1578, 4294901760
    %1580 = vmatmul.f32.gmra.mxu0 %v1579
    %v1581 = vpop.f32.mrf.mxu0
    %v1582 = vadd.f32 %v1537, %v1581
    %1583 = vdwg.mxu0
    %v1584 = vand.u32 %v202, 4294901760
    %v1585 = vsub.f32 %v202, %v1584
    %v1586 = vand.u32 %v1585, 4294901760
    %1587 = vmatpush.msra.mxu0 %v1586
    %v1588 = vand.u32 %v200, 4294901760
    %v1589 = vsub.f32 %v200, %v1588
    %v1590 = vand.u32 %v1589, 4294901760
    %1591 = vmatpush.msra.mxu0 %v1590
    %v1592 = vand.u32 %v198, 4294901760
    %v1593 = vsub.f32 %v198, %v1592
    %v1594 = vand.u32 %v1593, 4294901760
    %1595 = vmatpush.msra.mxu0 %v1594
    %v1596 = vand.u32 %v196, 4294901760
    %v1597 = vsub.f32 %v196, %v1596
    %v1598 = vand.u32 %v1597, 4294901760
    %1599 = vmatpush.msra.mxu0 %v1598
    %v1600 = vand.u32 %v194, 4294901760
    %v1601 = vsub.f32 %v194, %v1600
    %v1602 = vand.u32 %v1601, 4294901760
    %1603 = vmatpush.msra.mxu0 %v1602
    %v1604 = vand.u32 %v192, 4294901760
    %v1605 = vsub.f32 %v192, %v1604
    %v1606 = vand.u32 %v1605, 4294901760
    %1607 = vmatpush.msra.mxu0 %v1606
    %v1608 = vand.u32 %v190, 4294901760
    %v1609 = vsub.f32 %v190, %v1608
    %v1610 = vand.u32 %v1609, 4294901760
    %1611 = vmatpush.msra.mxu0 %v1610
    %v1612 = vand.u32 %v188, 4294901760
    %v1613 = vsub.f32 %v188, %v1612
    %v1614 = vand.u32 %v1613, 4294901760
    %1615 = vmatpush.msra.mxu0 %v1614
    %v1616 = vand.u32 %v186, 4294901760
    %v1617 = vsub.f32 %v186, %v1616
    %v1618 = vand.u32 %v1617, 4294901760
    %1619 = vmatpush.msra.mxu0 %v1618
    %v1620 = vand.u32 %v184, 4294901760
    %v1621 = vsub.f32 %v184, %v1620
    %v1622 = vand.u32 %v1621, 4294901760
    %1623 = vmatpush.msra.mxu0 %v1622
    %v1624 = vand.u32 %v182, 4294901760
    %v1625 = vsub.f32 %v182, %v1624
    %v1626 = vand.u32 %v1625, 4294901760
    %1627 = vmatpush.msra.mxu0 %v1626
    %v1628 = vand.u32 %v180, 4294901760
    %v1629 = vsub.f32 %v180, %v1628
    %v1630 = vand.u32 %v1629, 4294901760
    %1631 = vmatpush.msra.mxu0 %v1630
    %v1632 = vand.u32 %v178, 4294901760
    %v1633 = vsub.f32 %v178, %v1632
    %v1634 = vand.u32 %v1633, 4294901760
    %1635 = vmatpush.msra.mxu0 %v1634
    %v1636 = vand.u32 %v176, 4294901760
    %v1637 = vsub.f32 %v176, %v1636
    %v1638 = vand.u32 %v1637, 4294901760
    %1639 = vmatpush.msra.mxu0 %v1638
    %v1640 = vand.u32 %v174, 4294901760
    %v1641 = vsub.f32 %v174, %v1640
    %v1642 = vand.u32 %v1641, 4294901760
    %1643 = vmatpush.msra.mxu0 %v1642
    %v1644 = vand.u32 %v172, 4294901760
    %v1645 = vsub.f32 %v172, %v1644
    %v1646 = vand.u32 %v1645, 4294901760
    %1647 = vmatpush.msra.mxu0 %v1646
    %v1648 = vand.u32 %v71, 4294901760
    %1649 = vmatmul.f32.gmra.mxu0 %v1648
    %v1650 = vpop.f32.mrf.mxu0
    %v1651 = vadd.f32 %v1576, %v1650
    %v1652 = vand.u32 %v75, 4294901760
    %1653 = vmatmul.f32.gmra.mxu0 %v1652
    %v1654 = vpop.f32.mrf.mxu0
    %v1655 = vadd.f32 %v1582, %v1654
    %1656 = vdwg.mxu0
    %v1657 = vand.u32 %v202, 4294901760
    %1658 = vmatpush.msra.mxu0 %v1657
    %v1659 = vand.u32 %v200, 4294901760
    %1660 = vmatpush.msra.mxu0 %v1659
    %v1661 = vand.u32 %v198, 4294901760
    %1662 = vmatpush.msra.mxu0 %v1661
    %v1663 = vand.u32 %v196, 4294901760
    %1664 = vmatpush.msra.mxu0 %v1663
    %v1665 = vand.u32 %v194, 4294901760
    %1666 = vmatpush.msra.mxu0 %v1665
    %v1667 = vand.u32 %v192, 4294901760
    %1668 = vmatpush.msra.mxu0 %v1667
    %v1669 = vand.u32 %v190, 4294901760
    %1670 = vmatpush.msra.mxu0 %v1669
    %v1671 = vand.u32 %v188, 4294901760
    %1672 = vmatpush.msra.mxu0 %v1671
    %v1673 = vand.u32 %v186, 4294901760
    %1674 = vmatpush.msra.mxu0 %v1673
    %v1675 = vand.u32 %v184, 4294901760
    %1676 = vmatpush.msra.mxu0 %v1675
    %v1677 = vand.u32 %v182, 4294901760
    %1678 = vmatpush.msra.mxu0 %v1677
    %v1679 = vand.u32 %v180, 4294901760
    %1680 = vmatpush.msra.mxu0 %v1679
    %v1681 = vand.u32 %v178, 4294901760
    %1682 = vmatpush.msra.mxu0 %v1681
    %v1683 = vand.u32 %v176, 4294901760
    %1684 = vmatpush.msra.mxu0 %v1683
    %v1685 = vand.u32 %v174, 4294901760
    %1686 = vmatpush.msra.mxu0 %v1685
    %v1687 = vand.u32 %v172, 4294901760
    %1688 = vmatpush.msra.mxu0 %v1687
    %v1689 = vand.u32 %v71, 4294901760
    %1690 = vmatmul.f32.gmra.mxu0 %v1689
    %v1691 = vpop.f32.mrf.mxu0
    %v1692 = vadd.f32 %v1651, %v1691
    %v1693 = vand.u32 %v75, 4294901760
    %1694 = vmatmul.f32.gmra.mxu0 %v1693
    %v1695 = vpop.f32.mrf.mxu0
    %v1696 = vadd.f32 %v1655, %v1695
    %1697 = vdwg.mxu0
    %v1698 = vand.u32 %v107, 4294901760
    %1699 = vmatpush.msra.mxu0 %v1698
    %v1700 = vand.u32 %v105, 4294901760
    %1701 = vmatpush.msra.mxu0 %v1700
    %v1702 = vand.u32 %v103, 4294901760
    %1703 = vmatpush.msra.mxu0 %v1702
    %v1704 = vand.u32 %v101, 4294901760
    %1705 = vmatpush.msra.mxu0 %v1704
    %v1706 = vand.u32 %v99, 4294901760
    %1707 = vmatpush.msra.mxu0 %v1706
    %v1708 = vand.u32 %v97, 4294901760
    %1709 = vmatpush.msra.mxu0 %v1708
    %v1710 = vand.u32 %v95, 4294901760
    %1711 = vmatpush.msra.mxu0 %v1710
    %v1712 = vand.u32 %v93, 4294901760
    %1713 = vmatpush.msra.mxu0 %v1712
    %v1714 = vand.u32 %v91, 4294901760
    %1715 = vmatpush.msra.mxu0 %v1714
    %v1716 = vand.u32 %v89, 4294901760
    %1717 = vmatpush.msra.mxu0 %v1716
    %v1718 = vand.u32 %v87, 4294901760
    %1719 = vmatpush.msra.mxu0 %v1718
    %v1720 = vand.u32 %v85, 4294901760
    %1721 = vmatpush.msra.mxu0 %v1720
    %v1722 = vand.u32 %v83, 4294901760
    %1723 = vmatpush.msra.mxu0 %v1722
    %v1724 = vand.u32 %v81, 4294901760
    %1725 = vmatpush.msra.mxu0 %v1724
    %v1726 = vand.u32 %v79, 4294901760
    %1727 = vmatpush.msra.mxu0 %v1726
    %v1728 = vand.u32 %v77, 4294901760
    %1729 = vmatpush.msra.mxu0 %v1728
    %v1730 = vand.u32 %v68, 4294901760
    %v1731 = vsub.f32 %v68, %v1730
    %v1732 = vand.u32 %v1731, 4294901760
    %v1733 = vsub.f32 %v1731, %v1732
    %v1734 = vand.u32 %v1733, 4294901760
    %1735 = vmatmul.f32.gmra.mxu0 %v1734
    %v1736 = vpop.f32.mrf.mxu0
    %v1737 = vadd.f32 %v207, %v1736
    %v1738 = vand.u32 %v72, 4294901760
    %v1739 = vsub.f32 %v72, %v1738
    %v1740 = vand.u32 %v1739, 4294901760
    %v1741 = vsub.f32 %v1739, %v1740
    %v1742 = vand.u32 %v1741, 4294901760
    %1743 = vmatmul.f32.gmra.mxu0 %v1742
    %v1744 = vpop.f32.mrf.mxu0
    %v1745 = vadd.f32 %v207, %v1744
    %1746 = vdwg.mxu0
    %v1747 = vand.u32 %v107, 4294901760
    %v1748 = vsub.f32 %v107, %v1747
    %v1749 = vand.u32 %v1748, 4294901760
    %v1750 = vsub.f32 %v1748, %v1749
    %v1751 = vand.u32 %v1750, 4294901760
    %1752 = vmatpush.msra.mxu0 %v1751
    %v1753 = vand.u32 %v105, 4294901760
    %v1754 = vsub.f32 %v105, %v1753
    %v1755 = vand.u32 %v1754, 4294901760
    %v1756 = vsub.f32 %v1754, %v1755
    %v1757 = vand.u32 %v1756, 4294901760
    %1758 = vmatpush.msra.mxu0 %v1757
    %v1759 = vand.u32 %v103, 4294901760
    %v1760 = vsub.f32 %v103, %v1759
    %v1761 = vand.u32 %v1760, 4294901760
    %v1762 = vsub.f32 %v1760, %v1761
    %v1763 = vand.u32 %v1762, 4294901760
    %1764 = vmatpush.msra.mxu0 %v1763
    %v1765 = vand.u32 %v101, 4294901760
    %v1766 = vsub.f32 %v101, %v1765
    %v1767 = vand.u32 %v1766, 4294901760
    %v1768 = vsub.f32 %v1766, %v1767
    %v1769 = vand.u32 %v1768, 4294901760
    %1770 = vmatpush.msra.mxu0 %v1769
    %v1771 = vand.u32 %v99, 4294901760
    %v1772 = vsub.f32 %v99, %v1771
    %v1773 = vand.u32 %v1772, 4294901760
    %v1774 = vsub.f32 %v1772, %v1773
    %v1775 = vand.u32 %v1774, 4294901760
    %1776 = vmatpush.msra.mxu0 %v1775
    %v1777 = vand.u32 %v97, 4294901760
    %v1778 = vsub.f32 %v97, %v1777
    %v1779 = vand.u32 %v1778, 4294901760
    %v1780 = vsub.f32 %v1778, %v1779
    %v1781 = vand.u32 %v1780, 4294901760
    %1782 = vmatpush.msra.mxu0 %v1781
    %v1783 = vand.u32 %v95, 4294901760
    %v1784 = vsub.f32 %v95, %v1783
    %v1785 = vand.u32 %v1784, 4294901760
    %v1786 = vsub.f32 %v1784, %v1785
    %v1787 = vand.u32 %v1786, 4294901760
    %1788 = vmatpush.msra.mxu0 %v1787
    %v1789 = vand.u32 %v93, 4294901760
    %v1790 = vsub.f32 %v93, %v1789
    %v1791 = vand.u32 %v1790, 4294901760
    %v1792 = vsub.f32 %v1790, %v1791
    %v1793 = vand.u32 %v1792, 4294901760
    %1794 = vmatpush.msra.mxu0 %v1793
    %v1795 = vand.u32 %v91, 4294901760
    %v1796 = vsub.f32 %v91, %v1795
    %v1797 = vand.u32 %v1796, 4294901760
    %v1798 = vsub.f32 %v1796, %v1797
    %v1799 = vand.u32 %v1798, 4294901760
    %1800 = vmatpush.msra.mxu0 %v1799
    %v1801 = vand.u32 %v89, 4294901760
    %v1802 = vsub.f32 %v89, %v1801
    %v1803 = vand.u32 %v1802, 4294901760
    %v1804 = vsub.f32 %v1802, %v1803
    %v1805 = vand.u32 %v1804, 4294901760
    %1806 = vmatpush.msra.mxu0 %v1805
    %v1807 = vand.u32 %v87, 4294901760
    %v1808 = vsub.f32 %v87, %v1807
    %v1809 = vand.u32 %v1808, 4294901760
    %v1810 = vsub.f32 %v1808, %v1809
    %v1811 = vand.u32 %v1810, 4294901760
    %1812 = vmatpush.msra.mxu0 %v1811
    %v1813 = vand.u32 %v85, 4294901760
    %v1814 = vsub.f32 %v85, %v1813
    %v1815 = vand.u32 %v1814, 4294901760
    %v1816 = vsub.f32 %v1814, %v1815
    %v1817 = vand.u32 %v1816, 4294901760
    %1818 = vmatpush.msra.mxu0 %v1817
    %v1819 = vand.u32 %v83, 4294901760
    %v1820 = vsub.f32 %v83, %v1819
    %v1821 = vand.u32 %v1820, 4294901760
    %v1822 = vsub.f32 %v1820, %v1821
    %v1823 = vand.u32 %v1822, 4294901760
    %1824 = vmatpush.msra.mxu0 %v1823
    %v1825 = vand.u32 %v81, 4294901760
    %v1826 = vsub.f32 %v81, %v1825
    %v1827 = vand.u32 %v1826, 4294901760
    %v1828 = vsub.f32 %v1826, %v1827
    %v1829 = vand.u32 %v1828, 4294901760
    %1830 = vmatpush.msra.mxu0 %v1829
    %v1831 = vand.u32 %v79, 4294901760
    %v1832 = vsub.f32 %v79, %v1831
    %v1833 = vand.u32 %v1832, 4294901760
    %v1834 = vsub.f32 %v1832, %v1833
    %v1835 = vand.u32 %v1834, 4294901760
    %1836 = vmatpush.msra.mxu0 %v1835
    %v1837 = vand.u32 %v77, 4294901760
    %v1838 = vsub.f32 %v77, %v1837
    %v1839 = vand.u32 %v1838, 4294901760
    %v1840 = vsub.f32 %v1838, %v1839
    %v1841 = vand.u32 %v1840, 4294901760
    %1842 = vmatpush.msra.mxu0 %v1841
    %v1843 = vand.u32 %v68, 4294901760
    %1844 = vmatmul.f32.gmra.mxu0 %v1843
    %v1845 = vpop.f32.mrf.mxu0
    %v1846 = vadd.f32 %v1737, %v1845
    %v1847 = vand.u32 %v72, 4294901760
    %1848 = vmatmul.f32.gmra.mxu0 %v1847
    %v1849 = vpop.f32.mrf.mxu0
    %v1850 = vadd.f32 %v1745, %v1849
    %1851 = vdwg.mxu0
    %v1852 = vand.u32 %v107, 4294901760
    %v1853 = vsub.f32 %v107, %v1852
    %1854 = vmatpush.msra.mxu0 %v1853
    %v1855 = vand.u32 %v105, 4294901760
    %v1856 = vsub.f32 %v105, %v1855
    %1857 = vmatpush.msra.mxu0 %v1856
    %v1858 = vand.u32 %v103, 4294901760
    %v1859 = vsub.f32 %v103, %v1858
    %1860 = vmatpush.msra.mxu0 %v1859
    %v1861 = vand.u32 %v101, 4294901760
    %v1862 = vsub.f32 %v101, %v1861
    %1863 = vmatpush.msra.mxu0 %v1862
    %v1864 = vand.u32 %v99, 4294901760
    %v1865 = vsub.f32 %v99, %v1864
    %1866 = vmatpush.msra.mxu0 %v1865
    %v1867 = vand.u32 %v97, 4294901760
    %v1868 = vsub.f32 %v97, %v1867
    %1869 = vmatpush.msra.mxu0 %v1868
    %v1870 = vand.u32 %v95, 4294901760
    %v1871 = vsub.f32 %v95, %v1870
    %1872 = vmatpush.msra.mxu0 %v1871
    %v1873 = vand.u32 %v93, 4294901760
    %v1874 = vsub.f32 %v93, %v1873
    %1875 = vmatpush.msra.mxu0 %v1874
    %v1876 = vand.u32 %v91, 4294901760
    %v1877 = vsub.f32 %v91, %v1876
    %1878 = vmatpush.msra.mxu0 %v1877
    %v1879 = vand.u32 %v89, 4294901760
    %v1880 = vsub.f32 %v89, %v1879
    %1881 = vmatpush.msra.mxu0 %v1880
    %v1882 = vand.u32 %v87, 4294901760
    %v1883 = vsub.f32 %v87, %v1882
    %1884 = vmatpush.msra.mxu0 %v1883
    %v1885 = vand.u32 %v85, 4294901760
    %v1886 = vsub.f32 %v85, %v1885
    %1887 = vmatpush.msra.mxu0 %v1886
    %v1888 = vand.u32 %v83, 4294901760
    %v1889 = vsub.f32 %v83, %v1888
    %1890 = vmatpush.msra.mxu0 %v1889
    %v1891 = vand.u32 %v81, 4294901760
    %v1892 = vsub.f32 %v81, %v1891
    %1893 = vmatpush.msra.mxu0 %v1892
    %v1894 = vand.u32 %v79, 4294901760
    %v1895 = vsub.f32 %v79, %v1894
    %1896 = vmatpush.msra.mxu0 %v1895
    %v1897 = vand.u32 %v77, 4294901760
    %v1898 = vsub.f32 %v77, %v1897
    %1899 = vmatpush.msra.mxu0 %v1898
    %v1900 = vand.u32 %v68, 4294901760
    %v1901 = vsub.f32 %v68, %v1900
    %1902 = vmatmul.f32.gmra.mxu0 %v1901
    %v1903 = vpop.f32.mrf.mxu0
    %v1904 = vadd.f32 %v1846, %v1903
    %v1905 = vand.u32 %v72, 4294901760
    %v1906 = vsub.f32 %v72, %v1905
    %1907 = vmatmul.f32.gmra.mxu0 %v1906
    %v1908 = vpop.f32.mrf.mxu0
    %v1909 = vadd.f32 %v1850, %v1908
    %1910 = vdwg.mxu0
    %v1911 = vand.u32 %v107, 4294901760
    %1912 = vmatpush.msra.mxu0 %v1911
    %v1913 = vand.u32 %v105, 4294901760
    %1914 = vmatpush.msra.mxu0 %v1913
    %v1915 = vand.u32 %v103, 4294901760
    %1916 = vmatpush.msra.mxu0 %v1915
    %v1917 = vand.u32 %v101, 4294901760
    %1918 = vmatpush.msra.mxu0 %v1917
    %v1919 = vand.u32 %v99, 4294901760
    %1920 = vmatpush.msra.mxu0 %v1919
    %v1921 = vand.u32 %v97, 4294901760
    %1922 = vmatpush.msra.mxu0 %v1921
    %v1923 = vand.u32 %v95, 4294901760
    %1924 = vmatpush.msra.mxu0 %v1923
    %v1925 = vand.u32 %v93, 4294901760
    %1926 = vmatpush.msra.mxu0 %v1925
    %v1927 = vand.u32 %v91, 4294901760
    %1928 = vmatpush.msra.mxu0 %v1927
    %v1929 = vand.u32 %v89, 4294901760
    %1930 = vmatpush.msra.mxu0 %v1929
    %v1931 = vand.u32 %v87, 4294901760
    %1932 = vmatpush.msra.mxu0 %v1931
    %v1933 = vand.u32 %v85, 4294901760
    %1934 = vmatpush.msra.mxu0 %v1933
    %v1935 = vand.u32 %v83, 4294901760
    %1936 = vmatpush.msra.mxu0 %v1935
    %v1937 = vand.u32 %v81, 4294901760
    %1938 = vmatpush.msra.mxu0 %v1937
    %v1939 = vand.u32 %v79, 4294901760
    %1940 = vmatpush.msra.mxu0 %v1939
    %v1941 = vand.u32 %v77, 4294901760
    %1942 = vmatpush.msra.mxu0 %v1941
    %v1943 = vand.u32 %v68, 4294901760
    %v1944 = vsub.f32 %v68, %v1943
    %v1945 = vand.u32 %v1944, 4294901760
    %1946 = vmatmul.f32.gmra.mxu0 %v1945
    %v1947 = vpop.f32.mrf.mxu0
    %v1948 = vadd.f32 %v1904, %v1947
    %v1949 = vand.u32 %v72, 4294901760
    %v1950 = vsub.f32 %v72, %v1949
    %v1951 = vand.u32 %v1950, 4294901760
    %1952 = vmatmul.f32.gmra.mxu0 %v1951
    %v1953 = vpop.f32.mrf.mxu0
    %v1954 = vadd.f32 %v1909, %v1953
    %1955 = vdwg.mxu0
    %v1956 = vand.u32 %v107, 4294901760
    %v1957 = vsub.f32 %v107, %v1956
    %v1958 = vand.u32 %v1957, 4294901760
    %1959 = vmatpush.msra.mxu0 %v1958
    %v1960 = vand.u32 %v105, 4294901760
    %v1961 = vsub.f32 %v105, %v1960
    %v1962 = vand.u32 %v1961, 4294901760
    %1963 = vmatpush.msra.mxu0 %v1962
    %v1964 = vand.u32 %v103, 4294901760
    %v1965 = vsub.f32 %v103, %v1964
    %v1966 = vand.u32 %v1965, 4294901760
    %1967 = vmatpush.msra.mxu0 %v1966
    %v1968 = vand.u32 %v101, 4294901760
    %v1969 = vsub.f32 %v101, %v1968
    %v1970 = vand.u32 %v1969, 4294901760
    %1971 = vmatpush.msra.mxu0 %v1970
    %v1972 = vand.u32 %v99, 4294901760
    %v1973 = vsub.f32 %v99, %v1972
    %v1974 = vand.u32 %v1973, 4294901760
    %1975 = vmatpush.msra.mxu0 %v1974
    %v1976 = vand.u32 %v97, 4294901760
    %v1977 = vsub.f32 %v97, %v1976
    %v1978 = vand.u32 %v1977, 4294901760
    %1979 = vmatpush.msra.mxu0 %v1978
    %v1980 = vand.u32 %v95, 4294901760
    %v1981 = vsub.f32 %v95, %v1980
    %v1982 = vand.u32 %v1981, 4294901760
    %1983 = vmatpush.msra.mxu0 %v1982
    %v1984 = vand.u32 %v93, 4294901760
    %v1985 = vsub.f32 %v93, %v1984
    %v1986 = vand.u32 %v1985, 4294901760
    %1987 = vmatpush.msra.mxu0 %v1986
    %v1988 = vand.u32 %v91, 4294901760
    %v1989 = vsub.f32 %v91, %v1988
    %v1990 = vand.u32 %v1989, 4294901760
    %1991 = vmatpush.msra.mxu0 %v1990
    %v1992 = vand.u32 %v89, 4294901760
    %v1993 = vsub.f32 %v89, %v1992
    %v1994 = vand.u32 %v1993, 4294901760
    %1995 = vmatpush.msra.mxu0 %v1994
    %v1996 = vand.u32 %v87, 4294901760
    %v1997 = vsub.f32 %v87, %v1996
    %v1998 = vand.u32 %v1997, 4294901760
    %1999 = vmatpush.msra.mxu0 %v1998
    %v2000 = vand.u32 %v85, 4294901760
    %v2001 = vsub.f32 %v85, %v2000
    %v2002 = vand.u32 %v2001, 4294901760
    %2003 = vmatpush.msra.mxu0 %v2002
    %v2004 = vand.u32 %v83, 4294901760
    %v2005 = vsub.f32 %v83, %v2004
    %v2006 = vand.u32 %v2005, 4294901760
    %2007 = vmatpush.msra.mxu0 %v2006
    %v2008 = vand.u32 %v81, 4294901760
    %v2009 = vsub.f32 %v81, %v2008
    %v2010 = vand.u32 %v2009, 4294901760
    %2011 = vmatpush.msra.mxu0 %v2010
    %v2012 = vand.u32 %v79, 4294901760
    %v2013 = vsub.f32 %v79, %v2012
    %v2014 = vand.u32 %v2013, 4294901760
    %2015 = vmatpush.msra.mxu0 %v2014
    %v2016 = vand.u32 %v77, 4294901760
    %v2017 = vsub.f32 %v77, %v2016
    %v2018 = vand.u32 %v2017, 4294901760
    %2019 = vmatpush.msra.mxu0 %v2018
    %v2020 = vand.u32 %v68, 4294901760
    %2021 = vmatmul.f32.gmra.mxu0 %v2020
    %v2022 = vpop.f32.mrf.mxu0
    %v2023 = vadd.f32 %v1948, %v2022
    %v2024 = vand.u32 %v72, 4294901760
    %2025 = vmatmul.f32.gmra.mxu0 %v2024
    %v2026 = vpop.f32.mrf.mxu0
    %v2027 = vadd.f32 %v1954, %v2026
    %2028 = vdwg.mxu0
    %v2029 = vand.u32 %v107, 4294901760
    %2030 = vmatpush.msra.mxu0 %v2029
    %v2031 = vand.u32 %v105, 4294901760
    %2032 = vmatpush.msra.mxu0 %v2031
    %v2033 = vand.u32 %v103, 4294901760
    %2034 = vmatpush.msra.mxu0 %v2033
    %v2035 = vand.u32 %v101, 4294901760
    %2036 = vmatpush.msra.mxu0 %v2035
    %v2037 = vand.u32 %v99, 4294901760
    %2038 = vmatpush.msra.mxu0 %v2037
    %v2039 = vand.u32 %v97, 4294901760
    %2040 = vmatpush.msra.mxu0 %v2039
    %v2041 = vand.u32 %v95, 4294901760
    %2042 = vmatpush.msra.mxu0 %v2041
    %v2043 = vand.u32 %v93, 4294901760
    %2044 = vmatpush.msra.mxu0 %v2043
    %v2045 = vand.u32 %v91, 4294901760
    %2046 = vmatpush.msra.mxu0 %v2045
    %v2047 = vand.u32 %v89, 4294901760
    %2048 = vmatpush.msra.mxu0 %v2047
    %v2049 = vand.u32 %v87, 4294901760
    %2050 = vmatpush.msra.mxu0 %v2049
    %v2051 = vand.u32 %v85, 4294901760
    %2052 = vmatpush.msra.mxu0 %v2051
    %v2053 = vand.u32 %v83, 4294901760
    %2054 = vmatpush.msra.mxu0 %v2053
    %v2055 = vand.u32 %v81, 4294901760
    %2056 = vmatpush.msra.mxu0 %v2055
    %v2057 = vand.u32 %v79, 4294901760
    %2058 = vmatpush.msra.mxu0 %v2057
    %v2059 = vand.u32 %v77, 4294901760
    %2060 = vmatpush.msra.mxu0 %v2059
    %v2061 = vand.u32 %v68, 4294901760
    %2062 = vmatmul.f32.gmra.mxu0 %v2061
    %v2063 = vpop.f32.mrf.mxu0
    %v2064 = vadd.f32 %v2023, %v2063
    %v2065 = vand.u32 %v72, 4294901760
    %2066 = vmatmul.f32.gmra.mxu0 %v2065
    %v2067 = vpop.f32.mrf.mxu0
    %v2068 = vadd.f32 %v2027, %v2067
    %2069 = vdwg.mxu0
    %v2070 = vand.u32 %v139, 4294901760
    %2071 = vmatpush.msra.mxu0 %v2070
    %v2072 = vand.u32 %v137, 4294901760
    %2073 = vmatpush.msra.mxu0 %v2072
    %v2074 = vand.u32 %v135, 4294901760
    %2075 = vmatpush.msra.mxu0 %v2074
    %v2076 = vand.u32 %v133, 4294901760
    %2077 = vmatpush.msra.mxu0 %v2076
    %v2078 = vand.u32 %v131, 4294901760
    %2079 = vmatpush.msra.mxu0 %v2078
    %v2080 = vand.u32 %v129, 4294901760
    %2081 = vmatpush.msra.mxu0 %v2080
    %v2082 = vand.u32 %v127, 4294901760
    %2083 = vmatpush.msra.mxu0 %v2082
    %v2084 = vand.u32 %v125, 4294901760
    %2085 = vmatpush.msra.mxu0 %v2084
    %v2086 = vand.u32 %v123, 4294901760
    %2087 = vmatpush.msra.mxu0 %v2086
    %v2088 = vand.u32 %v121, 4294901760
    %2089 = vmatpush.msra.mxu0 %v2088
    %v2090 = vand.u32 %v119, 4294901760
    %2091 = vmatpush.msra.mxu0 %v2090
    %v2092 = vand.u32 %v117, 4294901760
    %2093 = vmatpush.msra.mxu0 %v2092
    %v2094 = vand.u32 %v115, 4294901760
    %2095 = vmatpush.msra.mxu0 %v2094
    %v2096 = vand.u32 %v113, 4294901760
    %2097 = vmatpush.msra.mxu0 %v2096
    %v2098 = vand.u32 %v111, 4294901760
    %2099 = vmatpush.msra.mxu0 %v2098
    %v2100 = vand.u32 %v109, 4294901760
    %2101 = vmatpush.msra.mxu0 %v2100
    %v2102 = vand.u32 %v69, 4294901760
    %v2103 = vsub.f32 %v69, %v2102
    %v2104 = vand.u32 %v2103, 4294901760
    %v2105 = vsub.f32 %v2103, %v2104
    %v2106 = vand.u32 %v2105, 4294901760
    %2107 = vmatmul.f32.gmra.mxu0 %v2106
    %v2108 = vpop.f32.mrf.mxu0
    %v2109 = vadd.f32 %v2064, %v2108
    %v2110 = vand.u32 %v73, 4294901760
    %v2111 = vsub.f32 %v73, %v2110
    %v2112 = vand.u32 %v2111, 4294901760
    %v2113 = vsub.f32 %v2111, %v2112
    %v2114 = vand.u32 %v2113, 4294901760
    %2115 = vmatmul.f32.gmra.mxu0 %v2114
    %v2116 = vpop.f32.mrf.mxu0
    %v2117 = vadd.f32 %v2068, %v2116
    %2118 = vdwg.mxu0
    %v2119 = vand.u32 %v139, 4294901760
    %v2120 = vsub.f32 %v139, %v2119
    %v2121 = vand.u32 %v2120, 4294901760
    %v2122 = vsub.f32 %v2120, %v2121
    %v2123 = vand.u32 %v2122, 4294901760
    %2124 = vmatpush.msra.mxu0 %v2123
    %v2125 = vand.u32 %v137, 4294901760
    %v2126 = vsub.f32 %v137, %v2125
    %v2127 = vand.u32 %v2126, 4294901760
    %v2128 = vsub.f32 %v2126, %v2127
    %v2129 = vand.u32 %v2128, 4294901760
    %2130 = vmatpush.msra.mxu0 %v2129
    %v2131 = vand.u32 %v135, 4294901760
    %v2132 = vsub.f32 %v135, %v2131
    %v2133 = vand.u32 %v2132, 4294901760
    %v2134 = vsub.f32 %v2132, %v2133
    %v2135 = vand.u32 %v2134, 4294901760
    %2136 = vmatpush.msra.mxu0 %v2135
    %v2137 = vand.u32 %v133, 4294901760
    %v2138 = vsub.f32 %v133, %v2137
    %v2139 = vand.u32 %v2138, 4294901760
    %v2140 = vsub.f32 %v2138, %v2139
    %v2141 = vand.u32 %v2140, 4294901760
    %2142 = vmatpush.msra.mxu0 %v2141
    %v2143 = vand.u32 %v131, 4294901760
    %v2144 = vsub.f32 %v131, %v2143
    %v2145 = vand.u32 %v2144, 4294901760
    %v2146 = vsub.f32 %v2144, %v2145
    %v2147 = vand.u32 %v2146, 4294901760
    %2148 = vmatpush.msra.mxu0 %v2147
    %v2149 = vand.u32 %v129, 4294901760
    %v2150 = vsub.f32 %v129, %v2149
    %v2151 = vand.u32 %v2150, 4294901760
    %v2152 = vsub.f32 %v2150, %v2151
    %v2153 = vand.u32 %v2152, 4294901760
    %2154 = vmatpush.msra.mxu0 %v2153
    %v2155 = vand.u32 %v127, 4294901760
    %v2156 = vsub.f32 %v127, %v2155
    %v2157 = vand.u32 %v2156, 4294901760
    %v2158 = vsub.f32 %v2156, %v2157
    %v2159 = vand.u32 %v2158, 4294901760
    %2160 = vmatpush.msra.mxu0 %v2159
    %v2161 = vand.u32 %v125, 4294901760
    %v2162 = vsub.f32 %v125, %v2161
    %v2163 = vand.u32 %v2162, 4294901760
    %v2164 = vsub.f32 %v2162, %v2163
    %v2165 = vand.u32 %v2164, 4294901760
    %2166 = vmatpush.msra.mxu0 %v2165
    %v2167 = vand.u32 %v123, 4294901760
    %v2168 = vsub.f32 %v123, %v2167
    %v2169 = vand.u32 %v2168, 4294901760
    %v2170 = vsub.f32 %v2168, %v2169
    %v2171 = vand.u32 %v2170, 4294901760
    %2172 = vmatpush.msra.mxu0 %v2171
    %v2173 = vand.u32 %v121, 4294901760
    %v2174 = vsub.f32 %v121, %v2173
    %v2175 = vand.u32 %v2174, 4294901760
    %v2176 = vsub.f32 %v2174, %v2175
    %v2177 = vand.u32 %v2176, 4294901760
    %2178 = vmatpush.msra.mxu0 %v2177
    %v2179 = vand.u32 %v119, 4294901760
    %v2180 = vsub.f32 %v119, %v2179
    %v2181 = vand.u32 %v2180, 4294901760
    %v2182 = vsub.f32 %v2180, %v2181
    %v2183 = vand.u32 %v2182, 4294901760
    %2184 = vmatpush.msra.mxu0 %v2183
    %v2185 = vand.u32 %v117, 4294901760
    %v2186 = vsub.f32 %v117, %v2185
    %v2187 = vand.u32 %v2186, 4294901760
    %v2188 = vsub.f32 %v2186, %v2187
    %v2189 = vand.u32 %v2188, 4294901760
    %2190 = vmatpush.msra.mxu0 %v2189
    %v2191 = vand.u32 %v115, 4294901760
    %v2192 = vsub.f32 %v115, %v2191
    %v2193 = vand.u32 %v2192, 4294901760
    %v2194 = vsub.f32 %v2192, %v2193
    %v2195 = vand.u32 %v2194, 4294901760
    %2196 = vmatpush.msra.mxu0 %v2195
    %v2197 = vand.u32 %v113, 4294901760
    %v2198 = vsub.f32 %v113, %v2197
    %v2199 = vand.u32 %v2198, 4294901760
    %v2200 = vsub.f32 %v2198, %v2199
    %v2201 = vand.u32 %v2200, 4294901760
    %2202 = vmatpush.msra.mxu0 %v2201
    %v2203 = vand.u32 %v111, 4294901760
    %v2204 = vsub.f32 %v111, %v2203
    %v2205 = vand.u32 %v2204, 4294901760
    %v2206 = vsub.f32 %v2204, %v2205
    %v2207 = vand.u32 %v2206, 4294901760
    %2208 = vmatpush.msra.mxu0 %v2207
    %v2209 = vand.u32 %v109, 4294901760
    %v2210 = vsub.f32 %v109, %v2209
    %v2211 = vand.u32 %v2210, 4294901760
    %v2212 = vsub.f32 %v2210, %v2211
    %v2213 = vand.u32 %v2212, 4294901760
    %2214 = vmatpush.msra.mxu0 %v2213
    %v2215 = vand.u32 %v69, 4294901760
    %2216 = vmatmul.f32.gmra.mxu0 %v2215
    %v2217 = vpop.f32.mrf.mxu0
    %v2218 = vadd.f32 %v2109, %v2217
    %v2219 = vand.u32 %v73, 4294901760
    %2220 = vmatmul.f32.gmra.mxu0 %v2219
    %v2221 = vpop.f32.mrf.mxu0
    %v2222 = vadd.f32 %v2117, %v2221
    %2223 = vdwg.mxu0
    %v2224 = vand.u32 %v139, 4294901760
    %v2225 = vsub.f32 %v139, %v2224
    %2226 = vmatpush.msra.mxu0 %v2225
    %v2227 = vand.u32 %v137, 4294901760
    %v2228 = vsub.f32 %v137, %v2227
    %2229 = vmatpush.msra.mxu0 %v2228
    %v2230 = vand.u32 %v135, 4294901760
    %v2231 = vsub.f32 %v135, %v2230
    %2232 = vmatpush.msra.mxu0 %v2231
    %v2233 = vand.u32 %v133, 4294901760
    %v2234 = vsub.f32 %v133, %v2233
    %2235 = vmatpush.msra.mxu0 %v2234
    %v2236 = vand.u32 %v131, 4294901760
    %v2237 = vsub.f32 %v131, %v2236
    %2238 = vmatpush.msra.mxu0 %v2237
    %v2239 = vand.u32 %v129, 4294901760
    %v2240 = vsub.f32 %v129, %v2239
    %2241 = vmatpush.msra.mxu0 %v2240
    %v2242 = vand.u32 %v127, 4294901760
    %v2243 = vsub.f32 %v127, %v2242
    %2244 = vmatpush.msra.mxu0 %v2243
    %v2245 = vand.u32 %v125, 4294901760
    %v2246 = vsub.f32 %v125, %v2245
    %2247 = vmatpush.msra.mxu0 %v2246
    %v2248 = vand.u32 %v123, 4294901760
    %v2249 = vsub.f32 %v123, %v2248
    %2250 = vmatpush.msra.mxu0 %v2249
    %v2251 = vand.u32 %v121, 4294901760
    %v2252 = vsub.f32 %v121, %v2251
    %2253 = vmatpush.msra.mxu0 %v2252
    %v2254 = vand.u32 %v119, 4294901760
    %v2255 = vsub.f32 %v119, %v2254
    %2256 = vmatpush.msra.mxu0 %v2255
    %v2257 = vand.u32 %v117, 4294901760
    %v2258 = vsub.f32 %v117, %v2257
    %2259 = vmatpush.msra.mxu0 %v2258
    %v2260 = vand.u32 %v115, 4294901760
    %v2261 = vsub.f32 %v115, %v2260
    %2262 = vmatpush.msra.mxu0 %v2261
    %v2263 = vand.u32 %v113, 4294901760
    %v2264 = vsub.f32 %v113, %v2263
    %2265 = vmatpush.msra.mxu0 %v2264
    %v2266 = vand.u32 %v111, 4294901760
    %v2267 = vsub.f32 %v111, %v2266
    %2268 = vmatpush.msra.mxu0 %v2267
    %v2269 = vand.u32 %v109, 4294901760
    %v2270 = vsub.f32 %v109, %v2269
    %2271 = vmatpush.msra.mxu0 %v2270
    %v2272 = vand.u32 %v69, 4294901760
    %v2273 = vsub.f32 %v69, %v2272
    %2274 = vmatmul.f32.gmra.mxu0 %v2273
    %v2275 = vpop.f32.mrf.mxu0
    %v2276 = vadd.f32 %v2218, %v2275
    %v2277 = vand.u32 %v73, 4294901760
    %v2278 = vsub.f32 %v73, %v2277
    %2279 = vmatmul.f32.gmra.mxu0 %v2278
    %v2280 = vpop.f32.mrf.mxu0
    %v2281 = vadd.f32 %v2222, %v2280
    %2282 = vdwg.mxu0
    %v2283 = vand.u32 %v139, 4294901760
    %2284 = vmatpush.msra.mxu0 %v2283
    %v2285 = vand.u32 %v137, 4294901760
    %2286 = vmatpush.msra.mxu0 %v2285
    %v2287 = vand.u32 %v135, 4294901760
    %2288 = vmatpush.msra.mxu0 %v2287
    %v2289 = vand.u32 %v133, 4294901760
    %2290 = vmatpush.msra.mxu0 %v2289
    %v2291 = vand.u32 %v131, 4294901760
    %2292 = vmatpush.msra.mxu0 %v2291
    %v2293 = vand.u32 %v129, 4294901760
    %2294 = vmatpush.msra.mxu0 %v2293
    %v2295 = vand.u32 %v127, 4294901760
    %2296 = vmatpush.msra.mxu0 %v2295
    %v2297 = vand.u32 %v125, 4294901760
    %2298 = vmatpush.msra.mxu0 %v2297
    %v2299 = vand.u32 %v123, 4294901760
    %2300 = vmatpush.msra.mxu0 %v2299
    %v2301 = vand.u32 %v121, 4294901760
    %2302 = vmatpush.msra.mxu0 %v2301
    %v2303 = vand.u32 %v119, 4294901760
    %2304 = vmatpush.msra.mxu0 %v2303
    %v2305 = vand.u32 %v117, 4294901760
    %2306 = vmatpush.msra.mxu0 %v2305
    %v2307 = vand.u32 %v115, 4294901760
    %2308 = vmatpush.msra.mxu0 %v2307
    %v2309 = vand.u32 %v113, 4294901760
    %2310 = vmatpush.msra.mxu0 %v2309
    %v2311 = vand.u32 %v111, 4294901760
    %2312 = vmatpush.msra.mxu0 %v2311
    %v2313 = vand.u32 %v109, 4294901760
    %2314 = vmatpush.msra.mxu0 %v2313
    %v2315 = vand.u32 %v69, 4294901760
    %v2316 = vsub.f32 %v69, %v2315
    %v2317 = vand.u32 %v2316, 4294901760
    %2318 = vmatmul.f32.gmra.mxu0 %v2317
    %v2319 = vpop.f32.mrf.mxu0
    %v2320 = vadd.f32 %v2276, %v2319
    %v2321 = vand.u32 %v73, 4294901760
    %v2322 = vsub.f32 %v73, %v2321
    %v2323 = vand.u32 %v2322, 4294901760
    %2324 = vmatmul.f32.gmra.mxu0 %v2323
    %v2325 = vpop.f32.mrf.mxu0
    %v2326 = vadd.f32 %v2281, %v2325
    %2327 = vdwg.mxu0
    %v2328 = vand.u32 %v139, 4294901760
    %v2329 = vsub.f32 %v139, %v2328
    %v2330 = vand.u32 %v2329, 4294901760
    %2331 = vmatpush.msra.mxu0 %v2330
    %v2332 = vand.u32 %v137, 4294901760
    %v2333 = vsub.f32 %v137, %v2332
    %v2334 = vand.u32 %v2333, 4294901760
    %2335 = vmatpush.msra.mxu0 %v2334
    %v2336 = vand.u32 %v135, 4294901760
    %v2337 = vsub.f32 %v135, %v2336
    %v2338 = vand.u32 %v2337, 4294901760
    %2339 = vmatpush.msra.mxu0 %v2338
    %v2340 = vand.u32 %v133, 4294901760
    %v2341 = vsub.f32 %v133, %v2340
    %v2342 = vand.u32 %v2341, 4294901760
    %2343 = vmatpush.msra.mxu0 %v2342
    %v2344 = vand.u32 %v131, 4294901760
    %v2345 = vsub.f32 %v131, %v2344
    %v2346 = vand.u32 %v2345, 4294901760
    %2347 = vmatpush.msra.mxu0 %v2346
    %v2348 = vand.u32 %v129, 4294901760
    %v2349 = vsub.f32 %v129, %v2348
    %v2350 = vand.u32 %v2349, 4294901760
    %2351 = vmatpush.msra.mxu0 %v2350
    %v2352 = vand.u32 %v127, 4294901760
    %v2353 = vsub.f32 %v127, %v2352
    %v2354 = vand.u32 %v2353, 4294901760
    %2355 = vmatpush.msra.mxu0 %v2354
    %v2356 = vand.u32 %v125, 4294901760
    %v2357 = vsub.f32 %v125, %v2356
    %v2358 = vand.u32 %v2357, 4294901760
    %2359 = vmatpush.msra.mxu0 %v2358
    %v2360 = vand.u32 %v123, 4294901760
    %v2361 = vsub.f32 %v123, %v2360
    %v2362 = vand.u32 %v2361, 4294901760
    %2363 = vmatpush.msra.mxu0 %v2362
    %v2364 = vand.u32 %v121, 4294901760
    %v2365 = vsub.f32 %v121, %v2364
    %v2366 = vand.u32 %v2365, 4294901760
    %2367 = vmatpush.msra.mxu0 %v2366
    %v2368 = vand.u32 %v119, 4294901760
    %v2369 = vsub.f32 %v119, %v2368
    %v2370 = vand.u32 %v2369, 4294901760
    %2371 = vmatpush.msra.mxu0 %v2370
    %v2372 = vand.u32 %v117, 4294901760
    %v2373 = vsub.f32 %v117, %v2372
    %v2374 = vand.u32 %v2373, 4294901760
    %2375 = vmatpush.msra.mxu0 %v2374
    %v2376 = vand.u32 %v115, 4294901760
    %v2377 = vsub.f32 %v115, %v2376
    %v2378 = vand.u32 %v2377, 4294901760
    %2379 = vmatpush.msra.mxu0 %v2378
    %v2380 = vand.u32 %v113, 4294901760
    %v2381 = vsub.f32 %v113, %v2380
    %v2382 = vand.u32 %v2381, 4294901760
    %2383 = vmatpush.msra.mxu0 %v2382
    %v2384 = vand.u32 %v111, 4294901760
    %v2385 = vsub.f32 %v111, %v2384
    %v2386 = vand.u32 %v2385, 4294901760
    %2387 = vmatpush.msra.mxu0 %v2386
    %v2388 = vand.u32 %v109, 4294901760
    %v2389 = vsub.f32 %v109, %v2388
    %v2390 = vand.u32 %v2389, 4294901760
    %2391 = vmatpush.msra.mxu0 %v2390
    %v2392 = vand.u32 %v69, 4294901760
    %2393 = vmatmul.f32.gmra.mxu0 %v2392
    %v2394 = vpop.f32.mrf.mxu0
    %v2395 = vadd.f32 %v2320, %v2394
    %v2396 = vand.u32 %v73, 4294901760
    %2397 = vmatmul.f32.gmra.mxu0 %v2396
    %v2398 = vpop.f32.mrf.mxu0
    %v2399 = vadd.f32 %v2326, %v2398
    %2400 = vdwg.mxu0
    %v2401 = vand.u32 %v139, 4294901760
    %2402 = vmatpush.msra.mxu0 %v2401
    %v2403 = vand.u32 %v137, 4294901760
    %2404 = vmatpush.msra.mxu0 %v2403
    %v2405 = vand.u32 %v135, 4294901760
    %2406 = vmatpush.msra.mxu0 %v2405
    %v2407 = vand.u32 %v133, 4294901760
    %2408 = vmatpush.msra.mxu0 %v2407
    %v2409 = vand.u32 %v131, 4294901760
    %2410 = vmatpush.msra.mxu0 %v2409
    %v2411 = vand.u32 %v129, 4294901760
    %2412 = vmatpush.msra.mxu0 %v2411
    %v2413 = vand.u32 %v127, 4294901760
    %2414 = vmatpush.msra.mxu0 %v2413
    %v2415 = vand.u32 %v125, 4294901760
    %2416 = vmatpush.msra.mxu0 %v2415
    %v2417 = vand.u32 %v123, 4294901760
    %2418 = vmatpush.msra.mxu0 %v2417
    %v2419 = vand.u32 %v121, 4294901760
    %2420 = vmatpush.msra.mxu0 %v2419
    %v2421 = vand.u32 %v119, 4294901760
    %2422 = vmatpush.msra.mxu0 %v2421
    %v2423 = vand.u32 %v117, 4294901760
    %2424 = vmatpush.msra.mxu0 %v2423
    %v2425 = vand.u32 %v115, 4294901760
    %2426 = vmatpush.msra.mxu0 %v2425
    %v2427 = vand.u32 %v113, 4294901760
    %2428 = vmatpush.msra.mxu0 %v2427
    %v2429 = vand.u32 %v111, 4294901760
    %2430 = vmatpush.msra.mxu0 %v2429
    %v2431 = vand.u32 %v109, 4294901760
    %2432 = vmatpush.msra.mxu0 %v2431
    %v2433 = vand.u32 %v69, 4294901760
    %2434 = vmatmul.f32.gmra.mxu0 %v2433
    %v2435 = vpop.f32.mrf.mxu0
    %v2436 = vadd.f32 %v2395, %v2435
    %v2437 = vand.u32 %v73, 4294901760
    %2438 = vmatmul.f32.gmra.mxu0 %v2437
    %v2439 = vpop.f32.mrf.mxu0
    %v2440 = vadd.f32 %v2399, %v2439
    %2441 = vdwg.mxu0
    %v2442 = vand.u32 %v171, 4294901760
    %2443 = vmatpush.msra.mxu0 %v2442
    %v2444 = vand.u32 %v169, 4294901760
    %2445 = vmatpush.msra.mxu0 %v2444
    %v2446 = vand.u32 %v167, 4294901760
    %2447 = vmatpush.msra.mxu0 %v2446
    %v2448 = vand.u32 %v165, 4294901760
    %2449 = vmatpush.msra.mxu0 %v2448
    %v2450 = vand.u32 %v163, 4294901760
    %2451 = vmatpush.msra.mxu0 %v2450
    %v2452 = vand.u32 %v161, 4294901760
    %2453 = vmatpush.msra.mxu0 %v2452
    %v2454 = vand.u32 %v159, 4294901760
    %2455 = vmatpush.msra.mxu0 %v2454
    %v2456 = vand.u32 %v157, 4294901760
    %2457 = vmatpush.msra.mxu0 %v2456
    %v2458 = vand.u32 %v155, 4294901760
    %2459 = vmatpush.msra.mxu0 %v2458
    %v2460 = vand.u32 %v153, 4294901760
    %2461 = vmatpush.msra.mxu0 %v2460
    %v2462 = vand.u32 %v151, 4294901760
    %2463 = vmatpush.msra.mxu0 %v2462
    %v2464 = vand.u32 %v149, 4294901760
    %2465 = vmatpush.msra.mxu0 %v2464
    %v2466 = vand.u32 %v147, 4294901760
    %2467 = vmatpush.msra.mxu0 %v2466
    %v2468 = vand.u32 %v145, 4294901760
    %2469 = vmatpush.msra.mxu0 %v2468
    %v2470 = vand.u32 %v143, 4294901760
    %2471 = vmatpush.msra.mxu0 %v2470
    %v2472 = vand.u32 %v141, 4294901760
    %2473 = vmatpush.msra.mxu0 %v2472
    %v2474 = vand.u32 %v70, 4294901760
    %v2475 = vsub.f32 %v70, %v2474
    %v2476 = vand.u32 %v2475, 4294901760
    %v2477 = vsub.f32 %v2475, %v2476
    %v2478 = vand.u32 %v2477, 4294901760
    %2479 = vmatmul.f32.gmra.mxu0 %v2478
    %v2480 = vpop.f32.mrf.mxu0
    %v2481 = vadd.f32 %v2436, %v2480
    %v2482 = vand.u32 %v74, 4294901760
    %v2483 = vsub.f32 %v74, %v2482
    %v2484 = vand.u32 %v2483, 4294901760
    %v2485 = vsub.f32 %v2483, %v2484
    %v2486 = vand.u32 %v2485, 4294901760
    %2487 = vmatmul.f32.gmra.mxu0 %v2486
    %v2488 = vpop.f32.mrf.mxu0
    %v2489 = vadd.f32 %v2440, %v2488
    %2490 = vdwg.mxu0
    %v2491 = vand.u32 %v171, 4294901760
    %v2492 = vsub.f32 %v171, %v2491
    %v2493 = vand.u32 %v2492, 4294901760
    %v2494 = vsub.f32 %v2492, %v2493
    %v2495 = vand.u32 %v2494, 4294901760
    %2496 = vmatpush.msra.mxu0 %v2495
    %v2497 = vand.u32 %v169, 4294901760
    %v2498 = vsub.f32 %v169, %v2497
    %v2499 = vand.u32 %v2498, 4294901760
    %v2500 = vsub.f32 %v2498, %v2499
    %v2501 = vand.u32 %v2500, 4294901760
    %2502 = vmatpush.msra.mxu0 %v2501
    %v2503 = vand.u32 %v167, 4294901760
    %v2504 = vsub.f32 %v167, %v2503
    %v2505 = vand.u32 %v2504, 4294901760
    %v2506 = vsub.f32 %v2504, %v2505
    %v2507 = vand.u32 %v2506, 4294901760
    %2508 = vmatpush.msra.mxu0 %v2507
    %v2509 = vand.u32 %v165, 4294901760
    %v2510 = vsub.f32 %v165, %v2509
    %v2511 = vand.u32 %v2510, 4294901760
    %v2512 = vsub.f32 %v2510, %v2511
    %v2513 = vand.u32 %v2512, 4294901760
    %2514 = vmatpush.msra.mxu0 %v2513
    %v2515 = vand.u32 %v163, 4294901760
    %v2516 = vsub.f32 %v163, %v2515
    %v2517 = vand.u32 %v2516, 4294901760
    %v2518 = vsub.f32 %v2516, %v2517
    %v2519 = vand.u32 %v2518, 4294901760
    %2520 = vmatpush.msra.mxu0 %v2519
    %v2521 = vand.u32 %v161, 4294901760
    %v2522 = vsub.f32 %v161, %v2521
    %v2523 = vand.u32 %v2522, 4294901760
    %v2524 = vsub.f32 %v2522, %v2523
    %v2525 = vand.u32 %v2524, 4294901760
    %2526 = vmatpush.msra.mxu0 %v2525
    %v2527 = vand.u32 %v159, 4294901760
    %v2528 = vsub.f32 %v159, %v2527
    %v2529 = vand.u32 %v2528, 4294901760
    %v2530 = vsub.f32 %v2528, %v2529
    %v2531 = vand.u32 %v2530, 4294901760
    %2532 = vmatpush.msra.mxu0 %v2531
    %v2533 = vand.u32 %v157, 4294901760
    %v2534 = vsub.f32 %v157, %v2533
    %v2535 = vand.u32 %v2534, 4294901760
    %v2536 = vsub.f32 %v2534, %v2535
    %v2537 = vand.u32 %v2536, 4294901760
    %2538 = vmatpush.msra.mxu0 %v2537
    %v2539 = vand.u32 %v155, 4294901760
    %v2540 = vsub.f32 %v155, %v2539
    %v2541 = vand.u32 %v2540, 4294901760
    %v2542 = vsub.f32 %v2540, %v2541
    %v2543 = vand.u32 %v2542, 4294901760
    %2544 = vmatpush.msra.mxu0 %v2543
    %v2545 = vand.u32 %v153, 4294901760
    %v2546 = vsub.f32 %v153, %v2545
    %v2547 = vand.u32 %v2546, 4294901760
    %v2548 = vsub.f32 %v2546, %v2547
    %v2549 = vand.u32 %v2548, 4294901760
    %2550 = vmatpush.msra.mxu0 %v2549
    %v2551 = vand.u32 %v151, 4294901760
    %v2552 = vsub.f32 %v151, %v2551
    %v2553 = vand.u32 %v2552, 4294901760
    %v2554 = vsub.f32 %v2552, %v2553
    %v2555 = vand.u32 %v2554, 4294901760
    %2556 = vmatpush.msra.mxu0 %v2555
    %v2557 = vand.u32 %v149, 4294901760
    %v2558 = vsub.f32 %v149, %v2557
    %v2559 = vand.u32 %v2558, 4294901760
    %v2560 = vsub.f32 %v2558, %v2559
    %v2561 = vand.u32 %v2560, 4294901760
    %2562 = vmatpush.msra.mxu0 %v2561
    %v2563 = vand.u32 %v147, 4294901760
    %v2564 = vsub.f32 %v147, %v2563
    %v2565 = vand.u32 %v2564, 4294901760
    %v2566 = vsub.f32 %v2564, %v2565
    %v2567 = vand.u32 %v2566, 4294901760
    %2568 = vmatpush.msra.mxu0 %v2567
    %v2569 = vand.u32 %v145, 4294901760
    %v2570 = vsub.f32 %v145, %v2569
    %v2571 = vand.u32 %v2570, 4294901760
    %v2572 = vsub.f32 %v2570, %v2571
    %v2573 = vand.u32 %v2572, 4294901760
    %2574 = vmatpush.msra.mxu0 %v2573
    %v2575 = vand.u32 %v143, 4294901760
    %v2576 = vsub.f32 %v143, %v2575
    %v2577 = vand.u32 %v2576, 4294901760
    %v2578 = vsub.f32 %v2576, %v2577
    %v2579 = vand.u32 %v2578, 4294901760
    %2580 = vmatpush.msra.mxu0 %v2579
    %v2581 = vand.u32 %v141, 4294901760
    %v2582 = vsub.f32 %v141, %v2581
    %v2583 = vand.u32 %v2582, 4294901760
    %v2584 = vsub.f32 %v2582, %v2583
    %v2585 = vand.u32 %v2584, 4294901760
    %2586 = vmatpush.msra.mxu0 %v2585
    %v2587 = vand.u32 %v70, 4294901760
    %2588 = vmatmul.f32.gmra.mxu0 %v2587
    %v2589 = vpop.f32.mrf.mxu0
    %v2590 = vadd.f32 %v2481, %v2589
    %v2591 = vand.u32 %v74, 4294901760
    %2592 = vmatmul.f32.gmra.mxu0 %v2591
    %v2593 = vpop.f32.mrf.mxu0
    %v2594 = vadd.f32 %v2489, %v2593
    %2595 = vdwg.mxu0
    %v2596 = vand.u32 %v171, 4294901760
    %v2597 = vsub.f32 %v171, %v2596
    %2598 = vmatpush.msra.mxu0 %v2597
    %v2599 = vand.u32 %v169, 4294901760
    %v2600 = vsub.f32 %v169, %v2599
    %2601 = vmatpush.msra.mxu0 %v2600
    %v2602 = vand.u32 %v167, 4294901760
    %v2603 = vsub.f32 %v167, %v2602
    %2604 = vmatpush.msra.mxu0 %v2603
    %v2605 = vand.u32 %v165, 4294901760
    %v2606 = vsub.f32 %v165, %v2605
    %2607 = vmatpush.msra.mxu0 %v2606
    %v2608 = vand.u32 %v163, 4294901760
    %v2609 = vsub.f32 %v163, %v2608
    %2610 = vmatpush.msra.mxu0 %v2609
    %v2611 = vand.u32 %v161, 4294901760
    %v2612 = vsub.f32 %v161, %v2611
    %2613 = vmatpush.msra.mxu0 %v2612
    %v2614 = vand.u32 %v159, 4294901760
    %v2615 = vsub.f32 %v159, %v2614
    %2616 = vmatpush.msra.mxu0 %v2615
    %v2617 = vand.u32 %v157, 4294901760
    %v2618 = vsub.f32 %v157, %v2617
    %2619 = vmatpush.msra.mxu0 %v2618
    %v2620 = vand.u32 %v155, 4294901760
    %v2621 = vsub.f32 %v155, %v2620
    %2622 = vmatpush.msra.mxu0 %v2621
    %v2623 = vand.u32 %v153, 4294901760
    %v2624 = vsub.f32 %v153, %v2623
    %2625 = vmatpush.msra.mxu0 %v2624
    %v2626 = vand.u32 %v151, 4294901760
    %v2627 = vsub.f32 %v151, %v2626
    %2628 = vmatpush.msra.mxu0 %v2627
    %v2629 = vand.u32 %v149, 4294901760
    %v2630 = vsub.f32 %v149, %v2629
    %2631 = vmatpush.msra.mxu0 %v2630
    %v2632 = vand.u32 %v147, 4294901760
    %v2633 = vsub.f32 %v147, %v2632
    %2634 = vmatpush.msra.mxu0 %v2633
    %v2635 = vand.u32 %v145, 4294901760
    %v2636 = vsub.f32 %v145, %v2635
    %2637 = vmatpush.msra.mxu0 %v2636
    %v2638 = vand.u32 %v143, 4294901760
    %v2639 = vsub.f32 %v143, %v2638
    %2640 = vmatpush.msra.mxu0 %v2639
    %v2641 = vand.u32 %v141, 4294901760
    %v2642 = vsub.f32 %v141, %v2641
    %2643 = vmatpush.msra.mxu0 %v2642
    %v2644 = vand.u32 %v70, 4294901760
    %v2645 = vsub.f32 %v70, %v2644
    %2646 = vmatmul.f32.gmra.mxu0 %v2645
    %v2647 = vpop.f32.mrf.mxu0
    %v2648 = vadd.f32 %v2590, %v2647
    %v2649 = vand.u32 %v74, 4294901760
    %v2650 = vsub.f32 %v74, %v2649
    %2651 = vmatmul.f32.gmra.mxu0 %v2650
    %v2652 = vpop.f32.mrf.mxu0
    %v2653 = vadd.f32 %v2594, %v2652
    %2654 = vdwg.mxu0
    %v2655 = vand.u32 %v171, 4294901760
    %2656 = vmatpush.msra.mxu0 %v2655
    %v2657 = vand.u32 %v169, 4294901760
    %2658 = vmatpush.msra.mxu0 %v2657
    %v2659 = vand.u32 %v167, 4294901760
    %2660 = vmatpush.msra.mxu0 %v2659
    %v2661 = vand.u32 %v165, 4294901760
    %2662 = vmatpush.msra.mxu0 %v2661
    %v2663 = vand.u32 %v163, 4294901760
    %2664 = vmatpush.msra.mxu0 %v2663
    %v2665 = vand.u32 %v161, 4294901760
    %2666 = vmatpush.msra.mxu0 %v2665
    %v2667 = vand.u32 %v159, 4294901760
    %2668 = vmatpush.msra.mxu0 %v2667
    %v2669 = vand.u32 %v157, 4294901760
    %2670 = vmatpush.msra.mxu0 %v2669
    %v2671 = vand.u32 %v155, 4294901760
    %2672 = vmatpush.msra.mxu0 %v2671
    %v2673 = vand.u32 %v153, 4294901760
    %2674 = vmatpush.msra.mxu0 %v2673
    %v2675 = vand.u32 %v151, 4294901760
    %2676 = vmatpush.msra.mxu0 %v2675
    %v2677 = vand.u32 %v149, 4294901760
    %2678 = vmatpush.msra.mxu0 %v2677
    %v2679 = vand.u32 %v147, 4294901760
    %2680 = vmatpush.msra.mxu0 %v2679
    %v2681 = vand.u32 %v145, 4294901760
    %2682 = vmatpush.msra.mxu0 %v2681
    %v2683 = vand.u32 %v143, 4294901760
    %2684 = vmatpush.msra.mxu0 %v2683
    %v2685 = vand.u32 %v141, 4294901760
    %2686 = vmatpush.msra.mxu0 %v2685
    %v2687 = vand.u32 %v70, 4294901760
    %v2688 = vsub.f32 %v70, %v2687
    %v2689 = vand.u32 %v2688, 4294901760
    %2690 = vmatmul.f32.gmra.mxu0 %v2689
    %v2691 = vpop.f32.mrf.mxu0
    %v2692 = vadd.f32 %v2648, %v2691
    %v2693 = vand.u32 %v74, 4294901760
    %v2694 = vsub.f32 %v74, %v2693
    %v2695 = vand.u32 %v2694, 4294901760
    %2696 = vmatmul.f32.gmra.mxu0 %v2695
    %v2697 = vpop.f32.mrf.mxu0
    %v2698 = vadd.f32 %v2653, %v2697
    %2699 = vdwg.mxu0
    %v2700 = vand.u32 %v171, 4294901760
    %v2701 = vsub.f32 %v171, %v2700
    %v2702 = vand.u32 %v2701, 4294901760
    %2703 = vmatpush.msra.mxu0 %v2702
    %v2704 = vand.u32 %v169, 4294901760
    %v2705 = vsub.f32 %v169, %v2704
    %v2706 = vand.u32 %v2705, 4294901760
    %2707 = vmatpush.msra.mxu0 %v2706
    %v2708 = vand.u32 %v167, 4294901760
    %v2709 = vsub.f32 %v167, %v2708
    %v2710 = vand.u32 %v2709, 4294901760
    %2711 = vmatpush.msra.mxu0 %v2710
    %v2712 = vand.u32 %v165, 4294901760
    %v2713 = vsub.f32 %v165, %v2712
    %v2714 = vand.u32 %v2713, 4294901760
    %2715 = vmatpush.msra.mxu0 %v2714
    %v2716 = vand.u32 %v163, 4294901760
    %v2717 = vsub.f32 %v163, %v2716
    %v2718 = vand.u32 %v2717, 4294901760
    %2719 = vmatpush.msra.mxu0 %v2718
    %v2720 = vand.u32 %v161, 4294901760
    %v2721 = vsub.f32 %v161, %v2720
    %v2722 = vand.u32 %v2721, 4294901760
    %2723 = vmatpush.msra.mxu0 %v2722
    %v2724 = vand.u32 %v159, 4294901760
    %v2725 = vsub.f32 %v159, %v2724
    %v2726 = vand.u32 %v2725, 4294901760
    %2727 = vmatpush.msra.mxu0 %v2726
    %v2728 = vand.u32 %v157, 4294901760
    %v2729 = vsub.f32 %v157, %v2728
    %v2730 = vand.u32 %v2729, 4294901760
    %2731 = vmatpush.msra.mxu0 %v2730
    %v2732 = vand.u32 %v155, 4294901760
    %v2733 = vsub.f32 %v155, %v2732
    %v2734 = vand.u32 %v2733, 4294901760
    %2735 = vmatpush.msra.mxu0 %v2734
    %v2736 = vand.u32 %v153, 4294901760
    %v2737 = vsub.f32 %v153, %v2736
    %v2738 = vand.u32 %v2737, 4294901760
    %2739 = vmatpush.msra.mxu0 %v2738
    %v2740 = vand.u32 %v151, 4294901760
    %v2741 = vsub.f32 %v151, %v2740
    %v2742 = vand.u32 %v2741, 4294901760
    %2743 = vmatpush.msra.mxu0 %v2742
    %v2744 = vand.u32 %v149, 4294901760
    %v2745 = vsub.f32 %v149, %v2744
    %v2746 = vand.u32 %v2745, 4294901760
    %2747 = vmatpush.msra.mxu0 %v2746
    %v2748 = vand.u32 %v147, 4294901760
    %v2749 = vsub.f32 %v147, %v2748
    %v2750 = vand.u32 %v2749, 4294901760
    %2751 = vmatpush.msra.mxu0 %v2750
    %v2752 = vand.u32 %v145, 4294901760
    %v2753 = vsub.f32 %v145, %v2752
    %v2754 = vand.u32 %v2753, 4294901760
    %2755 = vmatpush.msra.mxu0 %v2754
    %v2756 = vand.u32 %v143, 4294901760
    %v2757 = vsub.f32 %v143, %v2756
    %v2758 = vand.u32 %v2757, 4294901760
    %2759 = vmatpush.msra.mxu0 %v2758
    %v2760 = vand.u32 %v141, 4294901760
    %v2761 = vsub.f32 %v141, %v2760
    %v2762 = vand.u32 %v2761, 4294901760
    %2763 = vmatpush.msra.mxu0 %v2762
    %v2764 = vand.u32 %v70, 4294901760
    %2765 = vmatmul.f32.gmra.mxu0 %v2764
    %v2766 = vpop.f32.mrf.mxu0
    %v2767 = vadd.f32 %v2692, %v2766
    %v2768 = vand.u32 %v74, 4294901760
    %2769 = vmatmul.f32.gmra.mxu0 %v2768
    %v2770 = vpop.f32.mrf.mxu0
    %v2771 = vadd.f32 %v2698, %v2770
    %2772 = vdwg.mxu0
    %v2773 = vand.u32 %v171, 4294901760
    %2774 = vmatpush.msra.mxu0 %v2773
    %v2775 = vand.u32 %v169, 4294901760
    %2776 = vmatpush.msra.mxu0 %v2775
    %v2777 = vand.u32 %v167, 4294901760
    %2778 = vmatpush.msra.mxu0 %v2777
    %v2779 = vand.u32 %v165, 4294901760
    %2780 = vmatpush.msra.mxu0 %v2779
    %v2781 = vand.u32 %v163, 4294901760
    %2782 = vmatpush.msra.mxu0 %v2781
    %v2783 = vand.u32 %v161, 4294901760
    %2784 = vmatpush.msra.mxu0 %v2783
    %v2785 = vand.u32 %v159, 4294901760
    %2786 = vmatpush.msra.mxu0 %v2785
    %v2787 = vand.u32 %v157, 4294901760
    %2788 = vmatpush.msra.mxu0 %v2787
    %v2789 = vand.u32 %v155, 4294901760
    %2790 = vmatpush.msra.mxu0 %v2789
    %v2791 = vand.u32 %v153, 4294901760
    %2792 = vmatpush.msra.mxu0 %v2791
    %v2793 = vand.u32 %v151, 4294901760
    %2794 = vmatpush.msra.mxu0 %v2793
    %v2795 = vand.u32 %v149, 4294901760
    %2796 = vmatpush.msra.mxu0 %v2795
    %v2797 = vand.u32 %v147, 4294901760
    %2798 = vmatpush.msra.mxu0 %v2797
    %v2799 = vand.u32 %v145, 4294901760
    %2800 = vmatpush.msra.mxu0 %v2799
    %v2801 = vand.u32 %v143, 4294901760
    %2802 = vmatpush.msra.mxu0 %v2801
    %v2803 = vand.u32 %v141, 4294901760
    %2804 = vmatpush.msra.mxu0 %v2803
    %v2805 = vand.u32 %v70, 4294901760
    %2806 = vmatmul.f32.gmra.mxu0 %v2805
    %v2807 = vpop.f32.mrf.mxu0
    %v2808 = vadd.f32 %v2767, %v2807
    %v2809 = vand.u32 %v74, 4294901760
    %2810 = vmatmul.f32.gmra.mxu0 %v2809
    %v2811 = vpop.f32.mrf.mxu0
    %v2812 = vadd.f32 %v2771, %v2811
    %2813 = vdwg.mxu0
    %v2814 = vand.u32 %v203, 4294901760
    %2815 = vmatpush.msra.mxu0 %v2814
    %v2816 = vand.u32 %v201, 4294901760
    %2817 = vmatpush.msra.mxu0 %v2816
    %v2818 = vand.u32 %v199, 4294901760
    %2819 = vmatpush.msra.mxu0 %v2818
    %v2820 = vand.u32 %v197, 4294901760
    %2821 = vmatpush.msra.mxu0 %v2820
    %v2822 = vand.u32 %v195, 4294901760
    %2823 = vmatpush.msra.mxu0 %v2822
    %v2824 = vand.u32 %v193, 4294901760
    %2825 = vmatpush.msra.mxu0 %v2824
    %v2826 = vand.u32 %v191, 4294901760
    %2827 = vmatpush.msra.mxu0 %v2826
    %v2828 = vand.u32 %v189, 4294901760
    %2829 = vmatpush.msra.mxu0 %v2828
    %v2830 = vand.u32 %v187, 4294901760
    %2831 = vmatpush.msra.mxu0 %v2830
    %v2832 = vand.u32 %v185, 4294901760
    %2833 = vmatpush.msra.mxu0 %v2832
    %v2834 = vand.u32 %v183, 4294901760
    %2835 = vmatpush.msra.mxu0 %v2834
    %v2836 = vand.u32 %v181, 4294901760
    %2837 = vmatpush.msra.mxu0 %v2836
    %v2838 = vand.u32 %v179, 4294901760
    %2839 = vmatpush.msra.mxu0 %v2838
    %v2840 = vand.u32 %v177, 4294901760
    %2841 = vmatpush.msra.mxu0 %v2840
    %v2842 = vand.u32 %v175, 4294901760
    %2843 = vmatpush.msra.mxu0 %v2842
    %v2844 = vand.u32 %v173, 4294901760
    %2845 = vmatpush.msra.mxu0 %v2844
    %v2846 = vand.u32 %v71, 4294901760
    %v2847 = vsub.f32 %v71, %v2846
    %v2848 = vand.u32 %v2847, 4294901760
    %v2849 = vsub.f32 %v2847, %v2848
    %v2850 = vand.u32 %v2849, 4294901760
    %2851 = vmatmul.f32.gmra.mxu0 %v2850
    %v2852 = vpop.f32.mrf.mxu0
    %v2853 = vadd.f32 %v2808, %v2852
    %v2854 = vand.u32 %v75, 4294901760
    %v2855 = vsub.f32 %v75, %v2854
    %v2856 = vand.u32 %v2855, 4294901760
    %v2857 = vsub.f32 %v2855, %v2856
    %v2858 = vand.u32 %v2857, 4294901760
    %2859 = vmatmul.f32.gmra.mxu0 %v2858
    %v2860 = vpop.f32.mrf.mxu0
    %v2861 = vadd.f32 %v2812, %v2860
    %2862 = vdwg.mxu0
    %v2863 = vand.u32 %v203, 4294901760
    %v2864 = vsub.f32 %v203, %v2863
    %v2865 = vand.u32 %v2864, 4294901760
    %v2866 = vsub.f32 %v2864, %v2865
    %v2867 = vand.u32 %v2866, 4294901760
    %2868 = vmatpush.msra.mxu0 %v2867
    %v2869 = vand.u32 %v201, 4294901760
    %v2870 = vsub.f32 %v201, %v2869
    %v2871 = vand.u32 %v2870, 4294901760
    %v2872 = vsub.f32 %v2870, %v2871
    %v2873 = vand.u32 %v2872, 4294901760
    %2874 = vmatpush.msra.mxu0 %v2873
    %v2875 = vand.u32 %v199, 4294901760
    %v2876 = vsub.f32 %v199, %v2875
    %v2877 = vand.u32 %v2876, 4294901760
    %v2878 = vsub.f32 %v2876, %v2877
    %v2879 = vand.u32 %v2878, 4294901760
    %2880 = vmatpush.msra.mxu0 %v2879
    %v2881 = vand.u32 %v197, 4294901760
    %v2882 = vsub.f32 %v197, %v2881
    %v2883 = vand.u32 %v2882, 4294901760
    %v2884 = vsub.f32 %v2882, %v2883
    %v2885 = vand.u32 %v2884, 4294901760
    %2886 = vmatpush.msra.mxu0 %v2885
    %v2887 = vand.u32 %v195, 4294901760
    %v2888 = vsub.f32 %v195, %v2887
    %v2889 = vand.u32 %v2888, 4294901760
    %v2890 = vsub.f32 %v2888, %v2889
    %v2891 = vand.u32 %v2890, 4294901760
    %2892 = vmatpush.msra.mxu0 %v2891
    %v2893 = vand.u32 %v193, 4294901760
    %v2894 = vsub.f32 %v193, %v2893
    %v2895 = vand.u32 %v2894, 4294901760
    %v2896 = vsub.f32 %v2894, %v2895
    %v2897 = vand.u32 %v2896, 4294901760
    %2898 = vmatpush.msra.mxu0 %v2897
    %v2899 = vand.u32 %v191, 4294901760
    %v2900 = vsub.f32 %v191, %v2899
    %v2901 = vand.u32 %v2900, 4294901760
    %v2902 = vsub.f32 %v2900, %v2901
    %v2903 = vand.u32 %v2902, 4294901760
    %2904 = vmatpush.msra.mxu0 %v2903
    %v2905 = vand.u32 %v189, 4294901760
    %v2906 = vsub.f32 %v189, %v2905
    %v2907 = vand.u32 %v2906, 4294901760
    %v2908 = vsub.f32 %v2906, %v2907
    %v2909 = vand.u32 %v2908, 4294901760
    %2910 = vmatpush.msra.mxu0 %v2909
    %v2911 = vand.u32 %v187, 4294901760
    %v2912 = vsub.f32 %v187, %v2911
    %v2913 = vand.u32 %v2912, 4294901760
    %v2914 = vsub.f32 %v2912, %v2913
    %v2915 = vand.u32 %v2914, 4294901760
    %2916 = vmatpush.msra.mxu0 %v2915
    %v2917 = vand.u32 %v185, 4294901760
    %v2918 = vsub.f32 %v185, %v2917
    %v2919 = vand.u32 %v2918, 4294901760
    %v2920 = vsub.f32 %v2918, %v2919
    %v2921 = vand.u32 %v2920, 4294901760
    %2922 = vmatpush.msra.mxu0 %v2921
    %v2923 = vand.u32 %v183, 4294901760
    %v2924 = vsub.f32 %v183, %v2923
    %v2925 = vand.u32 %v2924, 4294901760
    %v2926 = vsub.f32 %v2924, %v2925
    %v2927 = vand.u32 %v2926, 4294901760
    %2928 = vmatpush.msra.mxu0 %v2927
    %v2929 = vand.u32 %v181, 4294901760
    %v2930 = vsub.f32 %v181, %v2929
    %v2931 = vand.u32 %v2930, 4294901760
    %v2932 = vsub.f32 %v2930, %v2931
    %v2933 = vand.u32 %v2932, 4294901760
    %2934 = vmatpush.msra.mxu0 %v2933
    %v2935 = vand.u32 %v179, 4294901760
    %v2936 = vsub.f32 %v179, %v2935
    %v2937 = vand.u32 %v2936, 4294901760
    %v2938 = vsub.f32 %v2936, %v2937
    %v2939 = vand.u32 %v2938, 4294901760
    %2940 = vmatpush.msra.mxu0 %v2939
    %v2941 = vand.u32 %v177, 4294901760
    %v2942 = vsub.f32 %v177, %v2941
    %v2943 = vand.u32 %v2942, 4294901760
    %v2944 = vsub.f32 %v2942, %v2943
    %v2945 = vand.u32 %v2944, 4294901760
    %2946 = vmatpush.msra.mxu0 %v2945
    %v2947 = vand.u32 %v175, 4294901760
    %v2948 = vsub.f32 %v175, %v2947
    %v2949 = vand.u32 %v2948, 4294901760
    %v2950 = vsub.f32 %v2948, %v2949
    %v2951 = vand.u32 %v2950, 4294901760
    %2952 = vmatpush.msra.mxu0 %v2951
    %v2953 = vand.u32 %v173, 4294901760
    %v2954 = vsub.f32 %v173, %v2953
    %v2955 = vand.u32 %v2954, 4294901760
    %v2956 = vsub.f32 %v2954, %v2955
    %v2957 = vand.u32 %v2956, 4294901760
    %2958 = vmatpush.msra.mxu0 %v2957
    %v2959 = vand.u32 %v71, 4294901760
    %2960 = vmatmul.f32.gmra.mxu0 %v2959
    %v2961 = vpop.f32.mrf.mxu0
    %v2962 = vadd.f32 %v2853, %v2961
    %v2963 = vand.u32 %v75, 4294901760
    %2964 = vmatmul.f32.gmra.mxu0 %v2963
    %v2965 = vpop.f32.mrf.mxu0
    %v2966 = vadd.f32 %v2861, %v2965
    %2967 = vdwg.mxu0
    %v2968 = vand.u32 %v203, 4294901760
    %v2969 = vsub.f32 %v203, %v2968
    %2970 = vmatpush.msra.mxu0 %v2969
    %v2971 = vand.u32 %v201, 4294901760
    %v2972 = vsub.f32 %v201, %v2971
    %2973 = vmatpush.msra.mxu0 %v2972
    %v2974 = vand.u32 %v199, 4294901760
    %v2975 = vsub.f32 %v199, %v2974
    %2976 = vmatpush.msra.mxu0 %v2975
    %v2977 = vand.u32 %v197, 4294901760
    %v2978 = vsub.f32 %v197, %v2977
    %2979 = vmatpush.msra.mxu0 %v2978
    %v2980 = vand.u32 %v195, 4294901760
    %v2981 = vsub.f32 %v195, %v2980
    %2982 = vmatpush.msra.mxu0 %v2981
    %v2983 = vand.u32 %v193, 4294901760
    %v2984 = vsub.f32 %v193, %v2983
    %2985 = vmatpush.msra.mxu0 %v2984
    %v2986 = vand.u32 %v191, 4294901760
    %v2987 = vsub.f32 %v191, %v2986
    %2988 = vmatpush.msra.mxu0 %v2987
    %v2989 = vand.u32 %v189, 4294901760
    %v2990 = vsub.f32 %v189, %v2989
    %2991 = vmatpush.msra.mxu0 %v2990
    %v2992 = vand.u32 %v187, 4294901760
    %v2993 = vsub.f32 %v187, %v2992
    %2994 = vmatpush.msra.mxu0 %v2993
    %v2995 = vand.u32 %v185, 4294901760
    %v2996 = vsub.f32 %v185, %v2995
    %2997 = vmatpush.msra.mxu0 %v2996
    %v2998 = vand.u32 %v183, 4294901760
    %v2999 = vsub.f32 %v183, %v2998
    %3000 = vmatpush.msra.mxu0 %v2999
    %v3001 = vand.u32 %v181, 4294901760
    %v3002 = vsub.f32 %v181, %v3001
    %3003 = vmatpush.msra.mxu0 %v3002
    %v3004 = vand.u32 %v179, 4294901760
    %v3005 = vsub.f32 %v179, %v3004
    %3006 = vmatpush.msra.mxu0 %v3005
    %v3007 = vand.u32 %v177, 4294901760
    %v3008 = vsub.f32 %v177, %v3007
    %3009 = vmatpush.msra.mxu0 %v3008
    %v3010 = vand.u32 %v175, 4294901760
    %v3011 = vsub.f32 %v175, %v3010
    %3012 = vmatpush.msra.mxu0 %v3011
    %v3013 = vand.u32 %v173, 4294901760
    %v3014 = vsub.f32 %v173, %v3013
    %3015 = vmatpush.msra.mxu0 %v3014
    %v3016 = vand.u32 %v71, 4294901760
    %v3017 = vsub.f32 %v71, %v3016
    %3018 = vmatmul.f32.gmra.mxu0 %v3017
    %v3019 = vpop.f32.mrf.mxu0
    %v3020 = vadd.f32 %v2962, %v3019
    %v3021 = vand.u32 %v75, 4294901760
    %v3022 = vsub.f32 %v75, %v3021
    %3023 = vmatmul.f32.gmra.mxu0 %v3022
    %v3024 = vpop.f32.mrf.mxu0
    %v3025 = vadd.f32 %v2966, %v3024
    %3026 = vdwg.mxu0
    %v3027 = vand.u32 %v203, 4294901760
    %3028 = vmatpush.msra.mxu0 %v3027
    %v3029 = vand.u32 %v201, 4294901760
    %3030 = vmatpush.msra.mxu0 %v3029
    %v3031 = vand.u32 %v199, 4294901760
    %3032 = vmatpush.msra.mxu0 %v3031
    %v3033 = vand.u32 %v197, 4294901760
    %3034 = vmatpush.msra.mxu0 %v3033
    %v3035 = vand.u32 %v195, 4294901760
    %3036 = vmatpush.msra.mxu0 %v3035
    %v3037 = vand.u32 %v193, 4294901760
    %3038 = vmatpush.msra.mxu0 %v3037
    %v3039 = vand.u32 %v191, 4294901760
    %3040 = vmatpush.msra.mxu0 %v3039
    %v3041 = vand.u32 %v189, 4294901760
    %3042 = vmatpush.msra.mxu0 %v3041
    %v3043 = vand.u32 %v187, 4294901760
    %3044 = vmatpush.msra.mxu0 %v3043
    %v3045 = vand.u32 %v185, 4294901760
    %3046 = vmatpush.msra.mxu0 %v3045
    %v3047 = vand.u32 %v183, 4294901760
    %3048 = vmatpush.msra.mxu0 %v3047
    %v3049 = vand.u32 %v181, 4294901760
    %3050 = vmatpush.msra.mxu0 %v3049
    %v3051 = vand.u32 %v179, 4294901760
    %3052 = vmatpush.msra.mxu0 %v3051
    %v3053 = vand.u32 %v177, 4294901760
    %3054 = vmatpush.msra.mxu0 %v3053
    %v3055 = vand.u32 %v175, 4294901760
    %3056 = vmatpush.msra.mxu0 %v3055
    %v3057 = vand.u32 %v173, 4294901760
    %3058 = vmatpush.msra.mxu0 %v3057
    %v3059 = vand.u32 %v71, 4294901760
    %v3060 = vsub.f32 %v71, %v3059
    %v3061 = vand.u32 %v3060, 4294901760
    %3062 = vmatmul.f32.gmra.mxu0 %v3061
    %v3063 = vpop.f32.mrf.mxu0
    %v3064 = vadd.f32 %v3020, %v3063
    %v3065 = vand.u32 %v75, 4294901760
    %v3066 = vsub.f32 %v75, %v3065
    %v3067 = vand.u32 %v3066, 4294901760
    %3068 = vmatmul.f32.gmra.mxu0 %v3067
    %v3069 = vpop.f32.mrf.mxu0
    %v3070 = vadd.f32 %v3025, %v3069
    %3071 = vdwg.mxu0
    %v3072 = vand.u32 %v203, 4294901760
    %v3073 = vsub.f32 %v203, %v3072
    %v3074 = vand.u32 %v3073, 4294901760
    %3075 = vmatpush.msra.mxu0 %v3074
    %v3076 = vand.u32 %v201, 4294901760
    %v3077 = vsub.f32 %v201, %v3076
    %v3078 = vand.u32 %v3077, 4294901760
    %3079 = vmatpush.msra.mxu0 %v3078
    %v3080 = vand.u32 %v199, 4294901760
    %v3081 = vsub.f32 %v199, %v3080
    %v3082 = vand.u32 %v3081, 4294901760
    %3083 = vmatpush.msra.mxu0 %v3082
    %v3084 = vand.u32 %v197, 4294901760
    %v3085 = vsub.f32 %v197, %v3084
    %v3086 = vand.u32 %v3085, 4294901760
    %3087 = vmatpush.msra.mxu0 %v3086
    %v3088 = vand.u32 %v195, 4294901760
    %v3089 = vsub.f32 %v195, %v3088
    %v3090 = vand.u32 %v3089, 4294901760
    %3091 = vmatpush.msra.mxu0 %v3090
    %v3092 = vand.u32 %v193, 4294901760
    %v3093 = vsub.f32 %v193, %v3092
    %v3094 = vand.u32 %v3093, 4294901760
    %3095 = vmatpush.msra.mxu0 %v3094
    %v3096 = vand.u32 %v191, 4294901760
    %v3097 = vsub.f32 %v191, %v3096
    %v3098 = vand.u32 %v3097, 4294901760
    %3099 = vmatpush.msra.mxu0 %v3098
    %v3100 = vand.u32 %v189, 4294901760
    %v3101 = vsub.f32 %v189, %v3100
    %v3102 = vand.u32 %v3101, 4294901760
    %3103 = vmatpush.msra.mxu0 %v3102
    %v3104 = vand.u32 %v187, 4294901760
    %v3105 = vsub.f32 %v187, %v3104
    %v3106 = vand.u32 %v3105, 4294901760
    %3107 = vmatpush.msra.mxu0 %v3106
    %v3108 = vand.u32 %v185, 4294901760
    %v3109 = vsub.f32 %v185, %v3108
    %v3110 = vand.u32 %v3109, 4294901760
    %3111 = vmatpush.msra.mxu0 %v3110
    %v3112 = vand.u32 %v183, 4294901760
    %v3113 = vsub.f32 %v183, %v3112
    %v3114 = vand.u32 %v3113, 4294901760
    %3115 = vmatpush.msra.mxu0 %v3114
    %v3116 = vand.u32 %v181, 4294901760
    %v3117 = vsub.f32 %v181, %v3116
    %v3118 = vand.u32 %v3117, 4294901760
    %3119 = vmatpush.msra.mxu0 %v3118
    %v3120 = vand.u32 %v179, 4294901760
    %v3121 = vsub.f32 %v179, %v3120
    %v3122 = vand.u32 %v3121, 4294901760
    %3123 = vmatpush.msra.mxu0 %v3122
    %v3124 = vand.u32 %v177, 4294901760
    %v3125 = vsub.f32 %v177, %v3124
    %v3126 = vand.u32 %v3125, 4294901760
    %3127 = vmatpush.msra.mxu0 %v3126
    %v3128 = vand.u32 %v175, 4294901760
    %v3129 = vsub.f32 %v175, %v3128
    %v3130 = vand.u32 %v3129, 4294901760
    %3131 = vmatpush.msra.mxu0 %v3130
    %v3132 = vand.u32 %v173, 4294901760
    %v3133 = vsub.f32 %v173, %v3132
    %v3134 = vand.u32 %v3133, 4294901760
    %3135 = vmatpush.msra.mxu0 %v3134
    %v3136 = vand.u32 %v71, 4294901760
    %3137 = vmatmul.f32.gmra.mxu0 %v3136
    %v3138 = vpop.f32.mrf.mxu0
    %v3139 = vadd.f32 %v3064, %v3138
    %v3140 = vand.u32 %v75, 4294901760
    %3141 = vmatmul.f32.gmra.mxu0 %v3140
    %v3142 = vpop.f32.mrf.mxu0
    %v3143 = vadd.f32 %v3070, %v3142
    %3144 = vdwg.mxu0
    %v3145 = vand.u32 %v203, 4294901760
    %3146 = vmatpush.msra.mxu0 %v3145
    %v3147 = vand.u32 %v201, 4294901760
    %3148 = vmatpush.msra.mxu0 %v3147
    %v3149 = vand.u32 %v199, 4294901760
    %3150 = vmatpush.msra.mxu0 %v3149
    %v3151 = vand.u32 %v197, 4294901760
    %3152 = vmatpush.msra.mxu0 %v3151
    %v3153 = vand.u32 %v195, 4294901760
    %3154 = vmatpush.msra.mxu0 %v3153
    %v3155 = vand.u32 %v193, 4294901760
    %3156 = vmatpush.msra.mxu0 %v3155
    %v3157 = vand.u32 %v191, 4294901760
    %3158 = vmatpush.msra.mxu0 %v3157
    %v3159 = vand.u32 %v189, 4294901760
    %3160 = vmatpush.msra.mxu0 %v3159
    %v3161 = vand.u32 %v187, 4294901760
    %3162 = vmatpush.msra.mxu0 %v3161
    %v3163 = vand.u32 %v185, 4294901760
    %3164 = vmatpush.msra.mxu0 %v3163
    %v3165 = vand.u32 %v183, 4294901760
    %3166 = vmatpush.msra.mxu0 %v3165
    %v3167 = vand.u32 %v181, 4294901760
    %3168 = vmatpush.msra.mxu0 %v3167
    %v3169 = vand.u32 %v179, 4294901760
    %3170 = vmatpush.msra.mxu0 %v3169
    %v3171 = vand.u32 %v177, 4294901760
    %3172 = vmatpush.msra.mxu0 %v3171
    %v3173 = vand.u32 %v175, 4294901760
    %3174 = vmatpush.msra.mxu0 %v3173
    %v3175 = vand.u32 %v173, 4294901760
    %3176 = vmatpush.msra.mxu0 %v3175
    %v3177 = vand.u32 %v71, 4294901760
    %3178 = vmatmul.f32.gmra.mxu0 %v3177
    %v3179 = vpop.f32.mrf.mxu0
    %v3180 = vadd.f32 %v3139, %v3179
    %v3181 = vand.u32 %v75, 4294901760
    %3182 = vmatmul.f32.gmra.mxu0 %v3181
    %v3183 = vpop.f32.mrf.mxu0
    %v3184 = vadd.f32 %v3143, %v3183
    %3185 = vdwg.mxu0
    %v3186 = vmax.f32 %v1692, 0.0
    %v3187 = vmax.f32 %v3180, 0.0
    %v3188 = vmax.f32 %v1696, 0.0
    %v3189 = vmax.f32 %v3184, 0.0
    %v3190 = vld [vmem:[#allocation7] sm:$0xff]
    %v3191 = vld [vmem:[#allocation7 + $0x8] sm:$0xff]
    %v3192 = vld [vmem:[#allocation7 + $0x10] sm:$0xff]
    %v3193 = vld [vmem:[#allocation7 + $0x18] sm:$0xff]
    %v3194 = vld [vmem:[#allocation7 + $0x20] sm:$0xff]
    %v3195 = vld [vmem:[#allocation7 + $0x28] sm:$0xff]
    %v3196 = vld [vmem:[#allocation7 + $0x30] sm:$0xff]
    %v3197 = vld [vmem:[#allocation7 + $0x38] sm:$0xff]
    %v3198 = vld [vmem:[#allocation7 + $0x40] sm:$0xff]
    %v3199 = vld [vmem:[#allocation7 + $0x48] sm:$0xff]
    %v3200 = vld [vmem:[#allocation7 + $0x50] sm:$0xff]
    %v3201 = vld [vmem:[#allocation7 + $0x58] sm:$0xff]
    %v3202 = vld [vmem:[#allocation7 + $0x60] sm:$0xff]
    %v3203 = vld [vmem:[#allocation7 + $0x68] sm:$0xff]
    %v3204 = vld [vmem:[#allocation7 + $0x70] sm:$0xff]
    %v3205 = vld [vmem:[#allocation7 + $0x78] sm:$0xff]
    %v3206 = vld [vmem:[#allocation7 + $0x80] sm:$0xff]
    %v3207 = vld [vmem:[#allocation7 + $0x88] sm:$0xff]
    %v3208 = vld [vmem:[#allocation7 + $0x90] sm:$0xff]
    %v3209 = vld [vmem:[#allocation7 + $0x98] sm:$0xff]
    %v3210 = vld [vmem:[#allocation7 + $0xa0] sm:$0xff]
    %v3211 = vld [vmem:[#allocation7 + $0xa8] sm:$0xff]
    %v3212 = vld [vmem:[#allocation7 + $0xb0] sm:$0xff]
    %v3213 = vld [vmem:[#allocation7 + $0xb8] sm:$0xff]
    %v3214 = vld [vmem:[#allocation7 + $0xc0] sm:$0xff]
    %v3215 = vld [vmem:[#allocation7 + $0xc8] sm:$0xff]
    %v3216 = vld [vmem:[#allocation7 + $0xd0] sm:$0xff]
    %v3217 = vld [vmem:[#allocation7 + $0xd8] sm:$0xff]
    %v3218 = vld [vmem:[#allocation7 + $0xe0] sm:$0xff]
    %v3219 = vld [vmem:[#allocation7 + $0xe8] sm:$0xff]
    %v3220 = vld [vmem:[#allocation7 + $0xf0] sm:$0xff]
    %v3221 = vld [vmem:[#allocation7 + $0xf8] sm:$0xff]
    %v3222 = vld [vmem:[#allocation7 + $0x100] sm:$0xff]
    %v3223 = vld [vmem:[#allocation7 + $0x108] sm:$0xff]
    %v3224 = vld [vmem:[#allocation7 + $0x110] sm:$0xff]
    %v3225 = vld [vmem:[#allocation7 + $0x118] sm:$0xff]
    %v3226 = vld [vmem:[#allocation7 + $0x120] sm:$0xff]
    %v3227 = vld [vmem:[#allocation7 + $0x128] sm:$0xff]
    %v3228 = vld [vmem:[#allocation7 + $0x130] sm:$0xff]
    %v3229 = vld [vmem:[#allocation7 + $0x138] sm:$0xff]
    %v3230 = vld [vmem:[#allocation7 + $0x140] sm:$0xff]
    %v3231 = vld [vmem:[#allocation7 + $0x148] sm:$0xff]
    %v3232 = vld [vmem:[#allocation7 + $0x150] sm:$0xff]
    %v3233 = vld [vmem:[#allocation7 + $0x158] sm:$0xff]
    %v3234 = vld [vmem:[#allocation7 + $0x160] sm:$0xff]
    %v3235 = vld [vmem:[#allocation7 + $0x168] sm:$0xff]
    %v3236 = vld [vmem:[#allocation7 + $0x170] sm:$0xff]
    %v3237 = vld [vmem:[#allocation7 + $0x178] sm:$0xff]
    %v3238 = vld [vmem:[#allocation7 + $0x180] sm:$0xff]
    %v3239 = vld [vmem:[#allocation7 + $0x188] sm:$0xff]
    %v3240 = vld [vmem:[#allocation7 + $0x190] sm:$0xff]
    %v3241 = vld [vmem:[#allocation7 + $0x198] sm:$0xff]
    %v3242 = vld [vmem:[#allocation7 + $0x1a0] sm:$0xff]
    %v3243 = vld [vmem:[#allocation7 + $0x1a8] sm:$0xff]
    %v3244 = vld [vmem:[#allocation7 + $0x1b0] sm:$0xff]
    %v3245 = vld [vmem:[#allocation7 + $0x1b8] sm:$0xff]
    %v3246 = vld [vmem:[#allocation7 + $0x1c0] sm:$0xff]
    %v3247 = vld [vmem:[#allocation7 + $0x1c8] sm:$0xff]
    %v3248 = vld [vmem:[#allocation7 + $0x1d0] sm:$0xff]
    %v3249 = vld [vmem:[#allocation7 + $0x1d8] sm:$0xff]
    %v3250 = vld [vmem:[#allocation7 + $0x1e0] sm:$0xff]
    %v3251 = vld [vmem:[#allocation7 + $0x1e8] sm:$0xff]
    %v3252 = vld [vmem:[#allocation7 + $0x1f0] sm:$0xff]
    %v3253 = vld [vmem:[#allocation7 + $0x1f8] sm:$0xff]
    %v3254 = vld [vmem:[#allocation7 + $0x200] sm:$0xff]
    %v3255 = vld [vmem:[#allocation7 + $0x208] sm:$0xff]
    %v3256 = vld [vmem:[#allocation7 + $0x210] sm:$0xff]
    %v3257 = vld [vmem:[#allocation7 + $0x218] sm:$0xff]
    %v3258 = vld [vmem:[#allocation7 + $0x220] sm:$0xff]
    %v3259 = vld [vmem:[#allocation7 + $0x228] sm:$0xff]
    %v3260 = vld [vmem:[#allocation7 + $0x230] sm:$0xff]
    %v3261 = vld [vmem:[#allocation7 + $0x238] sm:$0xff]
    %v3262 = vld [vmem:[#allocation7 + $0x240] sm:$0xff]
    %v3263 = vld [vmem:[#allocation7 + $0x248] sm:$0xff]
    %v3264 = vld [vmem:[#allocation7 + $0x250] sm:$0xff]
    %v3265 = vld [vmem:[#allocation7 + $0x258] sm:$0xff]
    %v3266 = vld [vmem:[#allocation7 + $0x260] sm:$0xff]
    %v3267 = vld [vmem:[#allocation7 + $0x268] sm:$0xff]
    %v3268 = vld [vmem:[#allocation7 + $0x270] sm:$0xff]
    %v3269 = vld [vmem:[#allocation7 + $0x278] sm:$0xff]
    %v3270 = vld [vmem:[#allocation7 + $0x280] sm:$0xff]
    %v3271 = vld [vmem:[#allocation7 + $0x288] sm:$0xff]
    %v3272 = vld [vmem:[#allocation7 + $0x290] sm:$0xff]
    %v3273 = vld [vmem:[#allocation7 + $0x298] sm:$0xff]
    %v3274 = vld [vmem:[#allocation7 + $0x2a0] sm:$0xff]
    %v3275 = vld [vmem:[#allocation7 + $0x2a8] sm:$0xff]
    %v3276 = vld [vmem:[#allocation7 + $0x2b0] sm:$0xff]
    %v3277 = vld [vmem:[#allocation7 + $0x2b8] sm:$0xff]
    %v3278 = vld [vmem:[#allocation7 + $0x2c0] sm:$0xff]
    %v3279 = vld [vmem:[#allocation7 + $0x2c8] sm:$0xff]
    %v3280 = vld [vmem:[#allocation7 + $0x2d0] sm:$0xff]
    %v3281 = vld [vmem:[#allocation7 + $0x2d8] sm:$0xff]
    %v3282 = vld [vmem:[#allocation7 + $0x2e0] sm:$0xff]
    %v3283 = vld [vmem:[#allocation7 + $0x2e8] sm:$0xff]
    %v3284 = vld [vmem:[#allocation7 + $0x2f0] sm:$0xff]
    %v3285 = vld [vmem:[#allocation7 + $0x2f8] sm:$0xff]
    %v3286 = vld [vmem:[#allocation7 + $0x300] sm:$0xff]
    %v3287 = vld [vmem:[#allocation7 + $0x308] sm:$0xff]
    %v3288 = vld [vmem:[#allocation7 + $0x310] sm:$0xff]
    %v3289 = vld [vmem:[#allocation7 + $0x318] sm:$0xff]
    %v3290 = vld [vmem:[#allocation7 + $0x320] sm:$0xff]
    %v3291 = vld [vmem:[#allocation7 + $0x328] sm:$0xff]
    %v3292 = vld [vmem:[#allocation7 + $0x330] sm:$0xff]
    %v3293 = vld [vmem:[#allocation7 + $0x338] sm:$0xff]
    %v3294 = vld [vmem:[#allocation7 + $0x340] sm:$0xff]
    %v3295 = vld [vmem:[#allocation7 + $0x348] sm:$0xff]
    %v3296 = vld [vmem:[#allocation7 + $0x350] sm:$0xff]
    %v3297 = vld [vmem:[#allocation7 + $0x358] sm:$0xff]
    %v3298 = vld [vmem:[#allocation7 + $0x360] sm:$0xff]
    %v3299 = vld [vmem:[#allocation7 + $0x368] sm:$0xff]
    %v3300 = vld [vmem:[#allocation7 + $0x370] sm:$0xff]
    %v3301 = vld [vmem:[#allocation7 + $0x378] sm:$0xff]
    %v3302 = vld [vmem:[#allocation7 + $0x380] sm:$0xff]
    %v3303 = vld [vmem:[#allocation7 + $0x388] sm:$0xff]
    %v3304 = vld [vmem:[#allocation7 + $0x390] sm:$0xff]
    %v3305 = vld [vmem:[#allocation7 + $0x398] sm:$0xff]
    %v3306 = vld [vmem:[#allocation7 + $0x3a0] sm:$0xff]
    %v3307 = vld [vmem:[#allocation7 + $0x3a8] sm:$0xff]
    %v3308 = vld [vmem:[#allocation7 + $0x3b0] sm:$0xff]
    %v3309 = vld [vmem:[#allocation7 + $0x3b8] sm:$0xff]
    %v3310 = vld [vmem:[#allocation7 + $0x3c0] sm:$0xff]
    %v3311 = vld [vmem:[#allocation7 + $0x3c8] sm:$0xff]
    %v3312 = vld [vmem:[#allocation7 + $0x3d0] sm:$0xff]
    %v3313 = vld [vmem:[#allocation7 + $0x3d8] sm:$0xff]
    %v3314 = vld [vmem:[#allocation7 + $0x3e0] sm:$0xff]
    %v3315 = vld [vmem:[#allocation7 + $0x3e8] sm:$0xff]
    %v3316 = vld [vmem:[#allocation7 + $0x3f0] sm:$0xff]
    %v3317 = vld [vmem:[#allocation7 + $0x3f8] sm:$0xff]
    %v3318 = vld [vmem:[%s4] sm:$0xf]
    %v3320 = vperm.slane %v3318, 0
    %v3321 = vperm.slane %v3318, 1
    %v3322 = vperm.slane %v3318, 2
    %v3323 = vperm.slane %v3318, 3
    %v3328 = vand.u32 %v3250, 4294901760
    %3329 = vmatpush.msra.mxu0 %v3328
    %v3330 = vand.u32 %v3246, 4294901760
    %3331 = vmatpush.msra.mxu0 %v3330
    %v3332 = vand.u32 %v3242, 4294901760
    %3333 = vmatpush.msra.mxu0 %v3332
    %v3334 = vand.u32 %v3238, 4294901760
    %3335 = vmatpush.msra.mxu0 %v3334
    %v3336 = vand.u32 %v3234, 4294901760
    %3337 = vmatpush.msra.mxu0 %v3336
    %v3338 = vand.u32 %v3230, 4294901760
    %3339 = vmatpush.msra.mxu0 %v3338
    %v3340 = vand.u32 %v3226, 4294901760
    %3341 = vmatpush.msra.mxu0 %v3340
    %v3342 = vand.u32 %v3222, 4294901760
    %3343 = vmatpush.msra.mxu0 %v3342
    %v3344 = vand.u32 %v3218, 4294901760
    %3345 = vmatpush.msra.mxu0 %v3344
    %v3346 = vand.u32 %v3214, 4294901760
    %3347 = vmatpush.msra.mxu0 %v3346
    %v3348 = vand.u32 %v3210, 4294901760
    %3349 = vmatpush.msra.mxu0 %v3348
    %v3350 = vand.u32 %v3206, 4294901760
    %3351 = vmatpush.msra.mxu0 %v3350
    %v3352 = vand.u32 %v3202, 4294901760
    %3353 = vmatpush.msra.mxu0 %v3352
    %v3354 = vand.u32 %v3198, 4294901760
    %3355 = vmatpush.msra.mxu0 %v3354
    %v3356 = vand.u32 %v3194, 4294901760
    %3357 = vmatpush.msra.mxu0 %v3356
    %v3358 = vand.u32 %v3190, 4294901760
    %3359 = vmatpush.msra.mxu0 %v3358
    %v3360 = vand.u32 %v3186, 4294901760
    %v3361 = vsub.f32 %v3186, %v3360
    %v3362 = vand.u32 %v3361, 4294901760
    %v3363 = vsub.f32 %v3361, %v3362
    %v3364 = vand.u32 %v3363, 4294901760
    %3365 = vmatmul.f32.gmra.mxu0 %v3364
    %v3366 = vpop.f32.mrf.mxu0
    %v3367 = vadd.f32 %v3320, %v3366
    %v3368 = vand.u32 %v3188, 4294901760
    %v3369 = vsub.f32 %v3188, %v3368
    %v3370 = vand.u32 %v3369, 4294901760
    %v3371 = vsub.f32 %v3369, %v3370
    %v3372 = vand.u32 %v3371, 4294901760
    %3373 = vmatmul.f32.gmra.mxu0 %v3372
    %v3374 = vpop.f32.mrf.mxu0
    %v3375 = vadd.f32 %v3320, %v3374
    %3376 = vdwg.mxu0
    %v3377 = vand.u32 %v3250, 4294901760
    %v3378 = vsub.f32 %v3250, %v3377
    %v3379 = vand.u32 %v3378, 4294901760
    %v3380 = vsub.f32 %v3378, %v3379
    %v3381 = vand.u32 %v3380, 4294901760
    %3382 = vmatpush.msra.mxu0 %v3381
    %v3383 = vand.u32 %v3246, 4294901760
    %v3384 = vsub.f32 %v3246, %v3383
    %v3385 = vand.u32 %v3384, 4294901760
    %v3386 = vsub.f32 %v3384, %v3385
    %v3387 = vand.u32 %v3386, 4294901760
    %3388 = vmatpush.msra.mxu0 %v3387
    %v3389 = vand.u32 %v3242, 4294901760
    %v3390 = vsub.f32 %v3242, %v3389
    %v3391 = vand.u32 %v3390, 4294901760
    %v3392 = vsub.f32 %v3390, %v3391
    %v3393 = vand.u32 %v3392, 4294901760
    %3394 = vmatpush.msra.mxu0 %v3393
    %v3395 = vand.u32 %v3238, 4294901760
    %v3396 = vsub.f32 %v3238, %v3395
    %v3397 = vand.u32 %v3396, 4294901760
    %v3398 = vsub.f32 %v3396, %v3397
    %v3399 = vand.u32 %v3398, 4294901760
    %3400 = vmatpush.msra.mxu0 %v3399
    %v3401 = vand.u32 %v3234, 4294901760
    %v3402 = vsub.f32 %v3234, %v3401
    %v3403 = vand.u32 %v3402, 4294901760
    %v3404 = vsub.f32 %v3402, %v3403
    %v3405 = vand.u32 %v3404, 4294901760
    %3406 = vmatpush.msra.mxu0 %v3405
    %v3407 = vand.u32 %v3230, 4294901760
    %v3408 = vsub.f32 %v3230, %v3407
    %v3409 = vand.u32 %v3408, 4294901760
    %v3410 = vsub.f32 %v3408, %v3409
    %v3411 = vand.u32 %v3410, 4294901760
    %3412 = vmatpush.msra.mxu0 %v3411
    %v3413 = vand.u32 %v3226, 4294901760
    %v3414 = vsub.f32 %v3226, %v3413
    %v3415 = vand.u32 %v3414, 4294901760
    %v3416 = vsub.f32 %v3414, %v3415
    %v3417 = vand.u32 %v3416, 4294901760
    %3418 = vmatpush.msra.mxu0 %v3417
    %v3419 = vand.u32 %v3222, 4294901760
    %v3420 = vsub.f32 %v3222, %v3419
    %v3421 = vand.u32 %v3420, 4294901760
    %v3422 = vsub.f32 %v3420, %v3421
    %v3423 = vand.u32 %v3422, 4294901760
    %3424 = vmatpush.msra.mxu0 %v3423
    %v3425 = vand.u32 %v3218, 4294901760
    %v3426 = vsub.f32 %v3218, %v3425
    %v3427 = vand.u32 %v3426, 4294901760
    %v3428 = vsub.f32 %v3426, %v3427
    %v3429 = vand.u32 %v3428, 4294901760
    %3430 = vmatpush.msra.mxu0 %v3429
    %v3431 = vand.u32 %v3214, 4294901760
    %v3432 = vsub.f32 %v3214, %v3431
    %v3433 = vand.u32 %v3432, 4294901760
    %v3434 = vsub.f32 %v3432, %v3433
    %v3435 = vand.u32 %v3434, 4294901760
    %3436 = vmatpush.msra.mxu0 %v3435
    %v3437 = vand.u32 %v3210, 4294901760
    %v3438 = vsub.f32 %v3210, %v3437
    %v3439 = vand.u32 %v3438, 4294901760
    %v3440 = vsub.f32 %v3438, %v3439
    %v3441 = vand.u32 %v3440, 4294901760
    %3442 = vmatpush.msra.mxu0 %v3441
    %v3443 = vand.u32 %v3206, 4294901760
    %v3444 = vsub.f32 %v3206, %v3443
    %v3445 = vand.u32 %v3444, 4294901760
    %v3446 = vsub.f32 %v3444, %v3445
    %v3447 = vand.u32 %v3446, 4294901760
    %3448 = vmatpush.msra.mxu0 %v3447
    %v3449 = vand.u32 %v3202, 4294901760
    %v3450 = vsub.f32 %v3202, %v3449
    %v3451 = vand.u32 %v3450, 4294901760
    %v3452 = vsub.f32 %v3450, %v3451
    %v3453 = vand.u32 %v3452, 4294901760
    %3454 = vmatpush.msra.mxu0 %v3453
    %v3455 = vand.u32 %v3198, 4294901760
    %v3456 = vsub.f32 %v3198, %v3455
    %v3457 = vand.u32 %v3456, 4294901760
    %v3458 = vsub.f32 %v3456, %v3457
    %v3459 = vand.u32 %v3458, 4294901760
    %3460 = vmatpush.msra.mxu0 %v3459
    %v3461 = vand.u32 %v3194, 4294901760
    %v3462 = vsub.f32 %v3194, %v3461
    %v3463 = vand.u32 %v3462, 4294901760
    %v3464 = vsub.f32 %v3462, %v3463
    %v3465 = vand.u32 %v3464, 4294901760
    %3466 = vmatpush.msra.mxu0 %v3465
    %v3467 = vand.u32 %v3190, 4294901760
    %v3468 = vsub.f32 %v3190, %v3467
    %v3469 = vand.u32 %v3468, 4294901760
    %v3470 = vsub.f32 %v3468, %v3469
    %v3471 = vand.u32 %v3470, 4294901760
    %3472 = vmatpush.msra.mxu0 %v3471
    %v3473 = vand.u32 %v3186, 4294901760
    %3474 = vmatmul.f32.gmra.mxu0 %v3473
    %v3475 = vpop.f32.mrf.mxu0
    %v3476 = vadd.f32 %v3367, %v3475
    %v3477 = vand.u32 %v3188, 4294901760
    %3478 = vmatmul.f32.gmra.mxu0 %v3477
    %v3479 = vpop.f32.mrf.mxu0
    %v3480 = vadd.f32 %v3375, %v3479
    %3481 = vdwg.mxu0
    %v3482 = vand.u32 %v3250, 4294901760
    %v3483 = vsub.f32 %v3250, %v3482
    %3484 = vmatpush.msra.mxu0 %v3483
    %v3485 = vand.u32 %v3246, 4294901760
    %v3486 = vsub.f32 %v3246, %v3485
    %3487 = vmatpush.msra.mxu0 %v3486
    %v3488 = vand.u32 %v3242, 4294901760
    %v3489 = vsub.f32 %v3242, %v3488
    %3490 = vmatpush.msra.mxu0 %v3489
    %v3491 = vand.u32 %v3238, 4294901760
    %v3492 = vsub.f32 %v3238, %v3491
    %3493 = vmatpush.msra.mxu0 %v3492
    %v3494 = vand.u32 %v3234, 4294901760
    %v3495 = vsub.f32 %v3234, %v3494
    %3496 = vmatpush.msra.mxu0 %v3495
    %v3497 = vand.u32 %v3230, 4294901760
    %v3498 = vsub.f32 %v3230, %v3497
    %3499 = vmatpush.msra.mxu0 %v3498
    %v3500 = vand.u32 %v3226, 4294901760
    %v3501 = vsub.f32 %v3226, %v3500
    %3502 = vmatpush.msra.mxu0 %v3501
    %v3503 = vand.u32 %v3222, 4294901760
    %v3504 = vsub.f32 %v3222, %v3503
    %3505 = vmatpush.msra.mxu0 %v3504
    %v3506 = vand.u32 %v3218, 4294901760
    %v3507 = vsub.f32 %v3218, %v3506
    %3508 = vmatpush.msra.mxu0 %v3507
    %v3509 = vand.u32 %v3214, 4294901760
    %v3510 = vsub.f32 %v3214, %v3509
    %3511 = vmatpush.msra.mxu0 %v3510
    %v3512 = vand.u32 %v3210, 4294901760
    %v3513 = vsub.f32 %v3210, %v3512
    %3514 = vmatpush.msra.mxu0 %v3513
    %v3515 = vand.u32 %v3206, 4294901760
    %v3516 = vsub.f32 %v3206, %v3515
    %3517 = vmatpush.msra.mxu0 %v3516
    %v3518 = vand.u32 %v3202, 4294901760
    %v3519 = vsub.f32 %v3202, %v3518
    %3520 = vmatpush.msra.mxu0 %v3519
    %v3521 = vand.u32 %v3198, 4294901760
    %v3522 = vsub.f32 %v3198, %v3521
    %3523 = vmatpush.msra.mxu0 %v3522
    %v3524 = vand.u32 %v3194, 4294901760
    %v3525 = vsub.f32 %v3194, %v3524
    %3526 = vmatpush.msra.mxu0 %v3525
    %v3527 = vand.u32 %v3190, 4294901760
    %v3528 = vsub.f32 %v3190, %v3527
    %3529 = vmatpush.msra.mxu0 %v3528
    %v3530 = vand.u32 %v3186, 4294901760
    %v3531 = vsub.f32 %v3186, %v3530
    %3532 = vmatmul.f32.gmra.mxu0 %v3531
    %v3533 = vpop.f32.mrf.mxu0
    %v3534 = vadd.f32 %v3476, %v3533
    %v3535 = vand.u32 %v3188, 4294901760
    %v3536 = vsub.f32 %v3188, %v3535
    %3537 = vmatmul.f32.gmra.mxu0 %v3536
    %v3538 = vpop.f32.mrf.mxu0
    %v3539 = vadd.f32 %v3480, %v3538
    %3540 = vdwg.mxu0
    %v3541 = vand.u32 %v3250, 4294901760
    %3542 = vmatpush.msra.mxu0 %v3541
    %v3543 = vand.u32 %v3246, 4294901760
    %3544 = vmatpush.msra.mxu0 %v3543
    %v3545 = vand.u32 %v3242, 4294901760
    %3546 = vmatpush.msra.mxu0 %v3545
    %v3547 = vand.u32 %v3238, 4294901760
    %3548 = vmatpush.msra.mxu0 %v3547
    %v3549 = vand.u32 %v3234, 4294901760
    %3550 = vmatpush.msra.mxu0 %v3549
    %v3551 = vand.u32 %v3230, 4294901760
    %3552 = vmatpush.msra.mxu0 %v3551
    %v3553 = vand.u32 %v3226, 4294901760
    %3554 = vmatpush.msra.mxu0 %v3553
    %v3555 = vand.u32 %v3222, 4294901760
    %3556 = vmatpush.msra.mxu0 %v3555
    %v3557 = vand.u32 %v3218, 4294901760
    %3558 = vmatpush.msra.mxu0 %v3557
    %v3559 = vand.u32 %v3214, 4294901760
    %3560 = vmatpush.msra.mxu0 %v3559
    %v3561 = vand.u32 %v3210, 4294901760
    %3562 = vmatpush.msra.mxu0 %v3561
    %v3563 = vand.u32 %v3206, 4294901760
    %3564 = vmatpush.msra.mxu0 %v3563
    %v3565 = vand.u32 %v3202, 4294901760
    %3566 = vmatpush.msra.mxu0 %v3565
    %v3567 = vand.u32 %v3198, 4294901760
    %3568 = vmatpush.msra.mxu0 %v3567
    %v3569 = vand.u32 %v3194, 4294901760
    %3570 = vmatpush.msra.mxu0 %v3569
    %v3571 = vand.u32 %v3190, 4294901760
    %3572 = vmatpush.msra.mxu0 %v3571
    %v3573 = vand.u32 %v3186, 4294901760
    %v3574 = vsub.f32 %v3186, %v3573
    %v3575 = vand.u32 %v3574, 4294901760
    %3576 = vmatmul.f32.gmra.mxu0 %v3575
    %v3577 = vpop.f32.mrf.mxu0
    %v3578 = vadd.f32 %v3534, %v3577
    %v3579 = vand.u32 %v3188, 4294901760
    %v3580 = vsub.f32 %v3188, %v3579
    %v3581 = vand.u32 %v3580, 4294901760
    %3582 = vmatmul.f32.gmra.mxu0 %v3581
    %v3583 = vpop.f32.mrf.mxu0
    %v3584 = vadd.f32 %v3539, %v3583
    %3585 = vdwg.mxu0
    %v3586 = vand.u32 %v3250, 4294901760
    %v3587 = vsub.f32 %v3250, %v3586
    %v3588 = vand.u32 %v3587, 4294901760
    %3589 = vmatpush.msra.mxu0 %v3588
    %v3590 = vand.u32 %v3246, 4294901760
    %v3591 = vsub.f32 %v3246, %v3590
    %v3592 = vand.u32 %v3591, 4294901760
    %3593 = vmatpush.msra.mxu0 %v3592
    %v3594 = vand.u32 %v3242, 4294901760
    %v3595 = vsub.f32 %v3242, %v3594
    %v3596 = vand.u32 %v3595, 4294901760
    %3597 = vmatpush.msra.mxu0 %v3596
    %v3598 = vand.u32 %v3238, 4294901760
    %v3599 = vsub.f32 %v3238, %v3598
    %v3600 = vand.u32 %v3599, 4294901760
    %3601 = vmatpush.msra.mxu0 %v3600
    %v3602 = vand.u32 %v3234, 4294901760
    %v3603 = vsub.f32 %v3234, %v3602
    %v3604 = vand.u32 %v3603, 4294901760
    %3605 = vmatpush.msra.mxu0 %v3604
    %v3606 = vand.u32 %v3230, 4294901760
    %v3607 = vsub.f32 %v3230, %v3606
    %v3608 = vand.u32 %v3607, 4294901760
    %3609 = vmatpush.msra.mxu0 %v3608
    %v3610 = vand.u32 %v3226, 4294901760
    %v3611 = vsub.f32 %v3226, %v3610
    %v3612 = vand.u32 %v3611, 4294901760
    %3613 = vmatpush.msra.mxu0 %v3612
    %v3614 = vand.u32 %v3222, 4294901760
    %v3615 = vsub.f32 %v3222, %v3614
    %v3616 = vand.u32 %v3615, 4294901760
    %3617 = vmatpush.msra.mxu0 %v3616
    %v3618 = vand.u32 %v3218, 4294901760
    %v3619 = vsub.f32 %v3218, %v3618
    %v3620 = vand.u32 %v3619, 4294901760
    %3621 = vmatpush.msra.mxu0 %v3620
    %v3622 = vand.u32 %v3214, 4294901760
    %v3623 = vsub.f32 %v3214, %v3622
    %v3624 = vand.u32 %v3623, 4294901760
    %3625 = vmatpush.msra.mxu0 %v3624
    %v3626 = vand.u32 %v3210, 4294901760
    %v3627 = vsub.f32 %v3210, %v3626
    %v3628 = vand.u32 %v3627, 4294901760
    %3629 = vmatpush.msra.mxu0 %v3628
    %v3630 = vand.u32 %v3206, 4294901760
    %v3631 = vsub.f32 %v3206, %v3630
    %v3632 = vand.u32 %v3631, 4294901760
    %3633 = vmatpush.msra.mxu0 %v3632
    %v3634 = vand.u32 %v3202, 4294901760
    %v3635 = vsub.f32 %v3202, %v3634
    %v3636 = vand.u32 %v3635, 4294901760
    %3637 = vmatpush.msra.mxu0 %v3636
    %v3638 = vand.u32 %v3198, 4294901760
    %v3639 = vsub.f32 %v3198, %v3638
    %v3640 = vand.u32 %v3639, 4294901760
    %3641 = vmatpush.msra.mxu0 %v3640
    %v3642 = vand.u32 %v3194, 4294901760
    %v3643 = vsub.f32 %v3194, %v3642
    %v3644 = vand.u32 %v3643, 4294901760
    %3645 = vmatpush.msra.mxu0 %v3644
    %v3646 = vand.u32 %v3190, 4294901760
    %v3647 = vsub.f32 %v3190, %v3646
    %v3648 = vand.u32 %v3647, 4294901760
    %3649 = vmatpush.msra.mxu0 %v3648
    %v3650 = vand.u32 %v3186, 4294901760
    %3651 = vmatmul.f32.gmra.mxu0 %v3650
    %v3652 = vpop.f32.mrf.mxu0
    %v3653 = vadd.f32 %v3578, %v3652
    %v3654 = vand.u32 %v3188, 4294901760
    %3655 = vmatmul.f32.gmra.mxu0 %v3654
    %v3656 = vpop.f32.mrf.mxu0
    %v3657 = vadd.f32 %v3584, %v3656
    %3658 = vdwg.mxu0
    %v3659 = vand.u32 %v3250, 4294901760
    %3660 = vmatpush.msra.mxu0 %v3659
    %v3661 = vand.u32 %v3246, 4294901760
    %3662 = vmatpush.msra.mxu0 %v3661
    %v3663 = vand.u32 %v3242, 4294901760
    %3664 = vmatpush.msra.mxu0 %v3663
    %v3665 = vand.u32 %v3238, 4294901760
    %3666 = vmatpush.msra.mxu0 %v3665
    %v3667 = vand.u32 %v3234, 4294901760
    %3668 = vmatpush.msra.mxu0 %v3667
    %v3669 = vand.u32 %v3230, 4294901760
    %3670 = vmatpush.msra.mxu0 %v3669
    %v3671 = vand.u32 %v3226, 4294901760
    %3672 = vmatpush.msra.mxu0 %v3671
    %v3673 = vand.u32 %v3222, 4294901760
    %3674 = vmatpush.msra.mxu0 %v3673
    %v3675 = vand.u32 %v3218, 4294901760
    %3676 = vmatpush.msra.mxu0 %v3675
    %v3677 = vand.u32 %v3214, 4294901760
    %3678 = vmatpush.msra.mxu0 %v3677
    %v3679 = vand.u32 %v3210, 4294901760
    %3680 = vmatpush.msra.mxu0 %v3679
    %v3681 = vand.u32 %v3206, 4294901760
    %3682 = vmatpush.msra.mxu0 %v3681
    %v3683 = vand.u32 %v3202, 4294901760
    %3684 = vmatpush.msra.mxu0 %v3683
    %v3685 = vand.u32 %v3198, 4294901760
    %3686 = vmatpush.msra.mxu0 %v3685
    %v3687 = vand.u32 %v3194, 4294901760
    %3688 = vmatpush.msra.mxu0 %v3687
    %v3689 = vand.u32 %v3190, 4294901760
    %3690 = vmatpush.msra.mxu0 %v3689
    %v3691 = vand.u32 %v3186, 4294901760
    %3692 = vmatmul.f32.gmra.mxu0 %v3691
    %v3693 = vpop.f32.mrf.mxu0
    %v3694 = vadd.f32 %v3653, %v3693
    %v3695 = vand.u32 %v3188, 4294901760
    %3696 = vmatmul.f32.gmra.mxu0 %v3695
    %v3697 = vpop.f32.mrf.mxu0
    %v3698 = vadd.f32 %v3657, %v3697
    %3699 = vdwg.mxu0
    %v3700 = vand.u32 %v3314, 4294901760
    %3701 = vmatpush.msra.mxu0 %v3700
    %v3702 = vand.u32 %v3310, 4294901760
    %3703 = vmatpush.msra.mxu0 %v3702
    %v3704 = vand.u32 %v3306, 4294901760
    %3705 = vmatpush.msra.mxu0 %v3704
    %v3706 = vand.u32 %v3302, 4294901760
    %3707 = vmatpush.msra.mxu0 %v3706
    %v3708 = vand.u32 %v3298, 4294901760
    %3709 = vmatpush.msra.mxu0 %v3708
    %v3710 = vand.u32 %v3294, 4294901760
    %3711 = vmatpush.msra.mxu0 %v3710
    %v3712 = vand.u32 %v3290, 4294901760
    %3713 = vmatpush.msra.mxu0 %v3712
    %v3714 = vand.u32 %v3286, 4294901760
    %3715 = vmatpush.msra.mxu0 %v3714
    %v3716 = vand.u32 %v3282, 4294901760
    %3717 = vmatpush.msra.mxu0 %v3716
    %v3718 = vand.u32 %v3278, 4294901760
    %3719 = vmatpush.msra.mxu0 %v3718
    %v3720 = vand.u32 %v3274, 4294901760
    %3721 = vmatpush.msra.mxu0 %v3720
    %v3722 = vand.u32 %v3270, 4294901760
    %3723 = vmatpush.msra.mxu0 %v3722
    %v3724 = vand.u32 %v3266, 4294901760
    %3725 = vmatpush.msra.mxu0 %v3724
    %v3726 = vand.u32 %v3262, 4294901760
    %3727 = vmatpush.msra.mxu0 %v3726
    %v3728 = vand.u32 %v3258, 4294901760
    %3729 = vmatpush.msra.mxu0 %v3728
    %v3730 = vand.u32 %v3254, 4294901760
    %3731 = vmatpush.msra.mxu0 %v3730
    %v3732 = vand.u32 %v3187, 4294901760
    %v3733 = vsub.f32 %v3187, %v3732
    %v3734 = vand.u32 %v3733, 4294901760
    %v3735 = vsub.f32 %v3733, %v3734
    %v3736 = vand.u32 %v3735, 4294901760
    %3737 = vmatmul.f32.gmra.mxu0 %v3736
    %v3738 = vpop.f32.mrf.mxu0
    %v3739 = vadd.f32 %v3694, %v3738
    %v3740 = vand.u32 %v3189, 4294901760
    %v3741 = vsub.f32 %v3189, %v3740
    %v3742 = vand.u32 %v3741, 4294901760
    %v3743 = vsub.f32 %v3741, %v3742
    %v3744 = vand.u32 %v3743, 4294901760
    %3745 = vmatmul.f32.gmra.mxu0 %v3744
    %v3746 = vpop.f32.mrf.mxu0
    %v3747 = vadd.f32 %v3698, %v3746
    %3748 = vdwg.mxu0
    %v3749 = vand.u32 %v3314, 4294901760
    %v3750 = vsub.f32 %v3314, %v3749
    %v3751 = vand.u32 %v3750, 4294901760
    %v3752 = vsub.f32 %v3750, %v3751
    %v3753 = vand.u32 %v3752, 4294901760
    %3754 = vmatpush.msra.mxu0 %v3753
    %v3755 = vand.u32 %v3310, 4294901760
    %v3756 = vsub.f32 %v3310, %v3755
    %v3757 = vand.u32 %v3756, 4294901760
    %v3758 = vsub.f32 %v3756, %v3757
    %v3759 = vand.u32 %v3758, 4294901760
    %3760 = vmatpush.msra.mxu0 %v3759
    %v3761 = vand.u32 %v3306, 4294901760
    %v3762 = vsub.f32 %v3306, %v3761
    %v3763 = vand.u32 %v3762, 4294901760
    %v3764 = vsub.f32 %v3762, %v3763
    %v3765 = vand.u32 %v3764, 4294901760
    %3766 = vmatpush.msra.mxu0 %v3765
    %v3767 = vand.u32 %v3302, 4294901760
    %v3768 = vsub.f32 %v3302, %v3767
    %v3769 = vand.u32 %v3768, 4294901760
    %v3770 = vsub.f32 %v3768, %v3769
    %v3771 = vand.u32 %v3770, 4294901760
    %3772 = vmatpush.msra.mxu0 %v3771
    %v3773 = vand.u32 %v3298, 4294901760
    %v3774 = vsub.f32 %v3298, %v3773
    %v3775 = vand.u32 %v3774, 4294901760
    %v3776 = vsub.f32 %v3774, %v3775
    %v3777 = vand.u32 %v3776, 4294901760
    %3778 = vmatpush.msra.mxu0 %v3777
    %v3779 = vand.u32 %v3294, 4294901760
    %v3780 = vsub.f32 %v3294, %v3779
    %v3781 = vand.u32 %v3780, 4294901760
    %v3782 = vsub.f32 %v3780, %v3781
    %v3783 = vand.u32 %v3782, 4294901760
    %3784 = vmatpush.msra.mxu0 %v3783
    %v3785 = vand.u32 %v3290, 4294901760
    %v3786 = vsub.f32 %v3290, %v3785
    %v3787 = vand.u32 %v3786, 4294901760
    %v3788 = vsub.f32 %v3786, %v3787
    %v3789 = vand.u32 %v3788, 4294901760
    %3790 = vmatpush.msra.mxu0 %v3789
    %v3791 = vand.u32 %v3286, 4294901760
    %v3792 = vsub.f32 %v3286, %v3791
    %v3793 = vand.u32 %v3792, 4294901760
    %v3794 = vsub.f32 %v3792, %v3793
    %v3795 = vand.u32 %v3794, 4294901760
    %3796 = vmatpush.msra.mxu0 %v3795
    %v3797 = vand.u32 %v3282, 4294901760
    %v3798 = vsub.f32 %v3282, %v3797
    %v3799 = vand.u32 %v3798, 4294901760
    %v3800 = vsub.f32 %v3798, %v3799
    %v3801 = vand.u32 %v3800, 4294901760
    %3802 = vmatpush.msra.mxu0 %v3801
    %v3803 = vand.u32 %v3278, 4294901760
    %v3804 = vsub.f32 %v3278, %v3803
    %v3805 = vand.u32 %v3804, 4294901760
    %v3806 = vsub.f32 %v3804, %v3805
    %v3807 = vand.u32 %v3806, 4294901760
    %3808 = vmatpush.msra.mxu0 %v3807
    %v3809 = vand.u32 %v3274, 4294901760
    %v3810 = vsub.f32 %v3274, %v3809
    %v3811 = vand.u32 %v3810, 4294901760
    %v3812 = vsub.f32 %v3810, %v3811
    %v3813 = vand.u32 %v3812, 4294901760
    %3814 = vmatpush.msra.mxu0 %v3813
    %v3815 = vand.u32 %v3270, 4294901760
    %v3816 = vsub.f32 %v3270, %v3815
    %v3817 = vand.u32 %v3816, 4294901760
    %v3818 = vsub.f32 %v3816, %v3817
    %v3819 = vand.u32 %v3818, 4294901760
    %3820 = vmatpush.msra.mxu0 %v3819
    %v3821 = vand.u32 %v3266, 4294901760
    %v3822 = vsub.f32 %v3266, %v3821
    %v3823 = vand.u32 %v3822, 4294901760
    %v3824 = vsub.f32 %v3822, %v3823
    %v3825 = vand.u32 %v3824, 4294901760
    %3826 = vmatpush.msra.mxu0 %v3825
    %v3827 = vand.u32 %v3262, 4294901760
    %v3828 = vsub.f32 %v3262, %v3827
    %v3829 = vand.u32 %v3828, 4294901760
    %v3830 = vsub.f32 %v3828, %v3829
    %v3831 = vand.u32 %v3830, 4294901760
    %3832 = vmatpush.msra.mxu0 %v3831
    %v3833 = vand.u32 %v3258, 4294901760
    %v3834 = vsub.f32 %v3258, %v3833
    %v3835 = vand.u32 %v3834, 4294901760
    %v3836 = vsub.f32 %v3834, %v3835
    %v3837 = vand.u32 %v3836, 4294901760
    %3838 = vmatpush.msra.mxu0 %v3837
    %v3839 = vand.u32 %v3254, 4294901760
    %v3840 = vsub.f32 %v3254, %v3839
    %v3841 = vand.u32 %v3840, 4294901760
    %v3842 = vsub.f32 %v3840, %v3841
    %v3843 = vand.u32 %v3842, 4294901760
    %3844 = vmatpush.msra.mxu0 %v3843
    %v3845 = vand.u32 %v3187, 4294901760
    %3846 = vmatmul.f32.gmra.mxu0 %v3845
    %v3847 = vpop.f32.mrf.mxu0
    %v3848 = vadd.f32 %v3739, %v3847
    %v3849 = vand.u32 %v3189, 4294901760
    %3850 = vmatmul.f32.gmra.mxu0 %v3849
    %v3851 = vpop.f32.mrf.mxu0
    %v3852 = vadd.f32 %v3747, %v3851
    %3853 = vdwg.mxu0
    %v3854 = vand.u32 %v3314, 4294901760
    %v3855 = vsub.f32 %v3314, %v3854
    %3856 = vmatpush.msra.mxu0 %v3855
    %v3857 = vand.u32 %v3310, 4294901760
    %v3858 = vsub.f32 %v3310, %v3857
    %3859 = vmatpush.msra.mxu0 %v3858
    %v3860 = vand.u32 %v3306, 4294901760
    %v3861 = vsub.f32 %v3306, %v3860
    %3862 = vmatpush.msra.mxu0 %v3861
    %v3863 = vand.u32 %v3302, 4294901760
    %v3864 = vsub.f32 %v3302, %v3863
    %3865 = vmatpush.msra.mxu0 %v3864
    %v3866 = vand.u32 %v3298, 4294901760
    %v3867 = vsub.f32 %v3298, %v3866
    %3868 = vmatpush.msra.mxu0 %v3867
    %v3869 = vand.u32 %v3294, 4294901760
    %v3870 = vsub.f32 %v3294, %v3869
    %3871 = vmatpush.msra.mxu0 %v3870
    %v3872 = vand.u32 %v3290, 4294901760
    %v3873 = vsub.f32 %v3290, %v3872
    %3874 = vmatpush.msra.mxu0 %v3873
    %v3875 = vand.u32 %v3286, 4294901760
    %v3876 = vsub.f32 %v3286, %v3875
    %3877 = vmatpush.msra.mxu0 %v3876
    %v3878 = vand.u32 %v3282, 4294901760
    %v3879 = vsub.f32 %v3282, %v3878
    %3880 = vmatpush.msra.mxu0 %v3879
    %v3881 = vand.u32 %v3278, 4294901760
    %v3882 = vsub.f32 %v3278, %v3881
    %3883 = vmatpush.msra.mxu0 %v3882
    %v3884 = vand.u32 %v3274, 4294901760
    %v3885 = vsub.f32 %v3274, %v3884
    %3886 = vmatpush.msra.mxu0 %v3885
    %v3887 = vand.u32 %v3270, 4294901760
    %v3888 = vsub.f32 %v3270, %v3887
    %3889 = vmatpush.msra.mxu0 %v3888
    %v3890 = vand.u32 %v3266, 4294901760
    %v3891 = vsub.f32 %v3266, %v3890
    %3892 = vmatpush.msra.mxu0 %v3891
    %v3893 = vand.u32 %v3262, 4294901760
    %v3894 = vsub.f32 %v3262, %v3893
    %3895 = vmatpush.msra.mxu0 %v3894
    %v3896 = vand.u32 %v3258, 4294901760
    %v3897 = vsub.f32 %v3258, %v3896
    %3898 = vmatpush.msra.mxu0 %v3897
    %v3899 = vand.u32 %v3254, 4294901760
    %v3900 = vsub.f32 %v3254, %v3899
    %3901 = vmatpush.msra.mxu0 %v3900
    %v3902 = vand.u32 %v3187, 4294901760
    %v3903 = vsub.f32 %v3187, %v3902
    %3904 = vmatmul.f32.gmra.mxu0 %v3903
    %v3905 = vpop.f32.mrf.mxu0
    %v3906 = vadd.f32 %v3848, %v3905
    %v3907 = vand.u32 %v3189, 4294901760
    %v3908 = vsub.f32 %v3189, %v3907
    %3909 = vmatmul.f32.gmra.mxu0 %v3908
    %v3910 = vpop.f32.mrf.mxu0
    %v3911 = vadd.f32 %v3852, %v3910
    %3912 = vdwg.mxu0
    %v3913 = vand.u32 %v3314, 4294901760
    %3914 = vmatpush.msra.mxu0 %v3913
    %v3915 = vand.u32 %v3310, 4294901760
    %3916 = vmatpush.msra.mxu0 %v3915
    %v3917 = vand.u32 %v3306, 4294901760
    %3918 = vmatpush.msra.mxu0 %v3917
    %v3919 = vand.u32 %v3302, 4294901760
    %3920 = vmatpush.msra.mxu0 %v3919
    %v3921 = vand.u32 %v3298, 4294901760
    %3922 = vmatpush.msra.mxu0 %v3921
    %v3923 = vand.u32 %v3294, 4294901760
    %3924 = vmatpush.msra.mxu0 %v3923
    %v3925 = vand.u32 %v3290, 4294901760
    %3926 = vmatpush.msra.mxu0 %v3925
    %v3927 = vand.u32 %v3286, 4294901760
    %3928 = vmatpush.msra.mxu0 %v3927
    %v3929 = vand.u32 %v3282, 4294901760
    %3930 = vmatpush.msra.mxu0 %v3929
    %v3931 = vand.u32 %v3278, 4294901760
    %3932 = vmatpush.msra.mxu0 %v3931
    %v3933 = vand.u32 %v3274, 4294901760
    %3934 = vmatpush.msra.mxu0 %v3933
    %v3935 = vand.u32 %v3270, 4294901760
    %3936 = vmatpush.msra.mxu0 %v3935
    %v3937 = vand.u32 %v3266, 4294901760
    %3938 = vmatpush.msra.mxu0 %v3937
    %v3939 = vand.u32 %v3262, 4294901760
    %3940 = vmatpush.msra.mxu0 %v3939
    %v3941 = vand.u32 %v3258, 4294901760
    %3942 = vmatpush.msra.mxu0 %v3941
    %v3943 = vand.u32 %v3254, 4294901760
    %3944 = vmatpush.msra.mxu0 %v3943
    %v3945 = vand.u32 %v3187, 4294901760
    %v3946 = vsub.f32 %v3187, %v3945
    %v3947 = vand.u32 %v3946, 4294901760
    %3948 = vmatmul.f32.gmra.mxu0 %v3947
    %v3949 = vpop.f32.mrf.mxu0
    %v3950 = vadd.f32 %v3906, %v3949
    %v3951 = vand.u32 %v3189, 4294901760
    %v3952 = vsub.f32 %v3189, %v3951
    %v3953 = vand.u32 %v3952, 4294901760
    %3954 = vmatmul.f32.gmra.mxu0 %v3953
    %v3955 = vpop.f32.mrf.mxu0
    %v3956 = vadd.f32 %v3911, %v3955
    %3957 = vdwg.mxu0
    %v3958 = vand.u32 %v3314, 4294901760
    %v3959 = vsub.f32 %v3314, %v3958
    %v3960 = vand.u32 %v3959, 4294901760
    %3961 = vmatpush.msra.mxu0 %v3960
    %v3962 = vand.u32 %v3310, 4294901760
    %v3963 = vsub.f32 %v3310, %v3962
    %v3964 = vand.u32 %v3963, 4294901760
    %3965 = vmatpush.msra.mxu0 %v3964
    %v3966 = vand.u32 %v3306, 4294901760
    %v3967 = vsub.f32 %v3306, %v3966
    %v3968 = vand.u32 %v3967, 4294901760
    %3969 = vmatpush.msra.mxu0 %v3968
    %v3970 = vand.u32 %v3302, 4294901760
    %v3971 = vsub.f32 %v3302, %v3970
    %v3972 = vand.u32 %v3971, 4294901760
    %3973 = vmatpush.msra.mxu0 %v3972
    %v3974 = vand.u32 %v3298, 4294901760
    %v3975 = vsub.f32 %v3298, %v3974
    %v3976 = vand.u32 %v3975, 4294901760
    %3977 = vmatpush.msra.mxu0 %v3976
    %v3978 = vand.u32 %v3294, 4294901760
    %v3979 = vsub.f32 %v3294, %v3978
    %v3980 = vand.u32 %v3979, 4294901760
    %3981 = vmatpush.msra.mxu0 %v3980
    %v3982 = vand.u32 %v3290, 4294901760
    %v3983 = vsub.f32 %v3290, %v3982
    %v3984 = vand.u32 %v3983, 4294901760
    %3985 = vmatpush.msra.mxu0 %v3984
    %v3986 = vand.u32 %v3286, 4294901760
    %v3987 = vsub.f32 %v3286, %v3986
    %v3988 = vand.u32 %v3987, 4294901760
    %3989 = vmatpush.msra.mxu0 %v3988
    %v3990 = vand.u32 %v3282, 4294901760
    %v3991 = vsub.f32 %v3282, %v3990
    %v3992 = vand.u32 %v3991, 4294901760
    %3993 = vmatpush.msra.mxu0 %v3992
    %v3994 = vand.u32 %v3278, 4294901760
    %v3995 = vsub.f32 %v3278, %v3994
    %v3996 = vand.u32 %v3995, 4294901760
    %3997 = vmatpush.msra.mxu0 %v3996
    %v3998 = vand.u32 %v3274, 4294901760
    %v3999 = vsub.f32 %v3274, %v3998
    %v4000 = vand.u32 %v3999, 4294901760
    %4001 = vmatpush.msra.mxu0 %v4000
    %v4002 = vand.u32 %v3270, 4294901760
    %v4003 = vsub.f32 %v3270, %v4002
    %v4004 = vand.u32 %v4003, 4294901760
    %4005 = vmatpush.msra.mxu0 %v4004
    %v4006 = vand.u32 %v3266, 4294901760
    %v4007 = vsub.f32 %v3266, %v4006
    %v4008 = vand.u32 %v4007, 4294901760
    %4009 = vmatpush.msra.mxu0 %v4008
    %v4010 = vand.u32 %v3262, 4294901760
    %v4011 = vsub.f32 %v3262, %v4010
    %v4012 = vand.u32 %v4011, 4294901760
    %4013 = vmatpush.msra.mxu0 %v4012
    %v4014 = vand.u32 %v3258, 4294901760
    %v4015 = vsub.f32 %v3258, %v4014
    %v4016 = vand.u32 %v4015, 4294901760
    %4017 = vmatpush.msra.mxu0 %v4016
    %v4018 = vand.u32 %v3254, 4294901760
    %v4019 = vsub.f32 %v3254, %v4018
    %v4020 = vand.u32 %v4019, 4294901760
    %4021 = vmatpush.msra.mxu0 %v4020
    %v4022 = vand.u32 %v3187, 4294901760
    %4023 = vmatmul.f32.gmra.mxu0 %v4022
    %v4024 = vpop.f32.mrf.mxu0
    %v4025 = vadd.f32 %v3950, %v4024
    %v4026 = vand.u32 %v3189, 4294901760
    %4027 = vmatmul.f32.gmra.mxu0 %v4026
    %v4028 = vpop.f32.mrf.mxu0
    %v4029 = vadd.f32 %v3956, %v4028
    %4030 = vdwg.mxu0
    %v4031 = vand.u32 %v3314, 4294901760
    %4032 = vmatpush.msra.mxu0 %v4031
    %v4033 = vand.u32 %v3310, 4294901760
    %4034 = vmatpush.msra.mxu0 %v4033
    %v4035 = vand.u32 %v3306, 4294901760
    %4036 = vmatpush.msra.mxu0 %v4035
    %v4037 = vand.u32 %v3302, 4294901760
    %4038 = vmatpush.msra.mxu0 %v4037
    %v4039 = vand.u32 %v3298, 4294901760
    %4040 = vmatpush.msra.mxu0 %v4039
    %v4041 = vand.u32 %v3294, 4294901760
    %4042 = vmatpush.msra.mxu0 %v4041
    %v4043 = vand.u32 %v3290, 4294901760
    %4044 = vmatpush.msra.mxu0 %v4043
    %v4045 = vand.u32 %v3286, 4294901760
    %4046 = vmatpush.msra.mxu0 %v4045
    %v4047 = vand.u32 %v3282, 4294901760
    %4048 = vmatpush.msra.mxu0 %v4047
    %v4049 = vand.u32 %v3278, 4294901760
    %4050 = vmatpush.msra.mxu0 %v4049
    %v4051 = vand.u32 %v3274, 4294901760
    %4052 = vmatpush.msra.mxu0 %v4051
    %v4053 = vand.u32 %v3270, 4294901760
    %4054 = vmatpush.msra.mxu0 %v4053
    %v4055 = vand.u32 %v3266, 4294901760
    %4056 = vmatpush.msra.mxu0 %v4055
    %v4057 = vand.u32 %v3262, 4294901760
    %4058 = vmatpush.msra.mxu0 %v4057
    %v4059 = vand.u32 %v3258, 4294901760
    %4060 = vmatpush.msra.mxu0 %v4059
    %v4061 = vand.u32 %v3254, 4294901760
    %4062 = vmatpush.msra.mxu0 %v4061
    %v4063 = vand.u32 %v3187, 4294901760
    %4064 = vmatmul.f32.gmra.mxu0 %v4063
    %v4065 = vpop.f32.mrf.mxu0
    %v4066 = vadd.f32 %v4025, %v4065
    %v4067 = vand.u32 %v3189, 4294901760
    %4068 = vmatmul.f32.gmra.mxu0 %v4067
    %v4069 = vpop.f32.mrf.mxu0
    %v4070 = vadd.f32 %v4029, %v4069
    %4071 = vdwg.mxu0
    %v4072 = vand.u32 %v3251, 4294901760
    %4073 = vmatpush.msra.mxu0 %v4072
    %v4074 = vand.u32 %v3247, 4294901760
    %4075 = vmatpush.msra.mxu0 %v4074
    %v4076 = vand.u32 %v3243, 4294901760
    %4077 = vmatpush.msra.mxu0 %v4076
    %v4078 = vand.u32 %v3239, 4294901760
    %4079 = vmatpush.msra.mxu0 %v4078
    %v4080 = vand.u32 %v3235, 4294901760
    %4081 = vmatpush.msra.mxu0 %v4080
    %v4082 = vand.u32 %v3231, 4294901760
    %4083 = vmatpush.msra.mxu0 %v4082
    %v4084 = vand.u32 %v3227, 4294901760
    %4085 = vmatpush.msra.mxu0 %v4084
    %v4086 = vand.u32 %v3223, 4294901760
    %4087 = vmatpush.msra.mxu0 %v4086
    %v4088 = vand.u32 %v3219, 4294901760
    %4089 = vmatpush.msra.mxu0 %v4088
    %v4090 = vand.u32 %v3215, 4294901760
    %4091 = vmatpush.msra.mxu0 %v4090
    %v4092 = vand.u32 %v3211, 4294901760
    %4093 = vmatpush.msra.mxu0 %v4092
    %v4094 = vand.u32 %v3207, 4294901760
    %4095 = vmatpush.msra.mxu0 %v4094
    %v4096 = vand.u32 %v3203, 4294901760
    %4097 = vmatpush.msra.mxu0 %v4096
    %v4098 = vand.u32 %v3199, 4294901760
    %4099 = vmatpush.msra.mxu0 %v4098
    %v4100 = vand.u32 %v3195, 4294901760
    %4101 = vmatpush.msra.mxu0 %v4100
    %v4102 = vand.u32 %v3191, 4294901760
    %4103 = vmatpush.msra.mxu0 %v4102
    %v4104 = vand.u32 %v3186, 4294901760
    %v4105 = vsub.f32 %v3186, %v4104
    %v4106 = vand.u32 %v4105, 4294901760
    %v4107 = vsub.f32 %v4105, %v4106
    %v4108 = vand.u32 %v4107, 4294901760
    %4109 = vmatmul.f32.gmra.mxu0 %v4108
    %v4110 = vpop.f32.mrf.mxu0
    %v4111 = vadd.f32 %v3321, %v4110
    %v4112 = vand.u32 %v3188, 4294901760
    %v4113 = vsub.f32 %v3188, %v4112
    %v4114 = vand.u32 %v4113, 4294901760
    %v4115 = vsub.f32 %v4113, %v4114
    %v4116 = vand.u32 %v4115, 4294901760
    %4117 = vmatmul.f32.gmra.mxu0 %v4116
    %v4118 = vpop.f32.mrf.mxu0
    %v4119 = vadd.f32 %v3321, %v4118
    %4120 = vdwg.mxu0
    %v4121 = vand.u32 %v3251, 4294901760
    %v4122 = vsub.f32 %v3251, %v4121
    %v4123 = vand.u32 %v4122, 4294901760
    %v4124 = vsub.f32 %v4122, %v4123
    %v4125 = vand.u32 %v4124, 4294901760
    %4126 = vmatpush.msra.mxu0 %v4125
    %v4127 = vand.u32 %v3247, 4294901760
    %v4128 = vsub.f32 %v3247, %v4127
    %v4129 = vand.u32 %v4128, 4294901760
    %v4130 = vsub.f32 %v4128, %v4129
    %v4131 = vand.u32 %v4130, 4294901760
    %4132 = vmatpush.msra.mxu0 %v4131
    %v4133 = vand.u32 %v3243, 4294901760
    %v4134 = vsub.f32 %v3243, %v4133
    %v4135 = vand.u32 %v4134, 4294901760
    %v4136 = vsub.f32 %v4134, %v4135
    %v4137 = vand.u32 %v4136, 4294901760
    %4138 = vmatpush.msra.mxu0 %v4137
    %v4139 = vand.u32 %v3239, 4294901760
    %v4140 = vsub.f32 %v3239, %v4139
    %v4141 = vand.u32 %v4140, 4294901760
    %v4142 = vsub.f32 %v4140, %v4141
    %v4143 = vand.u32 %v4142, 4294901760
    %4144 = vmatpush.msra.mxu0 %v4143
    %v4145 = vand.u32 %v3235, 4294901760
    %v4146 = vsub.f32 %v3235, %v4145
    %v4147 = vand.u32 %v4146, 4294901760
    %v4148 = vsub.f32 %v4146, %v4147
    %v4149 = vand.u32 %v4148, 4294901760
    %4150 = vmatpush.msra.mxu0 %v4149
    %v4151 = vand.u32 %v3231, 4294901760
    %v4152 = vsub.f32 %v3231, %v4151
    %v4153 = vand.u32 %v4152, 4294901760
    %v4154 = vsub.f32 %v4152, %v4153
    %v4155 = vand.u32 %v4154, 4294901760
    %4156 = vmatpush.msra.mxu0 %v4155
    %v4157 = vand.u32 %v3227, 4294901760
    %v4158 = vsub.f32 %v3227, %v4157
    %v4159 = vand.u32 %v4158, 4294901760
    %v4160 = vsub.f32 %v4158, %v4159
    %v4161 = vand.u32 %v4160, 4294901760
    %4162 = vmatpush.msra.mxu0 %v4161
    %v4163 = vand.u32 %v3223, 4294901760
    %v4164 = vsub.f32 %v3223, %v4163
    %v4165 = vand.u32 %v4164, 4294901760
    %v4166 = vsub.f32 %v4164, %v4165
    %v4167 = vand.u32 %v4166, 4294901760
    %4168 = vmatpush.msra.mxu0 %v4167
    %v4169 = vand.u32 %v3219, 4294901760
    %v4170 = vsub.f32 %v3219, %v4169
    %v4171 = vand.u32 %v4170, 4294901760
    %v4172 = vsub.f32 %v4170, %v4171
    %v4173 = vand.u32 %v4172, 4294901760
    %4174 = vmatpush.msra.mxu0 %v4173
    %v4175 = vand.u32 %v3215, 4294901760
    %v4176 = vsub.f32 %v3215, %v4175
    %v4177 = vand.u32 %v4176, 4294901760
    %v4178 = vsub.f32 %v4176, %v4177
    %v4179 = vand.u32 %v4178, 4294901760
    %4180 = vmatpush.msra.mxu0 %v4179
    %v4181 = vand.u32 %v3211, 4294901760
    %v4182 = vsub.f32 %v3211, %v4181
    %v4183 = vand.u32 %v4182, 4294901760
    %v4184 = vsub.f32 %v4182, %v4183
    %v4185 = vand.u32 %v4184, 4294901760
    %4186 = vmatpush.msra.mxu0 %v4185
    %v4187 = vand.u32 %v3207, 4294901760
    %v4188 = vsub.f32 %v3207, %v4187
    %v4189 = vand.u32 %v4188, 4294901760
    %v4190 = vsub.f32 %v4188, %v4189
    %v4191 = vand.u32 %v4190, 4294901760
    %4192 = vmatpush.msra.mxu0 %v4191
    %v4193 = vand.u32 %v3203, 4294901760
    %v4194 = vsub.f32 %v3203, %v4193
    %v4195 = vand.u32 %v4194, 4294901760
    %v4196 = vsub.f32 %v4194, %v4195
    %v4197 = vand.u32 %v4196, 4294901760
    %4198 = vmatpush.msra.mxu0 %v4197
    %v4199 = vand.u32 %v3199, 4294901760
    %v4200 = vsub.f32 %v3199, %v4199
    %v4201 = vand.u32 %v4200, 4294901760
    %v4202 = vsub.f32 %v4200, %v4201
    %v4203 = vand.u32 %v4202, 4294901760
    %4204 = vmatpush.msra.mxu0 %v4203
    %v4205 = vand.u32 %v3195, 4294901760
    %v4206 = vsub.f32 %v3195, %v4205
    %v4207 = vand.u32 %v4206, 4294901760
    %v4208 = vsub.f32 %v4206, %v4207
    %v4209 = vand.u32 %v4208, 4294901760
    %4210 = vmatpush.msra.mxu0 %v4209
    %v4211 = vand.u32 %v3191, 4294901760
    %v4212 = vsub.f32 %v3191, %v4211
    %v4213 = vand.u32 %v4212, 4294901760
    %v4214 = vsub.f32 %v4212, %v4213
    %v4215 = vand.u32 %v4214, 4294901760
    %4216 = vmatpush.msra.mxu0 %v4215
    %v4217 = vand.u32 %v3186, 4294901760
    %4218 = vmatmul.f32.gmra.mxu0 %v4217
    %v4219 = vpop.f32.mrf.mxu0
    %v4220 = vadd.f32 %v4111, %v4219
    %v4221 = vand.u32 %v3188, 4294901760
    %4222 = vmatmul.f32.gmra.mxu0 %v4221
    %v4223 = vpop.f32.mrf.mxu0
    %v4224 = vadd.f32 %v4119, %v4223
    %4225 = vdwg.mxu0
    %v4226 = vand.u32 %v3251, 4294901760
    %v4227 = vsub.f32 %v3251, %v4226
    %4228 = vmatpush.msra.mxu0 %v4227
    %v4229 = vand.u32 %v3247, 4294901760
    %v4230 = vsub.f32 %v3247, %v4229
    %4231 = vmatpush.msra.mxu0 %v4230
    %v4232 = vand.u32 %v3243, 4294901760
    %v4233 = vsub.f32 %v3243, %v4232
    %4234 = vmatpush.msra.mxu0 %v4233
    %v4235 = vand.u32 %v3239, 4294901760
    %v4236 = vsub.f32 %v3239, %v4235
    %4237 = vmatpush.msra.mxu0 %v4236
    %v4238 = vand.u32 %v3235, 4294901760
    %v4239 = vsub.f32 %v3235, %v4238
    %4240 = vmatpush.msra.mxu0 %v4239
    %v4241 = vand.u32 %v3231, 4294901760
    %v4242 = vsub.f32 %v3231, %v4241
    %4243 = vmatpush.msra.mxu0 %v4242
    %v4244 = vand.u32 %v3227, 4294901760
    %v4245 = vsub.f32 %v3227, %v4244
    %4246 = vmatpush.msra.mxu0 %v4245
    %v4247 = vand.u32 %v3223, 4294901760
    %v4248 = vsub.f32 %v3223, %v4247
    %4249 = vmatpush.msra.mxu0 %v4248
    %v4250 = vand.u32 %v3219, 4294901760
    %v4251 = vsub.f32 %v3219, %v4250
    %4252 = vmatpush.msra.mxu0 %v4251
    %v4253 = vand.u32 %v3215, 4294901760
    %v4254 = vsub.f32 %v3215, %v4253
    %4255 = vmatpush.msra.mxu0 %v4254
    %v4256 = vand.u32 %v3211, 4294901760
    %v4257 = vsub.f32 %v3211, %v4256
    %4258 = vmatpush.msra.mxu0 %v4257
    %v4259 = vand.u32 %v3207, 4294901760
    %v4260 = vsub.f32 %v3207, %v4259
    %4261 = vmatpush.msra.mxu0 %v4260
    %v4262 = vand.u32 %v3203, 4294901760
    %v4263 = vsub.f32 %v3203, %v4262
    %4264 = vmatpush.msra.mxu0 %v4263
    %v4265 = vand.u32 %v3199, 4294901760
    %v4266 = vsub.f32 %v3199, %v4265
    %4267 = vmatpush.msra.mxu0 %v4266
    %v4268 = vand.u32 %v3195, 4294901760
    %v4269 = vsub.f32 %v3195, %v4268
    %4270 = vmatpush.msra.mxu0 %v4269
    %v4271 = vand.u32 %v3191, 4294901760
    %v4272 = vsub.f32 %v3191, %v4271
    %4273 = vmatpush.msra.mxu0 %v4272
    %v4274 = vand.u32 %v3186, 4294901760
    %v4275 = vsub.f32 %v3186, %v4274
    %4276 = vmatmul.f32.gmra.mxu0 %v4275
    %v4277 = vpop.f32.mrf.mxu0
    %v4278 = vadd.f32 %v4220, %v4277
    %v4279 = vand.u32 %v3188, 4294901760
    %v4280 = vsub.f32 %v3188, %v4279
    %4281 = vmatmul.f32.gmra.mxu0 %v4280
    %v4282 = vpop.f32.mrf.mxu0
    %v4283 = vadd.f32 %v4224, %v4282
    %4284 = vdwg.mxu0
    %v4285 = vand.u32 %v3251, 4294901760
    %4286 = vmatpush.msra.mxu0 %v4285
    %v4287 = vand.u32 %v3247, 4294901760
    %4288 = vmatpush.msra.mxu0 %v4287
    %v4289 = vand.u32 %v3243, 4294901760
    %4290 = vmatpush.msra.mxu0 %v4289
    %v4291 = vand.u32 %v3239, 4294901760
    %4292 = vmatpush.msra.mxu0 %v4291
    %v4293 = vand.u32 %v3235, 4294901760
    %4294 = vmatpush.msra.mxu0 %v4293
    %v4295 = vand.u32 %v3231, 4294901760
    %4296 = vmatpush.msra.mxu0 %v4295
    %v4297 = vand.u32 %v3227, 4294901760
    %4298 = vmatpush.msra.mxu0 %v4297
    %v4299 = vand.u32 %v3223, 4294901760
    %4300 = vmatpush.msra.mxu0 %v4299
    %v4301 = vand.u32 %v3219, 4294901760
    %4302 = vmatpush.msra.mxu0 %v4301
    %v4303 = vand.u32 %v3215, 4294901760
    %4304 = vmatpush.msra.mxu0 %v4303
    %v4305 = vand.u32 %v3211, 4294901760
    %4306 = vmatpush.msra.mxu0 %v4305
    %v4307 = vand.u32 %v3207, 4294901760
    %4308 = vmatpush.msra.mxu0 %v4307
    %v4309 = vand.u32 %v3203, 4294901760
    %4310 = vmatpush.msra.mxu0 %v4309
    %v4311 = vand.u32 %v3199, 4294901760
    %4312 = vmatpush.msra.mxu0 %v4311
    %v4313 = vand.u32 %v3195, 4294901760
    %4314 = vmatpush.msra.mxu0 %v4313
    %v4315 = vand.u32 %v3191, 4294901760
    %4316 = vmatpush.msra.mxu0 %v4315
    %v4317 = vand.u32 %v3186, 4294901760
    %v4318 = vsub.f32 %v3186, %v4317
    %v4319 = vand.u32 %v4318, 4294901760
    %4320 = vmatmul.f32.gmra.mxu0 %v4319
    %v4321 = vpop.f32.mrf.mxu0
    %v4322 = vadd.f32 %v4278, %v4321
    %v4323 = vand.u32 %v3188, 4294901760
    %v4324 = vsub.f32 %v3188, %v4323
    %v4325 = vand.u32 %v4324, 4294901760
    %4326 = vmatmul.f32.gmra.mxu0 %v4325
    %v4327 = vpop.f32.mrf.mxu0
    %v4328 = vadd.f32 %v4283, %v4327
    %4329 = vdwg.mxu0
    %v4330 = vand.u32 %v3251, 4294901760
    %v4331 = vsub.f32 %v3251, %v4330
    %v4332 = vand.u32 %v4331, 4294901760
    %4333 = vmatpush.msra.mxu0 %v4332
    %v4334 = vand.u32 %v3247, 4294901760
    %v4335 = vsub.f32 %v3247, %v4334
    %v4336 = vand.u32 %v4335, 4294901760
    %4337 = vmatpush.msra.mxu0 %v4336
    %v4338 = vand.u32 %v3243, 4294901760
    %v4339 = vsub.f32 %v3243, %v4338
    %v4340 = vand.u32 %v4339, 4294901760
    %4341 = vmatpush.msra.mxu0 %v4340
    %v4342 = vand.u32 %v3239, 4294901760
    %v4343 = vsub.f32 %v3239, %v4342
    %v4344 = vand.u32 %v4343, 4294901760
    %4345 = vmatpush.msra.mxu0 %v4344
    %v4346 = vand.u32 %v3235, 4294901760
    %v4347 = vsub.f32 %v3235, %v4346
    %v4348 = vand.u32 %v4347, 4294901760
    %4349 = vmatpush.msra.mxu0 %v4348
    %v4350 = vand.u32 %v3231, 4294901760
    %v4351 = vsub.f32 %v3231, %v4350
    %v4352 = vand.u32 %v4351, 4294901760
    %4353 = vmatpush.msra.mxu0 %v4352
    %v4354 = vand.u32 %v3227, 4294901760
    %v4355 = vsub.f32 %v3227, %v4354
    %v4356 = vand.u32 %v4355, 4294901760
    %4357 = vmatpush.msra.mxu0 %v4356
    %v4358 = vand.u32 %v3223, 4294901760
    %v4359 = vsub.f32 %v3223, %v4358
    %v4360 = vand.u32 %v4359, 4294901760
    %4361 = vmatpush.msra.mxu0 %v4360
    %v4362 = vand.u32 %v3219, 4294901760
    %v4363 = vsub.f32 %v3219, %v4362
    %v4364 = vand.u32 %v4363, 4294901760
    %4365 = vmatpush.msra.mxu0 %v4364
    %v4366 = vand.u32 %v3215, 4294901760
    %v4367 = vsub.f32 %v3215, %v4366
    %v4368 = vand.u32 %v4367, 4294901760
    %4369 = vmatpush.msra.mxu0 %v4368
    %v4370 = vand.u32 %v3211, 4294901760
    %v4371 = vsub.f32 %v3211, %v4370
    %v4372 = vand.u32 %v4371, 4294901760
    %4373 = vmatpush.msra.mxu0 %v4372
    %v4374 = vand.u32 %v3207, 4294901760
    %v4375 = vsub.f32 %v3207, %v4374
    %v4376 = vand.u32 %v4375, 4294901760
    %4377 = vmatpush.msra.mxu0 %v4376
    %v4378 = vand.u32 %v3203, 4294901760
    %v4379 = vsub.f32 %v3203, %v4378
    %v4380 = vand.u32 %v4379, 4294901760
    %4381 = vmatpush.msra.mxu0 %v4380
    %v4382 = vand.u32 %v3199, 4294901760
    %v4383 = vsub.f32 %v3199, %v4382
    %v4384 = vand.u32 %v4383, 4294901760
    %4385 = vmatpush.msra.mxu0 %v4384
    %v4386 = vand.u32 %v3195, 4294901760
    %v4387 = vsub.f32 %v3195, %v4386
    %v4388 = vand.u32 %v4387, 4294901760
    %4389 = vmatpush.msra.mxu0 %v4388
    %v4390 = vand.u32 %v3191, 4294901760
    %v4391 = vsub.f32 %v3191, %v4390
    %v4392 = vand.u32 %v4391, 4294901760
    %4393 = vmatpush.msra.mxu0 %v4392
    %v4394 = vand.u32 %v3186, 4294901760
    %4395 = vmatmul.f32.gmra.mxu0 %v4394
    %v4396 = vpop.f32.mrf.mxu0
    %v4397 = vadd.f32 %v4322, %v4396
    %v4398 = vand.u32 %v3188, 4294901760
    %4399 = vmatmul.f32.gmra.mxu0 %v4398
    %v4400 = vpop.f32.mrf.mxu0
    %v4401 = vadd.f32 %v4328, %v4400
    %4402 = vdwg.mxu0
    %v4403 = vand.u32 %v3251, 4294901760
    %4404 = vmatpush.msra.mxu0 %v4403
    %v4405 = vand.u32 %v3247, 4294901760
    %4406 = vmatpush.msra.mxu0 %v4405
    %v4407 = vand.u32 %v3243, 4294901760
    %4408 = vmatpush.msra.mxu0 %v4407
    %v4409 = vand.u32 %v3239, 4294901760
    %4410 = vmatpush.msra.mxu0 %v4409
    %v4411 = vand.u32 %v3235, 4294901760
    %4412 = vmatpush.msra.mxu0 %v4411
    %v4413 = vand.u32 %v3231, 4294901760
    %4414 = vmatpush.msra.mxu0 %v4413
    %v4415 = vand.u32 %v3227, 4294901760
    %4416 = vmatpush.msra.mxu0 %v4415
    %v4417 = vand.u32 %v3223, 4294901760
    %4418 = vmatpush.msra.mxu0 %v4417
    %v4419 = vand.u32 %v3219, 4294901760
    %4420 = vmatpush.msra.mxu0 %v4419
    %v4421 = vand.u32 %v3215, 4294901760
    %4422 = vmatpush.msra.mxu0 %v4421
    %v4423 = vand.u32 %v3211, 4294901760
    %4424 = vmatpush.msra.mxu0 %v4423
    %v4425 = vand.u32 %v3207, 4294901760
    %4426 = vmatpush.msra.mxu0 %v4425
    %v4427 = vand.u32 %v3203, 4294901760
    %4428 = vmatpush.msra.mxu0 %v4427
    %v4429 = vand.u32 %v3199, 4294901760
    %4430 = vmatpush.msra.mxu0 %v4429
    %v4431 = vand.u32 %v3195, 4294901760
    %4432 = vmatpush.msra.mxu0 %v4431
    %v4433 = vand.u32 %v3191, 4294901760
    %4434 = vmatpush.msra.mxu0 %v4433
    %v4435 = vand.u32 %v3186, 4294901760
    %4436 = vmatmul.f32.gmra.mxu0 %v4435
    %v4437 = vpop.f32.mrf.mxu0
    %v4438 = vadd.f32 %v4397, %v4437
    %v4439 = vand.u32 %v3188, 4294901760
    %4440 = vmatmul.f32.gmra.mxu0 %v4439
    %v4441 = vpop.f32.mrf.mxu0
    %v4442 = vadd.f32 %v4401, %v4441
    %4443 = vdwg.mxu0
    %v4444 = vand.u32 %v3315, 4294901760
    %4445 = vmatpush.msra.mxu0 %v4444
    %v4446 = vand.u32 %v3311, 4294901760
    %4447 = vmatpush.msra.mxu0 %v4446
    %v4448 = vand.u32 %v3307, 4294901760
    %4449 = vmatpush.msra.mxu0 %v4448
    %v4450 = vand.u32 %v3303, 4294901760
    %4451 = vmatpush.msra.mxu0 %v4450
    %v4452 = vand.u32 %v3299, 4294901760
    %4453 = vmatpush.msra.mxu0 %v4452
    %v4454 = vand.u32 %v3295, 4294901760
    %4455 = vmatpush.msra.mxu0 %v4454
    %v4456 = vand.u32 %v3291, 4294901760
    %4457 = vmatpush.msra.mxu0 %v4456
    %v4458 = vand.u32 %v3287, 4294901760
    %4459 = vmatpush.msra.mxu0 %v4458
    %v4460 = vand.u32 %v3283, 4294901760
    %4461 = vmatpush.msra.mxu0 %v4460
    %v4462 = vand.u32 %v3279, 4294901760
    %4463 = vmatpush.msra.mxu0 %v4462
    %v4464 = vand.u32 %v3275, 4294901760
    %4465 = vmatpush.msra.mxu0 %v4464
    %v4466 = vand.u32 %v3271, 4294901760
    %4467 = vmatpush.msra.mxu0 %v4466
    %v4468 = vand.u32 %v3267, 4294901760
    %4469 = vmatpush.msra.mxu0 %v4468
    %v4470 = vand.u32 %v3263, 4294901760
    %4471 = vmatpush.msra.mxu0 %v4470
    %v4472 = vand.u32 %v3259, 4294901760
    %4473 = vmatpush.msra.mxu0 %v4472
    %v4474 = vand.u32 %v3255, 4294901760
    %4475 = vmatpush.msra.mxu0 %v4474
    %v4476 = vand.u32 %v3187, 4294901760
    %v4477 = vsub.f32 %v3187, %v4476
    %v4478 = vand.u32 %v4477, 4294901760
    %v4479 = vsub.f32 %v4477, %v4478
    %v4480 = vand.u32 %v4479, 4294901760
    %4481 = vmatmul.f32.gmra.mxu0 %v4480
    %v4482 = vpop.f32.mrf.mxu0
    %v4483 = vadd.f32 %v4438, %v4482
    %v4484 = vand.u32 %v3189, 4294901760
    %v4485 = vsub.f32 %v3189, %v4484
    %v4486 = vand.u32 %v4485, 4294901760
    %v4487 = vsub.f32 %v4485, %v4486
    %v4488 = vand.u32 %v4487, 4294901760
    %4489 = vmatmul.f32.gmra.mxu0 %v4488
    %v4490 = vpop.f32.mrf.mxu0
    %v4491 = vadd.f32 %v4442, %v4490
    %4492 = vdwg.mxu0
    %v4493 = vand.u32 %v3315, 4294901760
    %v4494 = vsub.f32 %v3315, %v4493
    %v4495 = vand.u32 %v4494, 4294901760
    %v4496 = vsub.f32 %v4494, %v4495
    %v4497 = vand.u32 %v4496, 4294901760
    %4498 = vmatpush.msra.mxu0 %v4497
    %v4499 = vand.u32 %v3311, 4294901760
    %v4500 = vsub.f32 %v3311, %v4499
    %v4501 = vand.u32 %v4500, 4294901760
    %v4502 = vsub.f32 %v4500, %v4501
    %v4503 = vand.u32 %v4502, 4294901760
    %4504 = vmatpush.msra.mxu0 %v4503
    %v4505 = vand.u32 %v3307, 4294901760
    %v4506 = vsub.f32 %v3307, %v4505
    %v4507 = vand.u32 %v4506, 4294901760
    %v4508 = vsub.f32 %v4506, %v4507
    %v4509 = vand.u32 %v4508, 4294901760
    %4510 = vmatpush.msra.mxu0 %v4509
    %v4511 = vand.u32 %v3303, 4294901760
    %v4512 = vsub.f32 %v3303, %v4511
    %v4513 = vand.u32 %v4512, 4294901760
    %v4514 = vsub.f32 %v4512, %v4513
    %v4515 = vand.u32 %v4514, 4294901760
    %4516 = vmatpush.msra.mxu0 %v4515
    %v4517 = vand.u32 %v3299, 4294901760
    %v4518 = vsub.f32 %v3299, %v4517
    %v4519 = vand.u32 %v4518, 4294901760
    %v4520 = vsub.f32 %v4518, %v4519
    %v4521 = vand.u32 %v4520, 4294901760
    %4522 = vmatpush.msra.mxu0 %v4521
    %v4523 = vand.u32 %v3295, 4294901760
    %v4524 = vsub.f32 %v3295, %v4523
    %v4525 = vand.u32 %v4524, 4294901760
    %v4526 = vsub.f32 %v4524, %v4525
    %v4527 = vand.u32 %v4526, 4294901760
    %4528 = vmatpush.msra.mxu0 %v4527
    %v4529 = vand.u32 %v3291, 4294901760
    %v4530 = vsub.f32 %v3291, %v4529
    %v4531 = vand.u32 %v4530, 4294901760
    %v4532 = vsub.f32 %v4530, %v4531
    %v4533 = vand.u32 %v4532, 4294901760
    %4534 = vmatpush.msra.mxu0 %v4533
    %v4535 = vand.u32 %v3287, 4294901760
    %v4536 = vsub.f32 %v3287, %v4535
    %v4537 = vand.u32 %v4536, 4294901760
    %v4538 = vsub.f32 %v4536, %v4537
    %v4539 = vand.u32 %v4538, 4294901760
    %4540 = vmatpush.msra.mxu0 %v4539
    %v4541 = vand.u32 %v3283, 4294901760
    %v4542 = vsub.f32 %v3283, %v4541
    %v4543 = vand.u32 %v4542, 4294901760
    %v4544 = vsub.f32 %v4542, %v4543
    %v4545 = vand.u32 %v4544, 4294901760
    %4546 = vmatpush.msra.mxu0 %v4545
    %v4547 = vand.u32 %v3279, 4294901760
    %v4548 = vsub.f32 %v3279, %v4547
    %v4549 = vand.u32 %v4548, 4294901760
    %v4550 = vsub.f32 %v4548, %v4549
    %v4551 = vand.u32 %v4550, 4294901760
    %4552 = vmatpush.msra.mxu0 %v4551
    %v4553 = vand.u32 %v3275, 4294901760
    %v4554 = vsub.f32 %v3275, %v4553
    %v4555 = vand.u32 %v4554, 4294901760
    %v4556 = vsub.f32 %v4554, %v4555
    %v4557 = vand.u32 %v4556, 4294901760
    %4558 = vmatpush.msra.mxu0 %v4557
    %v4559 = vand.u32 %v3271, 4294901760
    %v4560 = vsub.f32 %v3271, %v4559
    %v4561 = vand.u32 %v4560, 4294901760
    %v4562 = vsub.f32 %v4560, %v4561
    %v4563 = vand.u32 %v4562, 4294901760
    %4564 = vmatpush.msra.mxu0 %v4563
    %v4565 = vand.u32 %v3267, 4294901760
    %v4566 = vsub.f32 %v3267, %v4565
    %v4567 = vand.u32 %v4566, 4294901760
    %v4568 = vsub.f32 %v4566, %v4567
    %v4569 = vand.u32 %v4568, 4294901760
    %4570 = vmatpush.msra.mxu0 %v4569
    %v4571 = vand.u32 %v3263, 4294901760
    %v4572 = vsub.f32 %v3263, %v4571
    %v4573 = vand.u32 %v4572, 4294901760
    %v4574 = vsub.f32 %v4572, %v4573
    %v4575 = vand.u32 %v4574, 4294901760
    %4576 = vmatpush.msra.mxu0 %v4575
    %v4577 = vand.u32 %v3259, 4294901760
    %v4578 = vsub.f32 %v3259, %v4577
    %v4579 = vand.u32 %v4578, 4294901760
    %v4580 = vsub.f32 %v4578, %v4579
    %v4581 = vand.u32 %v4580, 4294901760
    %4582 = vmatpush.msra.mxu0 %v4581
    %v4583 = vand.u32 %v3255, 4294901760
    %v4584 = vsub.f32 %v3255, %v4583
    %v4585 = vand.u32 %v4584, 4294901760
    %v4586 = vsub.f32 %v4584, %v4585
    %v4587 = vand.u32 %v4586, 4294901760
    %4588 = vmatpush.msra.mxu0 %v4587
    %v4589 = vand.u32 %v3187, 4294901760
    %4590 = vmatmul.f32.gmra.mxu0 %v4589
    %v4591 = vpop.f32.mrf.mxu0
    %v4592 = vadd.f32 %v4483, %v4591
    %v4593 = vand.u32 %v3189, 4294901760
    %4594 = vmatmul.f32.gmra.mxu0 %v4593
    %v4595 = vpop.f32.mrf.mxu0
    %v4596 = vadd.f32 %v4491, %v4595
    %4597 = vdwg.mxu0
    %v4598 = vand.u32 %v3315, 4294901760
    %v4599 = vsub.f32 %v3315, %v4598
    %4600 = vmatpush.msra.mxu0 %v4599
    %v4601 = vand.u32 %v3311, 4294901760
    %v4602 = vsub.f32 %v3311, %v4601
    %4603 = vmatpush.msra.mxu0 %v4602
    %v4604 = vand.u32 %v3307, 4294901760
    %v4605 = vsub.f32 %v3307, %v4604
    %4606 = vmatpush.msra.mxu0 %v4605
    %v4607 = vand.u32 %v3303, 4294901760
    %v4608 = vsub.f32 %v3303, %v4607
    %4609 = vmatpush.msra.mxu0 %v4608
    %v4610 = vand.u32 %v3299, 4294901760
    %v4611 = vsub.f32 %v3299, %v4610
    %4612 = vmatpush.msra.mxu0 %v4611
    %v4613 = vand.u32 %v3295, 4294901760
    %v4614 = vsub.f32 %v3295, %v4613
    %4615 = vmatpush.msra.mxu0 %v4614
    %v4616 = vand.u32 %v3291, 4294901760
    %v4617 = vsub.f32 %v3291, %v4616
    %4618 = vmatpush.msra.mxu0 %v4617
    %v4619 = vand.u32 %v3287, 4294901760
    %v4620 = vsub.f32 %v3287, %v4619
    %4621 = vmatpush.msra.mxu0 %v4620
    %v4622 = vand.u32 %v3283, 4294901760
    %v4623 = vsub.f32 %v3283, %v4622
    %4624 = vmatpush.msra.mxu0 %v4623
    %v4625 = vand.u32 %v3279, 4294901760
    %v4626 = vsub.f32 %v3279, %v4625
    %4627 = vmatpush.msra.mxu0 %v4626
    %v4628 = vand.u32 %v3275, 4294901760
    %v4629 = vsub.f32 %v3275, %v4628
    %4630 = vmatpush.msra.mxu0 %v4629
    %v4631 = vand.u32 %v3271, 4294901760
    %v4632 = vsub.f32 %v3271, %v4631
    %4633 = vmatpush.msra.mxu0 %v4632
    %v4634 = vand.u32 %v3267, 4294901760
    %v4635 = vsub.f32 %v3267, %v4634
    %4636 = vmatpush.msra.mxu0 %v4635
    %v4637 = vand.u32 %v3263, 4294901760
    %v4638 = vsub.f32 %v3263, %v4637
    %4639 = vmatpush.msra.mxu0 %v4638
    %v4640 = vand.u32 %v3259, 4294901760
    %v4641 = vsub.f32 %v3259, %v4640
    %4642 = vmatpush.msra.mxu0 %v4641
    %v4643 = vand.u32 %v3255, 4294901760
    %v4644 = vsub.f32 %v3255, %v4643
    %4645 = vmatpush.msra.mxu0 %v4644
    %v4646 = vand.u32 %v3187, 4294901760
    %v4647 = vsub.f32 %v3187, %v4646
    %4648 = vmatmul.f32.gmra.mxu0 %v4647
    %v4649 = vpop.f32.mrf.mxu0
    %v4650 = vadd.f32 %v4592, %v4649
    %v4651 = vand.u32 %v3189, 4294901760
    %v4652 = vsub.f32 %v3189, %v4651
    %4653 = vmatmul.f32.gmra.mxu0 %v4652
    %v4654 = vpop.f32.mrf.mxu0
    %v4655 = vadd.f32 %v4596, %v4654
    %4656 = vdwg.mxu0
    %v4657 = vand.u32 %v3315, 4294901760
    %4658 = vmatpush.msra.mxu0 %v4657
    %v4659 = vand.u32 %v3311, 4294901760
    %4660 = vmatpush.msra.mxu0 %v4659
    %v4661 = vand.u32 %v3307, 4294901760
    %4662 = vmatpush.msra.mxu0 %v4661
    %v4663 = vand.u32 %v3303, 4294901760
    %4664 = vmatpush.msra.mxu0 %v4663
    %v4665 = vand.u32 %v3299, 4294901760
    %4666 = vmatpush.msra.mxu0 %v4665
    %v4667 = vand.u32 %v3295, 4294901760
    %4668 = vmatpush.msra.mxu0 %v4667
    %v4669 = vand.u32 %v3291, 4294901760
    %4670 = vmatpush.msra.mxu0 %v4669
    %v4671 = vand.u32 %v3287, 4294901760
    %4672 = vmatpush.msra.mxu0 %v4671
    %v4673 = vand.u32 %v3283, 4294901760
    %4674 = vmatpush.msra.mxu0 %v4673
    %v4675 = vand.u32 %v3279, 4294901760
    %4676 = vmatpush.msra.mxu0 %v4675
    %v4677 = vand.u32 %v3275, 4294901760
    %4678 = vmatpush.msra.mxu0 %v4677
    %v4679 = vand.u32 %v3271, 4294901760
    %4680 = vmatpush.msra.mxu0 %v4679
    %v4681 = vand.u32 %v3267, 4294901760
    %4682 = vmatpush.msra.mxu0 %v4681
    %v4683 = vand.u32 %v3263, 4294901760
    %4684 = vmatpush.msra.mxu0 %v4683
    %v4685 = vand.u32 %v3259, 4294901760
    %4686 = vmatpush.msra.mxu0 %v4685
    %v4687 = vand.u32 %v3255, 4294901760
    %4688 = vmatpush.msra.mxu0 %v4687
    %v4689 = vand.u32 %v3187, 4294901760
    %v4690 = vsub.f32 %v3187, %v4689
    %v4691 = vand.u32 %v4690, 4294901760
    %4692 = vmatmul.f32.gmra.mxu0 %v4691
    %v4693 = vpop.f32.mrf.mxu0
    %v4694 = vadd.f32 %v4650, %v4693
    %v4695 = vand.u32 %v3189, 4294901760
    %v4696 = vsub.f32 %v3189, %v4695
    %v4697 = vand.u32 %v4696, 4294901760
    %4698 = vmatmul.f32.gmra.mxu0 %v4697
    %v4699 = vpop.f32.mrf.mxu0
    %v4700 = vadd.f32 %v4655, %v4699
    %4701 = vdwg.mxu0
    %v4702 = vand.u32 %v3315, 4294901760
    %v4703 = vsub.f32 %v3315, %v4702
    %v4704 = vand.u32 %v4703, 4294901760
    %4705 = vmatpush.msra.mxu0 %v4704
    %v4706 = vand.u32 %v3311, 4294901760
    %v4707 = vsub.f32 %v3311, %v4706
    %v4708 = vand.u32 %v4707, 4294901760
    %4709 = vmatpush.msra.mxu0 %v4708
    %v4710 = vand.u32 %v3307, 4294901760
    %v4711 = vsub.f32 %v3307, %v4710
    %v4712 = vand.u32 %v4711, 4294901760
    %4713 = vmatpush.msra.mxu0 %v4712
    %v4714 = vand.u32 %v3303, 4294901760
    %v4715 = vsub.f32 %v3303, %v4714
    %v4716 = vand.u32 %v4715, 4294901760
    %4717 = vmatpush.msra.mxu0 %v4716
    %v4718 = vand.u32 %v3299, 4294901760
    %v4719 = vsub.f32 %v3299, %v4718
    %v4720 = vand.u32 %v4719, 4294901760
    %4721 = vmatpush.msra.mxu0 %v4720
    %v4722 = vand.u32 %v3295, 4294901760
    %v4723 = vsub.f32 %v3295, %v4722
    %v4724 = vand.u32 %v4723, 4294901760
    %4725 = vmatpush.msra.mxu0 %v4724
    %v4726 = vand.u32 %v3291, 4294901760
    %v4727 = vsub.f32 %v3291, %v4726
    %v4728 = vand.u32 %v4727, 4294901760
    %4729 = vmatpush.msra.mxu0 %v4728
    %v4730 = vand.u32 %v3287, 4294901760
    %v4731 = vsub.f32 %v3287, %v4730
    %v4732 = vand.u32 %v4731, 4294901760
    %4733 = vmatpush.msra.mxu0 %v4732
    %v4734 = vand.u32 %v3283, 4294901760
    %v4735 = vsub.f32 %v3283, %v4734
    %v4736 = vand.u32 %v4735, 4294901760
    %4737 = vmatpush.msra.mxu0 %v4736
    %v4738 = vand.u32 %v3279, 4294901760
    %v4739 = vsub.f32 %v3279, %v4738
    %v4740 = vand.u32 %v4739, 4294901760
    %4741 = vmatpush.msra.mxu0 %v4740
    %v4742 = vand.u32 %v3275, 4294901760
    %v4743 = vsub.f32 %v3275, %v4742
    %v4744 = vand.u32 %v4743, 4294901760
    %4745 = vmatpush.msra.mxu0 %v4744
    %v4746 = vand.u32 %v3271, 4294901760
    %v4747 = vsub.f32 %v3271, %v4746
    %v4748 = vand.u32 %v4747, 4294901760
    %4749 = vmatpush.msra.mxu0 %v4748
    %v4750 = vand.u32 %v3267, 4294901760
    %v4751 = vsub.f32 %v3267, %v4750
    %v4752 = vand.u32 %v4751, 4294901760
    %4753 = vmatpush.msra.mxu0 %v4752
    %v4754 = vand.u32 %v3263, 4294901760
    %v4755 = vsub.f32 %v3263, %v4754
    %v4756 = vand.u32 %v4755, 4294901760
    %4757 = vmatpush.msra.mxu0 %v4756
    %v4758 = vand.u32 %v3259, 4294901760
    %v4759 = vsub.f32 %v3259, %v4758
    %v4760 = vand.u32 %v4759, 4294901760
    %4761 = vmatpush.msra.mxu0 %v4760
    %v4762 = vand.u32 %v3255, 4294901760
    %v4763 = vsub.f32 %v3255, %v4762
    %v4764 = vand.u32 %v4763, 4294901760
    %4765 = vmatpush.msra.mxu0 %v4764
    %v4766 = vand.u32 %v3187, 4294901760
    %4767 = vmatmul.f32.gmra.mxu0 %v4766
    %v4768 = vpop.f32.mrf.mxu0
    %v4769 = vadd.f32 %v4694, %v4768
    %v4770 = vand.u32 %v3189, 4294901760
    %4771 = vmatmul.f32.gmra.mxu0 %v4770
    %v4772 = vpop.f32.mrf.mxu0
    %v4773 = vadd.f32 %v4700, %v4772
    %4774 = vdwg.mxu0
    %v4775 = vand.u32 %v3315, 4294901760
    %4776 = vmatpush.msra.mxu0 %v4775
    %v4777 = vand.u32 %v3311, 4294901760
    %4778 = vmatpush.msra.mxu0 %v4777
    %v4779 = vand.u32 %v3307, 4294901760
    %4780 = vmatpush.msra.mxu0 %v4779
    %v4781 = vand.u32 %v3303, 4294901760
    %4782 = vmatpush.msra.mxu0 %v4781
    %v4783 = vand.u32 %v3299, 4294901760
    %4784 = vmatpush.msra.mxu0 %v4783
    %v4785 = vand.u32 %v3295, 4294901760
    %4786 = vmatpush.msra.mxu0 %v4785
    %v4787 = vand.u32 %v3291, 4294901760
    %4788 = vmatpush.msra.mxu0 %v4787
    %v4789 = vand.u32 %v3287, 4294901760
    %4790 = vmatpush.msra.mxu0 %v4789
    %v4791 = vand.u32 %v3283, 4294901760
    %4792 = vmatpush.msra.mxu0 %v4791
    %v4793 = vand.u32 %v3279, 4294901760
    %4794 = vmatpush.msra.mxu0 %v4793
    %v4795 = vand.u32 %v3275, 4294901760
    %4796 = vmatpush.msra.mxu0 %v4795
    %v4797 = vand.u32 %v3271, 4294901760
    %4798 = vmatpush.msra.mxu0 %v4797
    %v4799 = vand.u32 %v3267, 4294901760
    %4800 = vmatpush.msra.mxu0 %v4799
    %v4801 = vand.u32 %v3263, 4294901760
    %4802 = vmatpush.msra.mxu0 %v4801
    %v4803 = vand.u32 %v3259, 4294901760
    %4804 = vmatpush.msra.mxu0 %v4803
    %v4805 = vand.u32 %v3255, 4294901760
    %4806 = vmatpush.msra.mxu0 %v4805
    %v4807 = vand.u32 %v3187, 4294901760
    %4808 = vmatmul.f32.gmra.mxu0 %v4807
    %v4809 = vpop.f32.mrf.mxu0
    %v4810 = vadd.f32 %v4769, %v4809
    %v4811 = vand.u32 %v3189, 4294901760
    %4812 = vmatmul.f32.gmra.mxu0 %v4811
    %v4813 = vpop.f32.mrf.mxu0
    %v4814 = vadd.f32 %v4773, %v4813
    %4815 = vdwg.mxu0
    %v4816 = vand.u32 %v3252, 4294901760
    %4817 = vmatpush.msra.mxu0 %v4816
    %v4818 = vand.u32 %v3248, 4294901760
    %4819 = vmatpush.msra.mxu0 %v4818
    %v4820 = vand.u32 %v3244, 4294901760
    %4821 = vmatpush.msra.mxu0 %v4820
    %v4822 = vand.u32 %v3240, 4294901760
    %4823 = vmatpush.msra.mxu0 %v4822
    %v4824 = vand.u32 %v3236, 4294901760
    %4825 = vmatpush.msra.mxu0 %v4824
    %v4826 = vand.u32 %v3232, 4294901760
    %4827 = vmatpush.msra.mxu0 %v4826
    %v4828 = vand.u32 %v3228, 4294901760
    %4829 = vmatpush.msra.mxu0 %v4828
    %v4830 = vand.u32 %v3224, 4294901760
    %4831 = vmatpush.msra.mxu0 %v4830
    %v4832 = vand.u32 %v3220, 4294901760
    %4833 = vmatpush.msra.mxu0 %v4832
    %v4834 = vand.u32 %v3216, 4294901760
    %4835 = vmatpush.msra.mxu0 %v4834
    %v4836 = vand.u32 %v3212, 4294901760
    %4837 = vmatpush.msra.mxu0 %v4836
    %v4838 = vand.u32 %v3208, 4294901760
    %4839 = vmatpush.msra.mxu0 %v4838
    %v4840 = vand.u32 %v3204, 4294901760
    %4841 = vmatpush.msra.mxu0 %v4840
    %v4842 = vand.u32 %v3200, 4294901760
    %4843 = vmatpush.msra.mxu0 %v4842
    %v4844 = vand.u32 %v3196, 4294901760
    %4845 = vmatpush.msra.mxu0 %v4844
    %v4846 = vand.u32 %v3192, 4294901760
    %4847 = vmatpush.msra.mxu0 %v4846
    %v4848 = vand.u32 %v3186, 4294901760
    %v4849 = vsub.f32 %v3186, %v4848
    %v4850 = vand.u32 %v4849, 4294901760
    %v4851 = vsub.f32 %v4849, %v4850
    %v4852 = vand.u32 %v4851, 4294901760
    %4853 = vmatmul.f32.gmra.mxu0 %v4852
    %v4854 = vpop.f32.mrf.mxu0
    %v4855 = vadd.f32 %v3322, %v4854
    %v4856 = vand.u32 %v3188, 4294901760
    %v4857 = vsub.f32 %v3188, %v4856
    %v4858 = vand.u32 %v4857, 4294901760
    %v4859 = vsub.f32 %v4857, %v4858
    %v4860 = vand.u32 %v4859, 4294901760
    %4861 = vmatmul.f32.gmra.mxu0 %v4860
    %v4862 = vpop.f32.mrf.mxu0
    %v4863 = vadd.f32 %v3322, %v4862
    %4864 = vdwg.mxu0
    %v4865 = vand.u32 %v3252, 4294901760
    %v4866 = vsub.f32 %v3252, %v4865
    %v4867 = vand.u32 %v4866, 4294901760
    %v4868 = vsub.f32 %v4866, %v4867
    %v4869 = vand.u32 %v4868, 4294901760
    %4870 = vmatpush.msra.mxu0 %v4869
    %v4871 = vand.u32 %v3248, 4294901760
    %v4872 = vsub.f32 %v3248, %v4871
    %v4873 = vand.u32 %v4872, 4294901760
    %v4874 = vsub.f32 %v4872, %v4873
    %v4875 = vand.u32 %v4874, 4294901760
    %4876 = vmatpush.msra.mxu0 %v4875
    %v4877 = vand.u32 %v3244, 4294901760
    %v4878 = vsub.f32 %v3244, %v4877
    %v4879 = vand.u32 %v4878, 4294901760
    %v4880 = vsub.f32 %v4878, %v4879
    %v4881 = vand.u32 %v4880, 4294901760
    %4882 = vmatpush.msra.mxu0 %v4881
    %v4883 = vand.u32 %v3240, 4294901760
    %v4884 = vsub.f32 %v3240, %v4883
    %v4885 = vand.u32 %v4884, 4294901760
    %v4886 = vsub.f32 %v4884, %v4885
    %v4887 = vand.u32 %v4886, 4294901760
    %4888 = vmatpush.msra.mxu0 %v4887
    %v4889 = vand.u32 %v3236, 4294901760
    %v4890 = vsub.f32 %v3236, %v4889
    %v4891 = vand.u32 %v4890, 4294901760
    %v4892 = vsub.f32 %v4890, %v4891
    %v4893 = vand.u32 %v4892, 4294901760
    %4894 = vmatpush.msra.mxu0 %v4893
    %v4895 = vand.u32 %v3232, 4294901760
    %v4896 = vsub.f32 %v3232, %v4895
    %v4897 = vand.u32 %v4896, 4294901760
    %v4898 = vsub.f32 %v4896, %v4897
    %v4899 = vand.u32 %v4898, 4294901760
    %4900 = vmatpush.msra.mxu0 %v4899
    %v4901 = vand.u32 %v3228, 4294901760
    %v4902 = vsub.f32 %v3228, %v4901
    %v4903 = vand.u32 %v4902, 4294901760
    %v4904 = vsub.f32 %v4902, %v4903
    %v4905 = vand.u32 %v4904, 4294901760
    %4906 = vmatpush.msra.mxu0 %v4905
    %v4907 = vand.u32 %v3224, 4294901760
    %v4908 = vsub.f32 %v3224, %v4907
    %v4909 = vand.u32 %v4908, 4294901760
    %v4910 = vsub.f32 %v4908, %v4909
    %v4911 = vand.u32 %v4910, 4294901760
    %4912 = vmatpush.msra.mxu0 %v4911
    %v4913 = vand.u32 %v3220, 4294901760
    %v4914 = vsub.f32 %v3220, %v4913
    %v4915 = vand.u32 %v4914, 4294901760
    %v4916 = vsub.f32 %v4914, %v4915
    %v4917 = vand.u32 %v4916, 4294901760
    %4918 = vmatpush.msra.mxu0 %v4917
    %v4919 = vand.u32 %v3216, 4294901760
    %v4920 = vsub.f32 %v3216, %v4919
    %v4921 = vand.u32 %v4920, 4294901760
    %v4922 = vsub.f32 %v4920, %v4921
    %v4923 = vand.u32 %v4922, 4294901760
    %4924 = vmatpush.msra.mxu0 %v4923
    %v4925 = vand.u32 %v3212, 4294901760
    %v4926 = vsub.f32 %v3212, %v4925
    %v4927 = vand.u32 %v4926, 4294901760
    %v4928 = vsub.f32 %v4926, %v4927
    %v4929 = vand.u32 %v4928, 4294901760
    %4930 = vmatpush.msra.mxu0 %v4929
    %v4931 = vand.u32 %v3208, 4294901760
    %v4932 = vsub.f32 %v3208, %v4931
    %v4933 = vand.u32 %v4932, 4294901760
    %v4934 = vsub.f32 %v4932, %v4933
    %v4935 = vand.u32 %v4934, 4294901760
    %4936 = vmatpush.msra.mxu0 %v4935
    %v4937 = vand.u32 %v3204, 4294901760
    %v4938 = vsub.f32 %v3204, %v4937
    %v4939 = vand.u32 %v4938, 4294901760
    %v4940 = vsub.f32 %v4938, %v4939
    %v4941 = vand.u32 %v4940, 4294901760
    %4942 = vmatpush.msra.mxu0 %v4941
    %v4943 = vand.u32 %v3200, 4294901760
    %v4944 = vsub.f32 %v3200, %v4943
    %v4945 = vand.u32 %v4944, 4294901760
    %v4946 = vsub.f32 %v4944, %v4945
    %v4947 = vand.u32 %v4946, 4294901760
    %4948 = vmatpush.msra.mxu0 %v4947
    %v4949 = vand.u32 %v3196, 4294901760
    %v4950 = vsub.f32 %v3196, %v4949
    %v4951 = vand.u32 %v4950, 4294901760
    %v4952 = vsub.f32 %v4950, %v4951
    %v4953 = vand.u32 %v4952, 4294901760
    %4954 = vmatpush.msra.mxu0 %v4953
    %v4955 = vand.u32 %v3192, 4294901760
    %v4956 = vsub.f32 %v3192, %v4955
    %v4957 = vand.u32 %v4956, 4294901760
    %v4958 = vsub.f32 %v4956, %v4957
    %v4959 = vand.u32 %v4958, 4294901760
    %4960 = vmatpush.msra.mxu0 %v4959
    %v4961 = vand.u32 %v3186, 4294901760
    %4962 = vmatmul.f32.gmra.mxu0 %v4961
    %v4963 = vpop.f32.mrf.mxu0
    %v4964 = vadd.f32 %v4855, %v4963
    %v4965 = vand.u32 %v3188, 4294901760
    %4966 = vmatmul.f32.gmra.mxu0 %v4965
    %v4967 = vpop.f32.mrf.mxu0
    %v4968 = vadd.f32 %v4863, %v4967
    %4969 = vdwg.mxu0
    %v4970 = vand.u32 %v3252, 4294901760
    %v4971 = vsub.f32 %v3252, %v4970
    %4972 = vmatpush.msra.mxu0 %v4971
    %v4973 = vand.u32 %v3248, 4294901760
    %v4974 = vsub.f32 %v3248, %v4973
    %4975 = vmatpush.msra.mxu0 %v4974
    %v4976 = vand.u32 %v3244, 4294901760
    %v4977 = vsub.f32 %v3244, %v4976
    %4978 = vmatpush.msra.mxu0 %v4977
    %v4979 = vand.u32 %v3240, 4294901760
    %v4980 = vsub.f32 %v3240, %v4979
    %4981 = vmatpush.msra.mxu0 %v4980
    %v4982 = vand.u32 %v3236, 4294901760
    %v4983 = vsub.f32 %v3236, %v4982
    %4984 = vmatpush.msra.mxu0 %v4983
    %v4985 = vand.u32 %v3232, 4294901760
    %v4986 = vsub.f32 %v3232, %v4985
    %4987 = vmatpush.msra.mxu0 %v4986
    %v4988 = vand.u32 %v3228, 4294901760
    %v4989 = vsub.f32 %v3228, %v4988
    %4990 = vmatpush.msra.mxu0 %v4989
    %v4991 = vand.u32 %v3224, 4294901760
    %v4992 = vsub.f32 %v3224, %v4991
    %4993 = vmatpush.msra.mxu0 %v4992
    %v4994 = vand.u32 %v3220, 4294901760
    %v4995 = vsub.f32 %v3220, %v4994
    %4996 = vmatpush.msra.mxu0 %v4995
    %v4997 = vand.u32 %v3216, 4294901760
    %v4998 = vsub.f32 %v3216, %v4997
    %4999 = vmatpush.msra.mxu0 %v4998
    %v5000 = vand.u32 %v3212, 4294901760
    %v5001 = vsub.f32 %v3212, %v5000
    %5002 = vmatpush.msra.mxu0 %v5001
    %v5003 = vand.u32 %v3208, 4294901760
    %v5004 = vsub.f32 %v3208, %v5003
    %5005 = vmatpush.msra.mxu0 %v5004
    %v5006 = vand.u32 %v3204, 4294901760
    %v5007 = vsub.f32 %v3204, %v5006
    %5008 = vmatpush.msra.mxu0 %v5007
    %v5009 = vand.u32 %v3200, 4294901760
    %v5010 = vsub.f32 %v3200, %v5009
    %5011 = vmatpush.msra.mxu0 %v5010
    %v5012 = vand.u32 %v3196, 4294901760
    %v5013 = vsub.f32 %v3196, %v5012
    %5014 = vmatpush.msra.mxu0 %v5013
    %v5015 = vand.u32 %v3192, 4294901760
    %v5016 = vsub.f32 %v3192, %v5015
    %5017 = vmatpush.msra.mxu0 %v5016
    %v5018 = vand.u32 %v3186, 4294901760
    %v5019 = vsub.f32 %v3186, %v5018
    %5020 = vmatmul.f32.gmra.mxu0 %v5019
    %v5021 = vpop.f32.mrf.mxu0
    %v5022 = vadd.f32 %v4964, %v5021
    %v5023 = vand.u32 %v3188, 4294901760
    %v5024 = vsub.f32 %v3188, %v5023
    %5025 = vmatmul.f32.gmra.mxu0 %v5024
    %v5026 = vpop.f32.mrf.mxu0
    %v5027 = vadd.f32 %v4968, %v5026
    %5028 = vdwg.mxu0
    %v5029 = vand.u32 %v3252, 4294901760
    %5030 = vmatpush.msra.mxu0 %v5029
    %v5031 = vand.u32 %v3248, 4294901760
    %5032 = vmatpush.msra.mxu0 %v5031
    %v5033 = vand.u32 %v3244, 4294901760
    %5034 = vmatpush.msra.mxu0 %v5033
    %v5035 = vand.u32 %v3240, 4294901760
    %5036 = vmatpush.msra.mxu0 %v5035
    %v5037 = vand.u32 %v3236, 4294901760
    %5038 = vmatpush.msra.mxu0 %v5037
    %v5039 = vand.u32 %v3232, 4294901760
    %5040 = vmatpush.msra.mxu0 %v5039
    %v5041 = vand.u32 %v3228, 4294901760
    %5042 = vmatpush.msra.mxu0 %v5041
    %v5043 = vand.u32 %v3224, 4294901760
    %5044 = vmatpush.msra.mxu0 %v5043
    %v5045 = vand.u32 %v3220, 4294901760
    %5046 = vmatpush.msra.mxu0 %v5045
    %v5047 = vand.u32 %v3216, 4294901760
    %5048 = vmatpush.msra.mxu0 %v5047
    %v5049 = vand.u32 %v3212, 4294901760
    %5050 = vmatpush.msra.mxu0 %v5049
    %v5051 = vand.u32 %v3208, 4294901760
    %5052 = vmatpush.msra.mxu0 %v5051
    %v5053 = vand.u32 %v3204, 4294901760
    %5054 = vmatpush.msra.mxu0 %v5053
    %v5055 = vand.u32 %v3200, 4294901760
    %5056 = vmatpush.msra.mxu0 %v5055
    %v5057 = vand.u32 %v3196, 4294901760
    %5058 = vmatpush.msra.mxu0 %v5057
    %v5059 = vand.u32 %v3192, 4294901760
    %5060 = vmatpush.msra.mxu0 %v5059
    %v5061 = vand.u32 %v3186, 4294901760
    %v5062 = vsub.f32 %v3186, %v5061
    %v5063 = vand.u32 %v5062, 4294901760
    %5064 = vmatmul.f32.gmra.mxu0 %v5063
    %v5065 = vpop.f32.mrf.mxu0
    %v5066 = vadd.f32 %v5022, %v5065
    %v5067 = vand.u32 %v3188, 4294901760
    %v5068 = vsub.f32 %v3188, %v5067
    %v5069 = vand.u32 %v5068, 4294901760
    %5070 = vmatmul.f32.gmra.mxu0 %v5069
    %v5071 = vpop.f32.mrf.mxu0
    %v5072 = vadd.f32 %v5027, %v5071
    %5073 = vdwg.mxu0
    %v5074 = vand.u32 %v3252, 4294901760
    %v5075 = vsub.f32 %v3252, %v5074
    %v5076 = vand.u32 %v5075, 4294901760
    %5077 = vmatpush.msra.mxu0 %v5076
    %v5078 = vand.u32 %v3248, 4294901760
    %v5079 = vsub.f32 %v3248, %v5078
    %v5080 = vand.u32 %v5079, 4294901760
    %5081 = vmatpush.msra.mxu0 %v5080
    %v5082 = vand.u32 %v3244, 4294901760
    %v5083 = vsub.f32 %v3244, %v5082
    %v5084 = vand.u32 %v5083, 4294901760
    %5085 = vmatpush.msra.mxu0 %v5084
    %v5086 = vand.u32 %v3240, 4294901760
    %v5087 = vsub.f32 %v3240, %v5086
    %v5088 = vand.u32 %v5087, 4294901760
    %5089 = vmatpush.msra.mxu0 %v5088
    %v5090 = vand.u32 %v3236, 4294901760
    %v5091 = vsub.f32 %v3236, %v5090
    %v5092 = vand.u32 %v5091, 4294901760
    %5093 = vmatpush.msra.mxu0 %v5092
    %v5094 = vand.u32 %v3232, 4294901760
    %v5095 = vsub.f32 %v3232, %v5094
    %v5096 = vand.u32 %v5095, 4294901760
    %5097 = vmatpush.msra.mxu0 %v5096
    %v5098 = vand.u32 %v3228, 4294901760
    %v5099 = vsub.f32 %v3228, %v5098
    %v5100 = vand.u32 %v5099, 4294901760
    %5101 = vmatpush.msra.mxu0 %v5100
    %v5102 = vand.u32 %v3224, 4294901760
    %v5103 = vsub.f32 %v3224, %v5102
    %v5104 = vand.u32 %v5103, 4294901760
    %5105 = vmatpush.msra.mxu0 %v5104
    %v5106 = vand.u32 %v3220, 4294901760
    %v5107 = vsub.f32 %v3220, %v5106
    %v5108 = vand.u32 %v5107, 4294901760
    %5109 = vmatpush.msra.mxu0 %v5108
    %v5110 = vand.u32 %v3216, 4294901760
    %v5111 = vsub.f32 %v3216, %v5110
    %v5112 = vand.u32 %v5111, 4294901760
    %5113 = vmatpush.msra.mxu0 %v5112
    %v5114 = vand.u32 %v3212, 4294901760
    %v5115 = vsub.f32 %v3212, %v5114
    %v5116 = vand.u32 %v5115, 4294901760
    %5117 = vmatpush.msra.mxu0 %v5116
    %v5118 = vand.u32 %v3208, 4294901760
    %v5119 = vsub.f32 %v3208, %v5118
    %v5120 = vand.u32 %v5119, 4294901760
    %5121 = vmatpush.msra.mxu0 %v5120
    %v5122 = vand.u32 %v3204, 4294901760
    %v5123 = vsub.f32 %v3204, %v5122
    %v5124 = vand.u32 %v5123, 4294901760
    %5125 = vmatpush.msra.mxu0 %v5124
    %v5126 = vand.u32 %v3200, 4294901760
    %v5127 = vsub.f32 %v3200, %v5126
    %v5128 = vand.u32 %v5127, 4294901760
    %5129 = vmatpush.msra.mxu0 %v5128
    %v5130 = vand.u32 %v3196, 4294901760
    %v5131 = vsub.f32 %v3196, %v5130
    %v5132 = vand.u32 %v5131, 4294901760
    %5133 = vmatpush.msra.mxu0 %v5132
    %v5134 = vand.u32 %v3192, 4294901760
    %v5135 = vsub.f32 %v3192, %v5134
    %v5136 = vand.u32 %v5135, 4294901760
    %5137 = vmatpush.msra.mxu0 %v5136
    %v5138 = vand.u32 %v3186, 4294901760
    %5139 = vmatmul.f32.gmra.mxu0 %v5138
    %v5140 = vpop.f32.mrf.mxu0
    %v5141 = vadd.f32 %v5066, %v5140
    %v5142 = vand.u32 %v3188, 4294901760
    %5143 = vmatmul.f32.gmra.mxu0 %v5142
    %v5144 = vpop.f32.mrf.mxu0
    %v5145 = vadd.f32 %v5072, %v5144
    %5146 = vdwg.mxu0
    %v5147 = vand.u32 %v3252, 4294901760
    %5148 = vmatpush.msra.mxu0 %v5147
    %v5149 = vand.u32 %v3248, 4294901760
    %5150 = vmatpush.msra.mxu0 %v5149
    %v5151 = vand.u32 %v3244, 4294901760
    %5152 = vmatpush.msra.mxu0 %v5151
    %v5153 = vand.u32 %v3240, 4294901760
    %5154 = vmatpush.msra.mxu0 %v5153
    %v5155 = vand.u32 %v3236, 4294901760
    %5156 = vmatpush.msra.mxu0 %v5155
    %v5157 = vand.u32 %v3232, 4294901760
    %5158 = vmatpush.msra.mxu0 %v5157
    %v5159 = vand.u32 %v3228, 4294901760
    %5160 = vmatpush.msra.mxu0 %v5159
    %v5161 = vand.u32 %v3224, 4294901760
    %5162 = vmatpush.msra.mxu0 %v5161
    %v5163 = vand.u32 %v3220, 4294901760
    %5164 = vmatpush.msra.mxu0 %v5163
    %v5165 = vand.u32 %v3216, 4294901760
    %5166 = vmatpush.msra.mxu0 %v5165
    %v5167 = vand.u32 %v3212, 4294901760
    %5168 = vmatpush.msra.mxu0 %v5167
    %v5169 = vand.u32 %v3208, 4294901760
    %5170 = vmatpush.msra.mxu0 %v5169
    %v5171 = vand.u32 %v3204, 4294901760
    %5172 = vmatpush.msra.mxu0 %v5171
    %v5173 = vand.u32 %v3200, 4294901760
    %5174 = vmatpush.msra.mxu0 %v5173
    %v5175 = vand.u32 %v3196, 4294901760
    %5176 = vmatpush.msra.mxu0 %v5175
    %v5177 = vand.u32 %v3192, 4294901760
    %5178 = vmatpush.msra.mxu0 %v5177
    %v5179 = vand.u32 %v3186, 4294901760
    %5180 = vmatmul.f32.gmra.mxu0 %v5179
    %v5181 = vpop.f32.mrf.mxu0
    %v5182 = vadd.f32 %v5141, %v5181
    %v5183 = vand.u32 %v3188, 4294901760
    %5184 = vmatmul.f32.gmra.mxu0 %v5183
    %v5185 = vpop.f32.mrf.mxu0
    %v5186 = vadd.f32 %v5145, %v5185
    %5187 = vdwg.mxu0
    %v5188 = vand.u32 %v3316, 4294901760
    %5189 = vmatpush.msra.mxu0 %v5188
    %v5190 = vand.u32 %v3312, 4294901760
    %5191 = vmatpush.msra.mxu0 %v5190
    %v5192 = vand.u32 %v3308, 4294901760
    %5193 = vmatpush.msra.mxu0 %v5192
    %v5194 = vand.u32 %v3304, 4294901760
    %5195 = vmatpush.msra.mxu0 %v5194
    %v5196 = vand.u32 %v3300, 4294901760
    %5197 = vmatpush.msra.mxu0 %v5196
    %v5198 = vand.u32 %v3296, 4294901760
    %5199 = vmatpush.msra.mxu0 %v5198
    %v5200 = vand.u32 %v3292, 4294901760
    %5201 = vmatpush.msra.mxu0 %v5200
    %v5202 = vand.u32 %v3288, 4294901760
    %5203 = vmatpush.msra.mxu0 %v5202
    %v5204 = vand.u32 %v3284, 4294901760
    %5205 = vmatpush.msra.mxu0 %v5204
    %v5206 = vand.u32 %v3280, 4294901760
    %5207 = vmatpush.msra.mxu0 %v5206
    %v5208 = vand.u32 %v3276, 4294901760
    %5209 = vmatpush.msra.mxu0 %v5208
    %v5210 = vand.u32 %v3272, 4294901760
    %5211 = vmatpush.msra.mxu0 %v5210
    %v5212 = vand.u32 %v3268, 4294901760
    %5213 = vmatpush.msra.mxu0 %v5212
    %v5214 = vand.u32 %v3264, 4294901760
    %5215 = vmatpush.msra.mxu0 %v5214
    %v5216 = vand.u32 %v3260, 4294901760
    %5217 = vmatpush.msra.mxu0 %v5216
    %v5218 = vand.u32 %v3256, 4294901760
    %5219 = vmatpush.msra.mxu0 %v5218
    %v5220 = vand.u32 %v3187, 4294901760
    %v5221 = vsub.f32 %v3187, %v5220
    %v5222 = vand.u32 %v5221, 4294901760
    %v5223 = vsub.f32 %v5221, %v5222
    %v5224 = vand.u32 %v5223, 4294901760
    %5225 = vmatmul.f32.gmra.mxu0 %v5224
    %v5226 = vpop.f32.mrf.mxu0
    %v5227 = vadd.f32 %v5182, %v5226
    %v5228 = vand.u32 %v3189, 4294901760
    %v5229 = vsub.f32 %v3189, %v5228
    %v5230 = vand.u32 %v5229, 4294901760
    %v5231 = vsub.f32 %v5229, %v5230
    %v5232 = vand.u32 %v5231, 4294901760
    %5233 = vmatmul.f32.gmra.mxu0 %v5232
    %v5234 = vpop.f32.mrf.mxu0
    %v5235 = vadd.f32 %v5186, %v5234
    %5236 = vdwg.mxu0
    %v5237 = vand.u32 %v3316, 4294901760
    %v5238 = vsub.f32 %v3316, %v5237
    %v5239 = vand.u32 %v5238, 4294901760
    %v5240 = vsub.f32 %v5238, %v5239
    %v5241 = vand.u32 %v5240, 4294901760
    %5242 = vmatpush.msra.mxu0 %v5241
    %v5243 = vand.u32 %v3312, 4294901760
    %v5244 = vsub.f32 %v3312, %v5243
    %v5245 = vand.u32 %v5244, 4294901760
    %v5246 = vsub.f32 %v5244, %v5245
    %v5247 = vand.u32 %v5246, 4294901760
    %5248 = vmatpush.msra.mxu0 %v5247
    %v5249 = vand.u32 %v3308, 4294901760
    %v5250 = vsub.f32 %v3308, %v5249
    %v5251 = vand.u32 %v5250, 4294901760
    %v5252 = vsub.f32 %v5250, %v5251
    %v5253 = vand.u32 %v5252, 4294901760
    %5254 = vmatpush.msra.mxu0 %v5253
    %v5255 = vand.u32 %v3304, 4294901760
    %v5256 = vsub.f32 %v3304, %v5255
    %v5257 = vand.u32 %v5256, 4294901760
    %v5258 = vsub.f32 %v5256, %v5257
    %v5259 = vand.u32 %v5258, 4294901760
    %5260 = vmatpush.msra.mxu0 %v5259
    %v5261 = vand.u32 %v3300, 4294901760
    %v5262 = vsub.f32 %v3300, %v5261
    %v5263 = vand.u32 %v5262, 4294901760
    %v5264 = vsub.f32 %v5262, %v5263
    %v5265 = vand.u32 %v5264, 4294901760
    %5266 = vmatpush.msra.mxu0 %v5265
    %v5267 = vand.u32 %v3296, 4294901760
    %v5268 = vsub.f32 %v3296, %v5267
    %v5269 = vand.u32 %v5268, 4294901760
    %v5270 = vsub.f32 %v5268, %v5269
    %v5271 = vand.u32 %v5270, 4294901760
    %5272 = vmatpush.msra.mxu0 %v5271
    %v5273 = vand.u32 %v3292, 4294901760
    %v5274 = vsub.f32 %v3292, %v5273
    %v5275 = vand.u32 %v5274, 4294901760
    %v5276 = vsub.f32 %v5274, %v5275
    %v5277 = vand.u32 %v5276, 4294901760
    %5278 = vmatpush.msra.mxu0 %v5277
    %v5279 = vand.u32 %v3288, 4294901760
    %v5280 = vsub.f32 %v3288, %v5279
    %v5281 = vand.u32 %v5280, 4294901760
    %v5282 = vsub.f32 %v5280, %v5281
    %v5283 = vand.u32 %v5282, 4294901760
    %5284 = vmatpush.msra.mxu0 %v5283
    %v5285 = vand.u32 %v3284, 4294901760
    %v5286 = vsub.f32 %v3284, %v5285
    %v5287 = vand.u32 %v5286, 4294901760
    %v5288 = vsub.f32 %v5286, %v5287
    %v5289 = vand.u32 %v5288, 4294901760
    %5290 = vmatpush.msra.mxu0 %v5289
    %v5291 = vand.u32 %v3280, 4294901760
    %v5292 = vsub.f32 %v3280, %v5291
    %v5293 = vand.u32 %v5292, 4294901760
    %v5294 = vsub.f32 %v5292, %v5293
    %v5295 = vand.u32 %v5294, 4294901760
    %5296 = vmatpush.msra.mxu0 %v5295
    %v5297 = vand.u32 %v3276, 4294901760
    %v5298 = vsub.f32 %v3276, %v5297
    %v5299 = vand.u32 %v5298, 4294901760
    %v5300 = vsub.f32 %v5298, %v5299
    %v5301 = vand.u32 %v5300, 4294901760
    %5302 = vmatpush.msra.mxu0 %v5301
    %v5303 = vand.u32 %v3272, 4294901760
    %v5304 = vsub.f32 %v3272, %v5303
    %v5305 = vand.u32 %v5304, 4294901760
    %v5306 = vsub.f32 %v5304, %v5305
    %v5307 = vand.u32 %v5306, 4294901760
    %5308 = vmatpush.msra.mxu0 %v5307
    %v5309 = vand.u32 %v3268, 4294901760
    %v5310 = vsub.f32 %v3268, %v5309
    %v5311 = vand.u32 %v5310, 4294901760
    %v5312 = vsub.f32 %v5310, %v5311
    %v5313 = vand.u32 %v5312, 4294901760
    %5314 = vmatpush.msra.mxu0 %v5313
    %v5315 = vand.u32 %v3264, 4294901760
    %v5316 = vsub.f32 %v3264, %v5315
    %v5317 = vand.u32 %v5316, 4294901760
    %v5318 = vsub.f32 %v5316, %v5317
    %v5319 = vand.u32 %v5318, 4294901760
    %5320 = vmatpush.msra.mxu0 %v5319
    %v5321 = vand.u32 %v3260, 4294901760
    %v5322 = vsub.f32 %v3260, %v5321
    %v5323 = vand.u32 %v5322, 4294901760
    %v5324 = vsub.f32 %v5322, %v5323
    %v5325 = vand.u32 %v5324, 4294901760
    %5326 = vmatpush.msra.mxu0 %v5325
    %v5327 = vand.u32 %v3256, 4294901760
    %v5328 = vsub.f32 %v3256, %v5327
    %v5329 = vand.u32 %v5328, 4294901760
    %v5330 = vsub.f32 %v5328, %v5329
    %v5331 = vand.u32 %v5330, 4294901760
    %5332 = vmatpush.msra.mxu0 %v5331
    %v5333 = vand.u32 %v3187, 4294901760
    %5334 = vmatmul.f32.gmra.mxu0 %v5333
    %v5335 = vpop.f32.mrf.mxu0
    %v5336 = vadd.f32 %v5227, %v5335
    %v5337 = vand.u32 %v3189, 4294901760
    %5338 = vmatmul.f32.gmra.mxu0 %v5337
    %v5339 = vpop.f32.mrf.mxu0
    %v5340 = vadd.f32 %v5235, %v5339
    %5341 = vdwg.mxu0
    %v5342 = vand.u32 %v3316, 4294901760
    %v5343 = vsub.f32 %v3316, %v5342
    %5344 = vmatpush.msra.mxu0 %v5343
    %v5345 = vand.u32 %v3312, 4294901760
    %v5346 = vsub.f32 %v3312, %v5345
    %5347 = vmatpush.msra.mxu0 %v5346
    %v5348 = vand.u32 %v3308, 4294901760
    %v5349 = vsub.f32 %v3308, %v5348
    %5350 = vmatpush.msra.mxu0 %v5349
    %v5351 = vand.u32 %v3304, 4294901760
    %v5352 = vsub.f32 %v3304, %v5351
    %5353 = vmatpush.msra.mxu0 %v5352
    %v5354 = vand.u32 %v3300, 4294901760
    %v5355 = vsub.f32 %v3300, %v5354
    %5356 = vmatpush.msra.mxu0 %v5355
    %v5357 = vand.u32 %v3296, 4294901760
    %v5358 = vsub.f32 %v3296, %v5357
    %5359 = vmatpush.msra.mxu0 %v5358
    %v5360 = vand.u32 %v3292, 4294901760
    %v5361 = vsub.f32 %v3292, %v5360
    %5362 = vmatpush.msra.mxu0 %v5361
    %v5363 = vand.u32 %v3288, 4294901760
    %v5364 = vsub.f32 %v3288, %v5363
    %5365 = vmatpush.msra.mxu0 %v5364
    %v5366 = vand.u32 %v3284, 4294901760
    %v5367 = vsub.f32 %v3284, %v5366
    %5368 = vmatpush.msra.mxu0 %v5367
    %v5369 = vand.u32 %v3280, 4294901760
    %v5370 = vsub.f32 %v3280, %v5369
    %5371 = vmatpush.msra.mxu0 %v5370
    %v5372 = vand.u32 %v3276, 4294901760
    %v5373 = vsub.f32 %v3276, %v5372
    %5374 = vmatpush.msra.mxu0 %v5373
    %v5375 = vand.u32 %v3272, 4294901760
    %v5376 = vsub.f32 %v3272, %v5375
    %5377 = vmatpush.msra.mxu0 %v5376
    %v5378 = vand.u32 %v3268, 4294901760
    %v5379 = vsub.f32 %v3268, %v5378
    %5380 = vmatpush.msra.mxu0 %v5379
    %v5381 = vand.u32 %v3264, 4294901760
    %v5382 = vsub.f32 %v3264, %v5381
    %5383 = vmatpush.msra.mxu0 %v5382
    %v5384 = vand.u32 %v3260, 4294901760
    %v5385 = vsub.f32 %v3260, %v5384
    %5386 = vmatpush.msra.mxu0 %v5385
    %v5387 = vand.u32 %v3256, 4294901760
    %v5388 = vsub.f32 %v3256, %v5387
    %5389 = vmatpush.msra.mxu0 %v5388
    %v5390 = vand.u32 %v3187, 4294901760
    %v5391 = vsub.f32 %v3187, %v5390
    %5392 = vmatmul.f32.gmra.mxu0 %v5391
    %v5393 = vpop.f32.mrf.mxu0
    %v5394 = vadd.f32 %v5336, %v5393
    %v5395 = vand.u32 %v3189, 4294901760
    %v5396 = vsub.f32 %v3189, %v5395
    %5397 = vmatmul.f32.gmra.mxu0 %v5396
    %v5398 = vpop.f32.mrf.mxu0
    %v5399 = vadd.f32 %v5340, %v5398
    %5400 = vdwg.mxu0
    %v5401 = vand.u32 %v3316, 4294901760
    %5402 = vmatpush.msra.mxu0 %v5401
    %v5403 = vand.u32 %v3312, 4294901760
    %5404 = vmatpush.msra.mxu0 %v5403
    %v5405 = vand.u32 %v3308, 4294901760
    %5406 = vmatpush.msra.mxu0 %v5405
    %v5407 = vand.u32 %v3304, 4294901760
    %5408 = vmatpush.msra.mxu0 %v5407
    %v5409 = vand.u32 %v3300, 4294901760
    %5410 = vmatpush.msra.mxu0 %v5409
    %v5411 = vand.u32 %v3296, 4294901760
    %5412 = vmatpush.msra.mxu0 %v5411
    %v5413 = vand.u32 %v3292, 4294901760
    %5414 = vmatpush.msra.mxu0 %v5413
    %v5415 = vand.u32 %v3288, 4294901760
    %5416 = vmatpush.msra.mxu0 %v5415
    %v5417 = vand.u32 %v3284, 4294901760
    %5418 = vmatpush.msra.mxu0 %v5417
    %v5419 = vand.u32 %v3280, 4294901760
    %5420 = vmatpush.msra.mxu0 %v5419
    %v5421 = vand.u32 %v3276, 4294901760
    %5422 = vmatpush.msra.mxu0 %v5421
    %v5423 = vand.u32 %v3272, 4294901760
    %5424 = vmatpush.msra.mxu0 %v5423
    %v5425 = vand.u32 %v3268, 4294901760
    %5426 = vmatpush.msra.mxu0 %v5425
    %v5427 = vand.u32 %v3264, 4294901760
    %5428 = vmatpush.msra.mxu0 %v5427
    %v5429 = vand.u32 %v3260, 4294901760
    %5430 = vmatpush.msra.mxu0 %v5429
    %v5431 = vand.u32 %v3256, 4294901760
    %5432 = vmatpush.msra.mxu0 %v5431
    %v5433 = vand.u32 %v3187, 4294901760
    %v5434 = vsub.f32 %v3187, %v5433
    %v5435 = vand.u32 %v5434, 4294901760
    %5436 = vmatmul.f32.gmra.mxu0 %v5435
    %v5437 = vpop.f32.mrf.mxu0
    %v5438 = vadd.f32 %v5394, %v5437
    %v5439 = vand.u32 %v3189, 4294901760
    %v5440 = vsub.f32 %v3189, %v5439
    %v5441 = vand.u32 %v5440, 4294901760
    %5442 = vmatmul.f32.gmra.mxu0 %v5441
    %v5443 = vpop.f32.mrf.mxu0
    %v5444 = vadd.f32 %v5399, %v5443
    %5445 = vdwg.mxu0
    %v5446 = vand.u32 %v3316, 4294901760
    %v5447 = vsub.f32 %v3316, %v5446
    %v5448 = vand.u32 %v5447, 4294901760
    %5449 = vmatpush.msra.mxu0 %v5448
    %v5450 = vand.u32 %v3312, 4294901760
    %v5451 = vsub.f32 %v3312, %v5450
    %v5452 = vand.u32 %v5451, 4294901760
    %5453 = vmatpush.msra.mxu0 %v5452
    %v5454 = vand.u32 %v3308, 4294901760
    %v5455 = vsub.f32 %v3308, %v5454
    %v5456 = vand.u32 %v5455, 4294901760
    %5457 = vmatpush.msra.mxu0 %v5456
    %v5458 = vand.u32 %v3304, 4294901760
    %v5459 = vsub.f32 %v3304, %v5458
    %v5460 = vand.u32 %v5459, 4294901760
    %5461 = vmatpush.msra.mxu0 %v5460
    %v5462 = vand.u32 %v3300, 4294901760
    %v5463 = vsub.f32 %v3300, %v5462
    %v5464 = vand.u32 %v5463, 4294901760
    %5465 = vmatpush.msra.mxu0 %v5464
    %v5466 = vand.u32 %v3296, 4294901760
    %v5467 = vsub.f32 %v3296, %v5466
    %v5468 = vand.u32 %v5467, 4294901760
    %5469 = vmatpush.msra.mxu0 %v5468
    %v5470 = vand.u32 %v3292, 4294901760
    %v5471 = vsub.f32 %v3292, %v5470
    %v5472 = vand.u32 %v5471, 4294901760
    %5473 = vmatpush.msra.mxu0 %v5472
    %v5474 = vand.u32 %v3288, 4294901760
    %v5475 = vsub.f32 %v3288, %v5474
    %v5476 = vand.u32 %v5475, 4294901760
    %5477 = vmatpush.msra.mxu0 %v5476
    %v5478 = vand.u32 %v3284, 4294901760
    %v5479 = vsub.f32 %v3284, %v5478
    %v5480 = vand.u32 %v5479, 4294901760
    %5481 = vmatpush.msra.mxu0 %v5480
    %v5482 = vand.u32 %v3280, 4294901760
    %v5483 = vsub.f32 %v3280, %v5482
    %v5484 = vand.u32 %v5483, 4294901760
    %5485 = vmatpush.msra.mxu0 %v5484
    %v5486 = vand.u32 %v3276, 4294901760
    %v5487 = vsub.f32 %v3276, %v5486
    %v5488 = vand.u32 %v5487, 4294901760
    %5489 = vmatpush.msra.mxu0 %v5488
    %v5490 = vand.u32 %v3272, 4294901760
    %v5491 = vsub.f32 %v3272, %v5490
    %v5492 = vand.u32 %v5491, 4294901760
    %5493 = vmatpush.msra.mxu0 %v5492
    %v5494 = vand.u32 %v3268, 4294901760
    %v5495 = vsub.f32 %v3268, %v5494
    %v5496 = vand.u32 %v5495, 4294901760
    %5497 = vmatpush.msra.mxu0 %v5496
    %v5498 = vand.u32 %v3264, 4294901760
    %v5499 = vsub.f32 %v3264, %v5498
    %v5500 = vand.u32 %v5499, 4294901760
    %5501 = vmatpush.msra.mxu0 %v5500
    %v5502 = vand.u32 %v3260, 4294901760
    %v5503 = vsub.f32 %v3260, %v5502
    %v5504 = vand.u32 %v5503, 4294901760
    %5505 = vmatpush.msra.mxu0 %v5504
    %v5506 = vand.u32 %v3256, 4294901760
    %v5507 = vsub.f32 %v3256, %v5506
    %v5508 = vand.u32 %v5507, 4294901760
    %5509 = vmatpush.msra.mxu0 %v5508
    %v5510 = vand.u32 %v3187, 4294901760
    %5511 = vmatmul.f32.gmra.mxu0 %v5510
    %v5512 = vpop.f32.mrf.mxu0
    %v5513 = vadd.f32 %v5438, %v5512
    %v5514 = vand.u32 %v3189, 4294901760
    %5515 = vmatmul.f32.gmra.mxu0 %v5514
    %v5516 = vpop.f32.mrf.mxu0
    %v5517 = vadd.f32 %v5444, %v5516
    %5518 = vdwg.mxu0
    %v5519 = vand.u32 %v3316, 4294901760
    %5520 = vmatpush.msra.mxu0 %v5519
    %v5521 = vand.u32 %v3312, 4294901760
    %5522 = vmatpush.msra.mxu0 %v5521
    %v5523 = vand.u32 %v3308, 4294901760
    %5524 = vmatpush.msra.mxu0 %v5523
    %v5525 = vand.u32 %v3304, 4294901760
    %5526 = vmatpush.msra.mxu0 %v5525
    %v5527 = vand.u32 %v3300, 4294901760
    %5528 = vmatpush.msra.mxu0 %v5527
    %v5529 = vand.u32 %v3296, 4294901760
    %5530 = vmatpush.msra.mxu0 %v5529
    %v5531 = vand.u32 %v3292, 4294901760
    %5532 = vmatpush.msra.mxu0 %v5531
    %v5533 = vand.u32 %v3288, 4294901760
    %5534 = vmatpush.msra.mxu0 %v5533
    %v5535 = vand.u32 %v3284, 4294901760
    %5536 = vmatpush.msra.mxu0 %v5535
    %v5537 = vand.u32 %v3280, 4294901760
    %5538 = vmatpush.msra.mxu0 %v5537
    %v5539 = vand.u32 %v3276, 4294901760
    %5540 = vmatpush.msra.mxu0 %v5539
    %v5541 = vand.u32 %v3272, 4294901760
    %5542 = vmatpush.msra.mxu0 %v5541
    %v5543 = vand.u32 %v3268, 4294901760
    %5544 = vmatpush.msra.mxu0 %v5543
    %v5545 = vand.u32 %v3264, 4294901760
    %5546 = vmatpush.msra.mxu0 %v5545
    %v5547 = vand.u32 %v3260, 4294901760
    %5548 = vmatpush.msra.mxu0 %v5547
    %v5549 = vand.u32 %v3256, 4294901760
    %5550 = vmatpush.msra.mxu0 %v5549
    %v5551 = vand.u32 %v3187, 4294901760
    %5552 = vmatmul.f32.gmra.mxu0 %v5551
    %v5553 = vpop.f32.mrf.mxu0
    %v5554 = vadd.f32 %v5513, %v5553
    %v5555 = vand.u32 %v3189, 4294901760
    %5556 = vmatmul.f32.gmra.mxu0 %v5555
    %v5557 = vpop.f32.mrf.mxu0
    %v5558 = vadd.f32 %v5517, %v5557
    %5559 = vdwg.mxu0
    %v5560 = vand.u32 %v3253, 4294901760
    %5561 = vmatpush.msra.mxu0 %v5560
    %v5562 = vand.u32 %v3249, 4294901760
    %5563 = vmatpush.msra.mxu0 %v5562
    %v5564 = vand.u32 %v3245, 4294901760
    %5565 = vmatpush.msra.mxu0 %v5564
    %v5566 = vand.u32 %v3241, 4294901760
    %5567 = vmatpush.msra.mxu0 %v5566
    %v5568 = vand.u32 %v3237, 4294901760
    %5569 = vmatpush.msra.mxu0 %v5568
    %v5570 = vand.u32 %v3233, 4294901760
    %5571 = vmatpush.msra.mxu0 %v5570
    %v5572 = vand.u32 %v3229, 4294901760
    %5573 = vmatpush.msra.mxu0 %v5572
    %v5574 = vand.u32 %v3225, 4294901760
    %5575 = vmatpush.msra.mxu0 %v5574
    %v5576 = vand.u32 %v3221, 4294901760
    %5577 = vmatpush.msra.mxu0 %v5576
    %v5578 = vand.u32 %v3217, 4294901760
    %5579 = vmatpush.msra.mxu0 %v5578
    %v5580 = vand.u32 %v3213, 4294901760
    %5581 = vmatpush.msra.mxu0 %v5580
    %v5582 = vand.u32 %v3209, 4294901760
    %5583 = vmatpush.msra.mxu0 %v5582
    %v5584 = vand.u32 %v3205, 4294901760
    %5585 = vmatpush.msra.mxu0 %v5584
    %v5586 = vand.u32 %v3201, 4294901760
    %5587 = vmatpush.msra.mxu0 %v5586
    %v5588 = vand.u32 %v3197, 4294901760
    %5589 = vmatpush.msra.mxu0 %v5588
    %v5590 = vand.u32 %v3193, 4294901760
    %5591 = vmatpush.msra.mxu0 %v5590
    %v5592 = vand.u32 %v3186, 4294901760
    %v5593 = vsub.f32 %v3186, %v5592
    %v5594 = vand.u32 %v5593, 4294901760
    %v5595 = vsub.f32 %v5593, %v5594
    %v5596 = vand.u32 %v5595, 4294901760
    %5597 = vmatmul.f32.gmra.mxu0 %v5596
    %v5598 = vpop.f32.mrf.mxu0
    %v5599 = vadd.f32 %v3323, %v5598
    %v5600 = vand.u32 %v3188, 4294901760
    %v5601 = vsub.f32 %v3188, %v5600
    %v5602 = vand.u32 %v5601, 4294901760
    %v5603 = vsub.f32 %v5601, %v5602
    %v5604 = vand.u32 %v5603, 4294901760
    %5605 = vmatmul.f32.gmra.mxu0 %v5604
    %v5606 = vpop.f32.mrf.mxu0
    %v5607 = vadd.f32 %v3323, %v5606
    %5608 = vdwg.mxu0
    %v5609 = vand.u32 %v3253, 4294901760
    %v5610 = vsub.f32 %v3253, %v5609
    %v5611 = vand.u32 %v5610, 4294901760
    %v5612 = vsub.f32 %v5610, %v5611
    %v5613 = vand.u32 %v5612, 4294901760
    %5614 = vmatpush.msra.mxu0 %v5613
    %v5615 = vand.u32 %v3249, 4294901760
    %v5616 = vsub.f32 %v3249, %v5615
    %v5617 = vand.u32 %v5616, 4294901760
    %v5618 = vsub.f32 %v5616, %v5617
    %v5619 = vand.u32 %v5618, 4294901760
    %5620 = vmatpush.msra.mxu0 %v5619
    %v5621 = vand.u32 %v3245, 4294901760
    %v5622 = vsub.f32 %v3245, %v5621
    %v5623 = vand.u32 %v5622, 4294901760
    %v5624 = vsub.f32 %v5622, %v5623
    %v5625 = vand.u32 %v5624, 4294901760
    %5626 = vmatpush.msra.mxu0 %v5625
    %v5627 = vand.u32 %v3241, 4294901760
    %v5628 = vsub.f32 %v3241, %v5627
    %v5629 = vand.u32 %v5628, 4294901760
    %v5630 = vsub.f32 %v5628, %v5629
    %v5631 = vand.u32 %v5630, 4294901760
    %5632 = vmatpush.msra.mxu0 %v5631
    %v5633 = vand.u32 %v3237, 4294901760
    %v5634 = vsub.f32 %v3237, %v5633
    %v5635 = vand.u32 %v5634, 4294901760
    %v5636 = vsub.f32 %v5634, %v5635
    %v5637 = vand.u32 %v5636, 4294901760
    %5638 = vmatpush.msra.mxu0 %v5637
    %v5639 = vand.u32 %v3233, 4294901760
    %v5640 = vsub.f32 %v3233, %v5639
    %v5641 = vand.u32 %v5640, 4294901760
    %v5642 = vsub.f32 %v5640, %v5641
    %v5643 = vand.u32 %v5642, 4294901760
    %5644 = vmatpush.msra.mxu0 %v5643
    %v5645 = vand.u32 %v3229, 4294901760
    %v5646 = vsub.f32 %v3229, %v5645
    %v5647 = vand.u32 %v5646, 4294901760
    %v5648 = vsub.f32 %v5646, %v5647
    %v5649 = vand.u32 %v5648, 4294901760
    %5650 = vmatpush.msra.mxu0 %v5649
    %v5651 = vand.u32 %v3225, 4294901760
    %v5652 = vsub.f32 %v3225, %v5651
    %v5653 = vand.u32 %v5652, 4294901760
    %v5654 = vsub.f32 %v5652, %v5653
    %v5655 = vand.u32 %v5654, 4294901760
    %5656 = vmatpush.msra.mxu0 %v5655
    %v5657 = vand.u32 %v3221, 4294901760
    %v5658 = vsub.f32 %v3221, %v5657
    %v5659 = vand.u32 %v5658, 4294901760
    %v5660 = vsub.f32 %v5658, %v5659
    %v5661 = vand.u32 %v5660, 4294901760
    %5662 = vmatpush.msra.mxu0 %v5661
    %v5663 = vand.u32 %v3217, 4294901760
    %v5664 = vsub.f32 %v3217, %v5663
    %v5665 = vand.u32 %v5664, 4294901760
    %v5666 = vsub.f32 %v5664, %v5665
    %v5667 = vand.u32 %v5666, 4294901760
    %5668 = vmatpush.msra.mxu0 %v5667
    %v5669 = vand.u32 %v3213, 4294901760
    %v5670 = vsub.f32 %v3213, %v5669
    %v5671 = vand.u32 %v5670, 4294901760
    %v5672 = vsub.f32 %v5670, %v5671
    %v5673 = vand.u32 %v5672, 4294901760
    %5674 = vmatpush.msra.mxu0 %v5673
    %v5675 = vand.u32 %v3209, 4294901760
    %v5676 = vsub.f32 %v3209, %v5675
    %v5677 = vand.u32 %v5676, 4294901760
    %v5678 = vsub.f32 %v5676, %v5677
    %v5679 = vand.u32 %v5678, 4294901760
    %5680 = vmatpush.msra.mxu0 %v5679
    %v5681 = vand.u32 %v3205, 4294901760
    %v5682 = vsub.f32 %v3205, %v5681
    %v5683 = vand.u32 %v5682, 4294901760
    %v5684 = vsub.f32 %v5682, %v5683
    %v5685 = vand.u32 %v5684, 4294901760
    %5686 = vmatpush.msra.mxu0 %v5685
    %v5687 = vand.u32 %v3201, 4294901760
    %v5688 = vsub.f32 %v3201, %v5687
    %v5689 = vand.u32 %v5688, 4294901760
    %v5690 = vsub.f32 %v5688, %v5689
    %v5691 = vand.u32 %v5690, 4294901760
    %5692 = vmatpush.msra.mxu0 %v5691
    %v5693 = vand.u32 %v3197, 4294901760
    %v5694 = vsub.f32 %v3197, %v5693
    %v5695 = vand.u32 %v5694, 4294901760
    %v5696 = vsub.f32 %v5694, %v5695
    %v5697 = vand.u32 %v5696, 4294901760
    %5698 = vmatpush.msra.mxu0 %v5697
    %v5699 = vand.u32 %v3193, 4294901760
    %v5700 = vsub.f32 %v3193, %v5699
    %v5701 = vand.u32 %v5700, 4294901760
    %v5702 = vsub.f32 %v5700, %v5701
    %v5703 = vand.u32 %v5702, 4294901760
    %5704 = vmatpush.msra.mxu0 %v5703
    %v5705 = vand.u32 %v3186, 4294901760
    %5706 = vmatmul.f32.gmra.mxu0 %v5705
    %v5707 = vpop.f32.mrf.mxu0
    %v5708 = vadd.f32 %v5599, %v5707
    %v5709 = vand.u32 %v3188, 4294901760
    %5710 = vmatmul.f32.gmra.mxu0 %v5709
    %v5711 = vpop.f32.mrf.mxu0
    %v5712 = vadd.f32 %v5607, %v5711
    %5713 = vdwg.mxu0
    %v5714 = vand.u32 %v3253, 4294901760
    %v5715 = vsub.f32 %v3253, %v5714
    %5716 = vmatpush.msra.mxu0 %v5715
    %v5717 = vand.u32 %v3249, 4294901760
    %v5718 = vsub.f32 %v3249, %v5717
    %5719 = vmatpush.msra.mxu0 %v5718
    %v5720 = vand.u32 %v3245, 4294901760
    %v5721 = vsub.f32 %v3245, %v5720
    %5722 = vmatpush.msra.mxu0 %v5721
    %v5723 = vand.u32 %v3241, 4294901760
    %v5724 = vsub.f32 %v3241, %v5723
    %5725 = vmatpush.msra.mxu0 %v5724
    %v5726 = vand.u32 %v3237, 4294901760
    %v5727 = vsub.f32 %v3237, %v5726
    %5728 = vmatpush.msra.mxu0 %v5727
    %v5729 = vand.u32 %v3233, 4294901760
    %v5730 = vsub.f32 %v3233, %v5729
    %5731 = vmatpush.msra.mxu0 %v5730
    %v5732 = vand.u32 %v3229, 4294901760
    %v5733 = vsub.f32 %v3229, %v5732
    %5734 = vmatpush.msra.mxu0 %v5733
    %v5735 = vand.u32 %v3225, 4294901760
    %v5736 = vsub.f32 %v3225, %v5735
    %5737 = vmatpush.msra.mxu0 %v5736
    %v5738 = vand.u32 %v3221, 4294901760
    %v5739 = vsub.f32 %v3221, %v5738
    %5740 = vmatpush.msra.mxu0 %v5739
    %v5741 = vand.u32 %v3217, 4294901760
    %v5742 = vsub.f32 %v3217, %v5741
    %5743 = vmatpush.msra.mxu0 %v5742
    %v5744 = vand.u32 %v3213, 4294901760
    %v5745 = vsub.f32 %v3213, %v5744
    %5746 = vmatpush.msra.mxu0 %v5745
    %v5747 = vand.u32 %v3209, 4294901760
    %v5748 = vsub.f32 %v3209, %v5747
    %5749 = vmatpush.msra.mxu0 %v5748
    %v5750 = vand.u32 %v3205, 4294901760
    %v5751 = vsub.f32 %v3205, %v5750
    %5752 = vmatpush.msra.mxu0 %v5751
    %v5753 = vand.u32 %v3201, 4294901760
    %v5754 = vsub.f32 %v3201, %v5753
    %5755 = vmatpush.msra.mxu0 %v5754
    %v5756 = vand.u32 %v3197, 4294901760
    %v5757 = vsub.f32 %v3197, %v5756
    %5758 = vmatpush.msra.mxu0 %v5757
    %v5759 = vand.u32 %v3193, 4294901760
    %v5760 = vsub.f32 %v3193, %v5759
    %5761 = vmatpush.msra.mxu0 %v5760
    %v5762 = vand.u32 %v3186, 4294901760
    %v5763 = vsub.f32 %v3186, %v5762
    %5764 = vmatmul.f32.gmra.mxu0 %v5763
    %v5765 = vpop.f32.mrf.mxu0
    %v5766 = vadd.f32 %v5708, %v5765
    %v5767 = vand.u32 %v3188, 4294901760
    %v5768 = vsub.f32 %v3188, %v5767
    %5769 = vmatmul.f32.gmra.mxu0 %v5768
    %v5770 = vpop.f32.mrf.mxu0
    %v5771 = vadd.f32 %v5712, %v5770
    %5772 = vdwg.mxu0
    %v5773 = vand.u32 %v3253, 4294901760
    %5774 = vmatpush.msra.mxu0 %v5773
    %v5775 = vand.u32 %v3249, 4294901760
    %5776 = vmatpush.msra.mxu0 %v5775
    %v5777 = vand.u32 %v3245, 4294901760
    %5778 = vmatpush.msra.mxu0 %v5777
    %v5779 = vand.u32 %v3241, 4294901760
    %5780 = vmatpush.msra.mxu0 %v5779
    %v5781 = vand.u32 %v3237, 4294901760
    %5782 = vmatpush.msra.mxu0 %v5781
    %v5783 = vand.u32 %v3233, 4294901760
    %5784 = vmatpush.msra.mxu0 %v5783
    %v5785 = vand.u32 %v3229, 4294901760
    %5786 = vmatpush.msra.mxu0 %v5785
    %v5787 = vand.u32 %v3225, 4294901760
    %5788 = vmatpush.msra.mxu0 %v5787
    %v5789 = vand.u32 %v3221, 4294901760
    %5790 = vmatpush.msra.mxu0 %v5789
    %v5791 = vand.u32 %v3217, 4294901760
    %5792 = vmatpush.msra.mxu0 %v5791
    %v5793 = vand.u32 %v3213, 4294901760
    %5794 = vmatpush.msra.mxu0 %v5793
    %v5795 = vand.u32 %v3209, 4294901760
    %5796 = vmatpush.msra.mxu0 %v5795
    %v5797 = vand.u32 %v3205, 4294901760
    %5798 = vmatpush.msra.mxu0 %v5797
    %v5799 = vand.u32 %v3201, 4294901760
    %5800 = vmatpush.msra.mxu0 %v5799
    %v5801 = vand.u32 %v3197, 4294901760
    %5802 = vmatpush.msra.mxu0 %v5801
    %v5803 = vand.u32 %v3193, 4294901760
    %5804 = vmatpush.msra.mxu0 %v5803
    %v5805 = vand.u32 %v3186, 4294901760
    %v5806 = vsub.f32 %v3186, %v5805
    %v5807 = vand.u32 %v5806, 4294901760
    %5808 = vmatmul.f32.gmra.mxu0 %v5807
    %v5809 = vpop.f32.mrf.mxu0
    %v5810 = vadd.f32 %v5766, %v5809
    %v5811 = vand.u32 %v3188, 4294901760
    %v5812 = vsub.f32 %v3188, %v5811
    %v5813 = vand.u32 %v5812, 4294901760
    %5814 = vmatmul.f32.gmra.mxu0 %v5813
    %v5815 = vpop.f32.mrf.mxu0
    %v5816 = vadd.f32 %v5771, %v5815
    %5817 = vdwg.mxu0
    %v5818 = vand.u32 %v3253, 4294901760
    %v5819 = vsub.f32 %v3253, %v5818
    %v5820 = vand.u32 %v5819, 4294901760
    %5821 = vmatpush.msra.mxu0 %v5820
    %v5822 = vand.u32 %v3249, 4294901760
    %v5823 = vsub.f32 %v3249, %v5822
    %v5824 = vand.u32 %v5823, 4294901760
    %5825 = vmatpush.msra.mxu0 %v5824
    %v5826 = vand.u32 %v3245, 4294901760
    %v5827 = vsub.f32 %v3245, %v5826
    %v5828 = vand.u32 %v5827, 4294901760
    %5829 = vmatpush.msra.mxu0 %v5828
    %v5830 = vand.u32 %v3241, 4294901760
    %v5831 = vsub.f32 %v3241, %v5830
    %v5832 = vand.u32 %v5831, 4294901760
    %5833 = vmatpush.msra.mxu0 %v5832
    %v5834 = vand.u32 %v3237, 4294901760
    %v5835 = vsub.f32 %v3237, %v5834
    %v5836 = vand.u32 %v5835, 4294901760
    %5837 = vmatpush.msra.mxu0 %v5836
    %v5838 = vand.u32 %v3233, 4294901760
    %v5839 = vsub.f32 %v3233, %v5838
    %v5840 = vand.u32 %v5839, 4294901760
    %5841 = vmatpush.msra.mxu0 %v5840
    %v5842 = vand.u32 %v3229, 4294901760
    %v5843 = vsub.f32 %v3229, %v5842
    %v5844 = vand.u32 %v5843, 4294901760
    %5845 = vmatpush.msra.mxu0 %v5844
    %v5846 = vand.u32 %v3225, 4294901760
    %v5847 = vsub.f32 %v3225, %v5846
    %v5848 = vand.u32 %v5847, 4294901760
    %5849 = vmatpush.msra.mxu0 %v5848
    %v5850 = vand.u32 %v3221, 4294901760
    %v5851 = vsub.f32 %v3221, %v5850
    %v5852 = vand.u32 %v5851, 4294901760
    %5853 = vmatpush.msra.mxu0 %v5852
    %v5854 = vand.u32 %v3217, 4294901760
    %v5855 = vsub.f32 %v3217, %v5854
    %v5856 = vand.u32 %v5855, 4294901760
    %5857 = vmatpush.msra.mxu0 %v5856
    %v5858 = vand.u32 %v3213, 4294901760
    %v5859 = vsub.f32 %v3213, %v5858
    %v5860 = vand.u32 %v5859, 4294901760
    %5861 = vmatpush.msra.mxu0 %v5860
    %v5862 = vand.u32 %v3209, 4294901760
    %v5863 = vsub.f32 %v3209, %v5862
    %v5864 = vand.u32 %v5863, 4294901760
    %5865 = vmatpush.msra.mxu0 %v5864
    %v5866 = vand.u32 %v3205, 4294901760
    %v5867 = vsub.f32 %v3205, %v5866
    %v5868 = vand.u32 %v5867, 4294901760
    %5869 = vmatpush.msra.mxu0 %v5868
    %v5870 = vand.u32 %v3201, 4294901760
    %v5871 = vsub.f32 %v3201, %v5870
    %v5872 = vand.u32 %v5871, 4294901760
    %5873 = vmatpush.msra.mxu0 %v5872
    %v5874 = vand.u32 %v3197, 4294901760
    %v5875 = vsub.f32 %v3197, %v5874
    %v5876 = vand.u32 %v5875, 4294901760
    %5877 = vmatpush.msra.mxu0 %v5876
    %v5878 = vand.u32 %v3193, 4294901760
    %v5879 = vsub.f32 %v3193, %v5878
    %v5880 = vand.u32 %v5879, 4294901760
    %5881 = vmatpush.msra.mxu0 %v5880
    %v5882 = vand.u32 %v3186, 4294901760
    %5883 = vmatmul.f32.gmra.mxu0 %v5882
    %v5884 = vpop.f32.mrf.mxu0
    %v5885 = vadd.f32 %v5810, %v5884
    %v5886 = vand.u32 %v3188, 4294901760
    %5887 = vmatmul.f32.gmra.mxu0 %v5886
    %v5888 = vpop.f32.mrf.mxu0
    %v5889 = vadd.f32 %v5816, %v5888
    %5890 = vdwg.mxu0
    %v5891 = vand.u32 %v3253, 4294901760
    %5892 = vmatpush.msra.mxu0 %v5891
    %v5893 = vand.u32 %v3249, 4294901760
    %5894 = vmatpush.msra.mxu0 %v5893
    %v5895 = vand.u32 %v3245, 4294901760
    %5896 = vmatpush.msra.mxu0 %v5895
    %v5897 = vand.u32 %v3241, 4294901760
    %5898 = vmatpush.msra.mxu0 %v5897
    %v5899 = vand.u32 %v3237, 4294901760
    %5900 = vmatpush.msra.mxu0 %v5899
    %v5901 = vand.u32 %v3233, 4294901760
    %5902 = vmatpush.msra.mxu0 %v5901
    %v5903 = vand.u32 %v3229, 4294901760
    %5904 = vmatpush.msra.mxu0 %v5903
    %v5905 = vand.u32 %v3225, 4294901760
    %5906 = vmatpush.msra.mxu0 %v5905
    %v5907 = vand.u32 %v3221, 4294901760
    %5908 = vmatpush.msra.mxu0 %v5907
    %v5909 = vand.u32 %v3217, 4294901760
    %5910 = vmatpush.msra.mxu0 %v5909
    %v5911 = vand.u32 %v3213, 4294901760
    %5912 = vmatpush.msra.mxu0 %v5911
    %v5913 = vand.u32 %v3209, 4294901760
    %5914 = vmatpush.msra.mxu0 %v5913
    %v5915 = vand.u32 %v3205, 4294901760
    %5916 = vmatpush.msra.mxu0 %v5915
    %v5917 = vand.u32 %v3201, 4294901760
    %5918 = vmatpush.msra.mxu0 %v5917
    %v5919 = vand.u32 %v3197, 4294901760
    %5920 = vmatpush.msra.mxu0 %v5919
    %v5921 = vand.u32 %v3193, 4294901760
    %5922 = vmatpush.msra.mxu0 %v5921
    %v5923 = vand.u32 %v3186, 4294901760
    %5924 = vmatmul.f32.gmra.mxu0 %v5923
    %v5925 = vpop.f32.mrf.mxu0
    %v5926 = vadd.f32 %v5885, %v5925
    %v5927 = vand.u32 %v3188, 4294901760
    %5928 = vmatmul.f32.gmra.mxu0 %v5927
    %v5929 = vpop.f32.mrf.mxu0
    %v5930 = vadd.f32 %v5889, %v5929
    %5931 = vdwg.mxu0
    %v5932 = vand.u32 %v3317, 4294901760
    %5933 = vmatpush.msra.mxu0 %v5932
    %v5934 = vand.u32 %v3313, 4294901760
    %5935 = vmatpush.msra.mxu0 %v5934
    %v5936 = vand.u32 %v3309, 4294901760
    %5937 = vmatpush.msra.mxu0 %v5936
    %v5938 = vand.u32 %v3305, 4294901760
    %5939 = vmatpush.msra.mxu0 %v5938
    %v5940 = vand.u32 %v3301, 4294901760
    %5941 = vmatpush.msra.mxu0 %v5940
    %v5942 = vand.u32 %v3297, 4294901760
    %5943 = vmatpush.msra.mxu0 %v5942
    %v5944 = vand.u32 %v3293, 4294901760
    %5945 = vmatpush.msra.mxu0 %v5944
    %v5946 = vand.u32 %v3289, 4294901760
    %5947 = vmatpush.msra.mxu0 %v5946
    %v5948 = vand.u32 %v3285, 4294901760
    %5949 = vmatpush.msra.mxu0 %v5948
    %v5950 = vand.u32 %v3281, 4294901760
    %5951 = vmatpush.msra.mxu0 %v5950
    %v5952 = vand.u32 %v3277, 4294901760
    %5953 = vmatpush.msra.mxu0 %v5952
    %v5954 = vand.u32 %v3273, 4294901760
    %5955 = vmatpush.msra.mxu0 %v5954
    %v5956 = vand.u32 %v3269, 4294901760
    %5957 = vmatpush.msra.mxu0 %v5956
    %v5958 = vand.u32 %v3265, 4294901760
    %5959 = vmatpush.msra.mxu0 %v5958
    %v5960 = vand.u32 %v3261, 4294901760
    %5961 = vmatpush.msra.mxu0 %v5960
    %v5962 = vand.u32 %v3257, 4294901760
    %5963 = vmatpush.msra.mxu0 %v5962
    %v5964 = vand.u32 %v3187, 4294901760
    %v5965 = vsub.f32 %v3187, %v5964
    %v5966 = vand.u32 %v5965, 4294901760
    %v5967 = vsub.f32 %v5965, %v5966
    %v5968 = vand.u32 %v5967, 4294901760
    %5969 = vmatmul.f32.gmra.mxu0 %v5968
    %v5970 = vpop.f32.mrf.mxu0
    %v5971 = vadd.f32 %v5926, %v5970
    %v5972 = vand.u32 %v3189, 4294901760
    %v5973 = vsub.f32 %v3189, %v5972
    %v5974 = vand.u32 %v5973, 4294901760
    %v5975 = vsub.f32 %v5973, %v5974
    %v5976 = vand.u32 %v5975, 4294901760
    %5977 = vmatmul.f32.gmra.mxu0 %v5976
    %v5978 = vpop.f32.mrf.mxu0
    %v5979 = vadd.f32 %v5930, %v5978
    %5980 = vdwg.mxu0
    %v5981 = vand.u32 %v3317, 4294901760
    %v5982 = vsub.f32 %v3317, %v5981
    %v5983 = vand.u32 %v5982, 4294901760
    %v5984 = vsub.f32 %v5982, %v5983
    %v5985 = vand.u32 %v5984, 4294901760
    %5986 = vmatpush.msra.mxu0 %v5985
    %v5987 = vand.u32 %v3313, 4294901760
    %v5988 = vsub.f32 %v3313, %v5987
    %v5989 = vand.u32 %v5988, 4294901760
    %v5990 = vsub.f32 %v5988, %v5989
    %v5991 = vand.u32 %v5990, 4294901760
    %5992 = vmatpush.msra.mxu0 %v5991
    %v5993 = vand.u32 %v3309, 4294901760
    %v5994 = vsub.f32 %v3309, %v5993
    %v5995 = vand.u32 %v5994, 4294901760
    %v5996 = vsub.f32 %v5994, %v5995
    %v5997 = vand.u32 %v5996, 4294901760
    %5998 = vmatpush.msra.mxu0 %v5997
    %v5999 = vand.u32 %v3305, 4294901760
    %v6000 = vsub.f32 %v3305, %v5999
    %v6001 = vand.u32 %v6000, 4294901760
    %v6002 = vsub.f32 %v6000, %v6001
    %v6003 = vand.u32 %v6002, 4294901760
    %6004 = vmatpush.msra.mxu0 %v6003
    %v6005 = vand.u32 %v3301, 4294901760
    %v6006 = vsub.f32 %v3301, %v6005
    %v6007 = vand.u32 %v6006, 4294901760
    %v6008 = vsub.f32 %v6006, %v6007
    %v6009 = vand.u32 %v6008, 4294901760
    %6010 = vmatpush.msra.mxu0 %v6009
    %v6011 = vand.u32 %v3297, 4294901760
    %v6012 = vsub.f32 %v3297, %v6011
    %v6013 = vand.u32 %v6012, 4294901760
    %v6014 = vsub.f32 %v6012, %v6013
    %v6015 = vand.u32 %v6014, 4294901760
    %6016 = vmatpush.msra.mxu0 %v6015
    %v6017 = vand.u32 %v3293, 4294901760
    %v6018 = vsub.f32 %v3293, %v6017
    %v6019 = vand.u32 %v6018, 4294901760
    %v6020 = vsub.f32 %v6018, %v6019
    %v6021 = vand.u32 %v6020, 4294901760
    %6022 = vmatpush.msra.mxu0 %v6021
    %v6023 = vand.u32 %v3289, 4294901760
    %v6024 = vsub.f32 %v3289, %v6023
    %v6025 = vand.u32 %v6024, 4294901760
    %v6026 = vsub.f32 %v6024, %v6025
    %v6027 = vand.u32 %v6026, 4294901760
    %6028 = vmatpush.msra.mxu0 %v6027
    %v6029 = vand.u32 %v3285, 4294901760
    %v6030 = vsub.f32 %v3285, %v6029
    %v6031 = vand.u32 %v6030, 4294901760
    %v6032 = vsub.f32 %v6030, %v6031
    %v6033 = vand.u32 %v6032, 4294901760
    %6034 = vmatpush.msra.mxu0 %v6033
    %v6035 = vand.u32 %v3281, 4294901760
    %v6036 = vsub.f32 %v3281, %v6035
    %v6037 = vand.u32 %v6036, 4294901760
    %v6038 = vsub.f32 %v6036, %v6037
    %v6039 = vand.u32 %v6038, 4294901760
    %6040 = vmatpush.msra.mxu0 %v6039
    %v6041 = vand.u32 %v3277, 4294901760
    %v6042 = vsub.f32 %v3277, %v6041
    %v6043 = vand.u32 %v6042, 4294901760
    %v6044 = vsub.f32 %v6042, %v6043
    %v6045 = vand.u32 %v6044, 4294901760
    %6046 = vmatpush.msra.mxu0 %v6045
    %v6047 = vand.u32 %v3273, 4294901760
    %v6048 = vsub.f32 %v3273, %v6047
    %v6049 = vand.u32 %v6048, 4294901760
    %v6050 = vsub.f32 %v6048, %v6049
    %v6051 = vand.u32 %v6050, 4294901760
    %6052 = vmatpush.msra.mxu0 %v6051
    %v6053 = vand.u32 %v3269, 4294901760
    %v6054 = vsub.f32 %v3269, %v6053
    %v6055 = vand.u32 %v6054, 4294901760
    %v6056 = vsub.f32 %v6054, %v6055
    %v6057 = vand.u32 %v6056, 4294901760
    %6058 = vmatpush.msra.mxu0 %v6057
    %v6059 = vand.u32 %v3265, 4294901760
    %v6060 = vsub.f32 %v3265, %v6059
    %v6061 = vand.u32 %v6060, 4294901760
    %v6062 = vsub.f32 %v6060, %v6061
    %v6063 = vand.u32 %v6062, 4294901760
    %6064 = vmatpush.msra.mxu0 %v6063
    %v6065 = vand.u32 %v3261, 4294901760
    %v6066 = vsub.f32 %v3261, %v6065
    %v6067 = vand.u32 %v6066, 4294901760
    %v6068 = vsub.f32 %v6066, %v6067
    %v6069 = vand.u32 %v6068, 4294901760
    %6070 = vmatpush.msra.mxu0 %v6069
    %v6071 = vand.u32 %v3257, 4294901760
    %v6072 = vsub.f32 %v3257, %v6071
    %v6073 = vand.u32 %v6072, 4294901760
    %v6074 = vsub.f32 %v6072, %v6073
    %v6075 = vand.u32 %v6074, 4294901760
    %6076 = vmatpush.msra.mxu0 %v6075
    %v6077 = vand.u32 %v3187, 4294901760
    %6078 = vmatmul.f32.gmra.mxu0 %v6077
    %v6079 = vpop.f32.mrf.mxu0
    %v6080 = vadd.f32 %v5971, %v6079
    %v6081 = vand.u32 %v3189, 4294901760
    %6082 = vmatmul.f32.gmra.mxu0 %v6081
    %v6083 = vpop.f32.mrf.mxu0
    %v6084 = vadd.f32 %v5979, %v6083
    %6085 = vdwg.mxu0
    %v6086 = vand.u32 %v3317, 4294901760
    %v6087 = vsub.f32 %v3317, %v6086
    %6088 = vmatpush.msra.mxu0 %v6087
    %v6089 = vand.u32 %v3313, 4294901760
    %v6090 = vsub.f32 %v3313, %v6089
    %6091 = vmatpush.msra.mxu0 %v6090
    %v6092 = vand.u32 %v3309, 4294901760
    %v6093 = vsub.f32 %v3309, %v6092
    %6094 = vmatpush.msra.mxu0 %v6093
    %v6095 = vand.u32 %v3305, 4294901760
    %v6096 = vsub.f32 %v3305, %v6095
    %6097 = vmatpush.msra.mxu0 %v6096
    %v6098 = vand.u32 %v3301, 4294901760
    %v6099 = vsub.f32 %v3301, %v6098
    %6100 = vmatpush.msra.mxu0 %v6099
    %v6101 = vand.u32 %v3297, 4294901760
    %v6102 = vsub.f32 %v3297, %v6101
    %6103 = vmatpush.msra.mxu0 %v6102
    %v6104 = vand.u32 %v3293, 4294901760
    %v6105 = vsub.f32 %v3293, %v6104
    %6106 = vmatpush.msra.mxu0 %v6105
    %v6107 = vand.u32 %v3289, 4294901760
    %v6108 = vsub.f32 %v3289, %v6107
    %6109 = vmatpush.msra.mxu0 %v6108
    %v6110 = vand.u32 %v3285, 4294901760
    %v6111 = vsub.f32 %v3285, %v6110
    %6112 = vmatpush.msra.mxu0 %v6111
    %v6113 = vand.u32 %v3281, 4294901760
    %v6114 = vsub.f32 %v3281, %v6113
    %6115 = vmatpush.msra.mxu0 %v6114
    %v6116 = vand.u32 %v3277, 4294901760
    %v6117 = vsub.f32 %v3277, %v6116
    %6118 = vmatpush.msra.mxu0 %v6117
    %v6119 = vand.u32 %v3273, 4294901760
    %v6120 = vsub.f32 %v3273, %v6119
    %6121 = vmatpush.msra.mxu0 %v6120
    %v6122 = vand.u32 %v3269, 4294901760
    %v6123 = vsub.f32 %v3269, %v6122
    %6124 = vmatpush.msra.mxu0 %v6123
    %v6125 = vand.u32 %v3265, 4294901760
    %v6126 = vsub.f32 %v3265, %v6125
    %6127 = vmatpush.msra.mxu0 %v6126
    %v6128 = vand.u32 %v3261, 4294901760
    %v6129 = vsub.f32 %v3261, %v6128
    %6130 = vmatpush.msra.mxu0 %v6129
    %v6131 = vand.u32 %v3257, 4294901760
    %v6132 = vsub.f32 %v3257, %v6131
    %6133 = vmatpush.msra.mxu0 %v6132
    %v6134 = vand.u32 %v3187, 4294901760
    %v6135 = vsub.f32 %v3187, %v6134
    %6136 = vmatmul.f32.gmra.mxu0 %v6135
    %v6137 = vpop.f32.mrf.mxu0
    %v6138 = vadd.f32 %v6080, %v6137
    %v6139 = vand.u32 %v3189, 4294901760
    %v6140 = vsub.f32 %v3189, %v6139
    %6141 = vmatmul.f32.gmra.mxu0 %v6140
    %v6142 = vpop.f32.mrf.mxu0
    %v6143 = vadd.f32 %v6084, %v6142
    %6144 = vdwg.mxu0
    %v6145 = vand.u32 %v3317, 4294901760
    %6146 = vmatpush.msra.mxu0 %v6145
    %v6147 = vand.u32 %v3313, 4294901760
    %6148 = vmatpush.msra.mxu0 %v6147
    %v6149 = vand.u32 %v3309, 4294901760
    %6150 = vmatpush.msra.mxu0 %v6149
    %v6151 = vand.u32 %v3305, 4294901760
    %6152 = vmatpush.msra.mxu0 %v6151
    %v6153 = vand.u32 %v3301, 4294901760
    %6154 = vmatpush.msra.mxu0 %v6153
    %v6155 = vand.u32 %v3297, 4294901760
    %6156 = vmatpush.msra.mxu0 %v6155
    %v6157 = vand.u32 %v3293, 4294901760
    %6158 = vmatpush.msra.mxu0 %v6157
    %v6159 = vand.u32 %v3289, 4294901760
    %6160 = vmatpush.msra.mxu0 %v6159
    %v6161 = vand.u32 %v3285, 4294901760
    %6162 = vmatpush.msra.mxu0 %v6161
    %v6163 = vand.u32 %v3281, 4294901760
    %6164 = vmatpush.msra.mxu0 %v6163
    %v6165 = vand.u32 %v3277, 4294901760
    %6166 = vmatpush.msra.mxu0 %v6165
    %v6167 = vand.u32 %v3273, 4294901760
    %6168 = vmatpush.msra.mxu0 %v6167
    %v6169 = vand.u32 %v3269, 4294901760
    %6170 = vmatpush.msra.mxu0 %v6169
    %v6171 = vand.u32 %v3265, 4294901760
    %6172 = vmatpush.msra.mxu0 %v6171
    %v6173 = vand.u32 %v3261, 4294901760
    %6174 = vmatpush.msra.mxu0 %v6173
    %v6175 = vand.u32 %v3257, 4294901760
    %6176 = vmatpush.msra.mxu0 %v6175
    %v6177 = vand.u32 %v3187, 4294901760
    %v6178 = vsub.f32 %v3187, %v6177
    %v6179 = vand.u32 %v6178, 4294901760
    %6180 = vmatmul.f32.gmra.mxu0 %v6179
    %v6181 = vpop.f32.mrf.mxu0
    %v6182 = vadd.f32 %v6138, %v6181
    %v6183 = vand.u32 %v3189, 4294901760
    %v6184 = vsub.f32 %v3189, %v6183
    %v6185 = vand.u32 %v6184, 4294901760
    %6186 = vmatmul.f32.gmra.mxu0 %v6185
    %v6187 = vpop.f32.mrf.mxu0
    %v6188 = vadd.f32 %v6143, %v6187
    %6189 = vdwg.mxu0
    %v6190 = vand.u32 %v3317, 4294901760
    %v6191 = vsub.f32 %v3317, %v6190
    %v6192 = vand.u32 %v6191, 4294901760
    %6193 = vmatpush.msra.mxu0 %v6192
    %v6194 = vand.u32 %v3313, 4294901760
    %v6195 = vsub.f32 %v3313, %v6194
    %v6196 = vand.u32 %v6195, 4294901760
    %6197 = vmatpush.msra.mxu0 %v6196
    %v6198 = vand.u32 %v3309, 4294901760
    %v6199 = vsub.f32 %v3309, %v6198
    %v6200 = vand.u32 %v6199, 4294901760
    %6201 = vmatpush.msra.mxu0 %v6200
    %v6202 = vand.u32 %v3305, 4294901760
    %v6203 = vsub.f32 %v3305, %v6202
    %v6204 = vand.u32 %v6203, 4294901760
    %6205 = vmatpush.msra.mxu0 %v6204
    %v6206 = vand.u32 %v3301, 4294901760
    %v6207 = vsub.f32 %v3301, %v6206
    %v6208 = vand.u32 %v6207, 4294901760
    %6209 = vmatpush.msra.mxu0 %v6208
    %v6210 = vand.u32 %v3297, 4294901760
    %v6211 = vsub.f32 %v3297, %v6210
    %v6212 = vand.u32 %v6211, 4294901760
    %6213 = vmatpush.msra.mxu0 %v6212
    %v6214 = vand.u32 %v3293, 4294901760
    %v6215 = vsub.f32 %v3293, %v6214
    %v6216 = vand.u32 %v6215, 4294901760
    %6217 = vmatpush.msra.mxu0 %v6216
    %v6218 = vand.u32 %v3289, 4294901760
    %v6219 = vsub.f32 %v3289, %v6218
    %v6220 = vand.u32 %v6219, 4294901760
    %6221 = vmatpush.msra.mxu0 %v6220
    %v6222 = vand.u32 %v3285, 4294901760
    %v6223 = vsub.f32 %v3285, %v6222
    %v6224 = vand.u32 %v6223, 4294901760
    %6225 = vmatpush.msra.mxu0 %v6224
    %v6226 = vand.u32 %v3281, 4294901760
    %v6227 = vsub.f32 %v3281, %v6226
    %v6228 = vand.u32 %v6227, 4294901760
    %6229 = vmatpush.msra.mxu0 %v6228
    %v6230 = vand.u32 %v3277, 4294901760
    %v6231 = vsub.f32 %v3277, %v6230
    %v6232 = vand.u32 %v6231, 4294901760
    %6233 = vmatpush.msra.mxu0 %v6232
    %v6234 = vand.u32 %v3273, 4294901760
    %v6235 = vsub.f32 %v3273, %v6234
    %v6236 = vand.u32 %v6235, 4294901760
    %6237 = vmatpush.msra.mxu0 %v6236
    %v6238 = vand.u32 %v3269, 4294901760
    %v6239 = vsub.f32 %v3269, %v6238
    %v6240 = vand.u32 %v6239, 4294901760
    %6241 = vmatpush.msra.mxu0 %v6240
    %v6242 = vand.u32 %v3265, 4294901760
    %v6243 = vsub.f32 %v3265, %v6242
    %v6244 = vand.u32 %v6243, 4294901760
    %6245 = vmatpush.msra.mxu0 %v6244
    %v6246 = vand.u32 %v3261, 4294901760
    %v6247 = vsub.f32 %v3261, %v6246
    %v6248 = vand.u32 %v6247, 4294901760
    %6249 = vmatpush.msra.mxu0 %v6248
    %v6250 = vand.u32 %v3257, 4294901760
    %v6251 = vsub.f32 %v3257, %v6250
    %v6252 = vand.u32 %v6251, 4294901760
    %6253 = vmatpush.msra.mxu0 %v6252
    %v6254 = vand.u32 %v3187, 4294901760
    %6255 = vmatmul.f32.gmra.mxu0 %v6254
    %v6256 = vpop.f32.mrf.mxu0
    %v6257 = vadd.f32 %v6182, %v6256
    %v6258 = vand.u32 %v3189, 4294901760
    %6259 = vmatmul.f32.gmra.mxu0 %v6258
    %v6260 = vpop.f32.mrf.mxu0
    %v6261 = vadd.f32 %v6188, %v6260
    %6262 = vdwg.mxu0
    %v6263 = vand.u32 %v3317, 4294901760
    %6264 = vmatpush.msra.mxu0 %v6263
    %v6265 = vand.u32 %v3313, 4294901760
    %6266 = vmatpush.msra.mxu0 %v6265
    %v6267 = vand.u32 %v3309, 4294901760
    %6268 = vmatpush.msra.mxu0 %v6267
    %v6269 = vand.u32 %v3305, 4294901760
    %6270 = vmatpush.msra.mxu0 %v6269
    %v6271 = vand.u32 %v3301, 4294901760
    %6272 = vmatpush.msra.mxu0 %v6271
    %v6273 = vand.u32 %v3297, 4294901760
    %6274 = vmatpush.msra.mxu0 %v6273
    %v6275 = vand.u32 %v3293, 4294901760
    %6276 = vmatpush.msra.mxu0 %v6275
    %v6277 = vand.u32 %v3289, 4294901760
    %6278 = vmatpush.msra.mxu0 %v6277
    %v6279 = vand.u32 %v3285, 4294901760
    %6280 = vmatpush.msra.mxu0 %v6279
    %v6281 = vand.u32 %v3281, 4294901760
    %6282 = vmatpush.msra.mxu0 %v6281
    %v6283 = vand.u32 %v3277, 4294901760
    %6284 = vmatpush.msra.mxu0 %v6283
    %v6285 = vand.u32 %v3273, 4294901760
    %6286 = vmatpush.msra.mxu0 %v6285
    %v6287 = vand.u32 %v3269, 4294901760
    %6288 = vmatpush.msra.mxu0 %v6287
    %v6289 = vand.u32 %v3265, 4294901760
    %6290 = vmatpush.msra.mxu0 %v6289
    %v6291 = vand.u32 %v3261, 4294901760
    %6292 = vmatpush.msra.mxu0 %v6291
    %v6293 = vand.u32 %v3257, 4294901760
    %6294 = vmatpush.msra.mxu0 %v6293
    %v6295 = vand.u32 %v3187, 4294901760
    %6296 = vmatmul.f32.gmra.mxu0 %v6295
    %v6297 = vpop.f32.mrf.mxu0
    %v6298 = vadd.f32 %v6257, %v6297
    %v6299 = vand.u32 %v3189, 4294901760
    %6300 = vmatmul.f32.gmra.mxu0 %v6299
    %v6301 = vpop.f32.mrf.mxu0
    %v6302 = vadd.f32 %v6261, %v6301
    %6303 = vdwg.mxu0
    %6304 = vst [vmem:[#allocation8] sm:$0xff] %v4066
    %6305 = vst [vmem:[#allocation8 + $0x8] sm:$0xff] %v4810
    %6306 = vst [vmem:[#allocation8 + $0x10] sm:$0xff] %v5554
    %6307 = vst [vmem:[#allocation8 + $0x18] sm:$0xff] %v6298
    %6308 = vst [vmem:[#allocation8 + $0x20] sm:$0xff] %v4070
    %6309 = vst [vmem:[#allocation8 + $0x28] sm:$0xff] %v4814
    %6310 = vst [vmem:[#allocation8 + $0x30] sm:$0xff] %v5558
    %6311 = vst [vmem:[#allocation8 + $0x38] sm:$0xff] %v6302
    // Predicated region
    $region34: #{local_attention_mlp.1} parent=1 // pred_check
      _
    $region35: #{local_attention_mlp.1} parent=1 // pred_check_branch
      %6313 = sbr.rel (0) target = $region37
    $region36: #{local_attention_mlp.1} parent=1 // pred_region
      %6315 = vsyncadd [#allocation4], 0
      %s6316 = sshll.u32 [#allocation8], 4
      %s6317 = int_to_ptr.vmem [resolvable:$true] %s6316
      %s6318 = sshll.u32 %s5, 4
      %s6319 = int_to_ptr.hbm [resolvable:$true] %s6318
      %6324 = dma.vmem_to_hbm [thread:$0]  %s6317, 1024, %s6319, [#allocation4], 512, 512, 32
    $region37: #{local_attention_mlp.1} parent=1 // pred_fallthru
      _
    // Predicated region
    $region38: #{local_attention_mlp.1} parent=1 // pred_check
      _
    $region39: #{local_attention_mlp.1} parent=1 // pred_check_branch
      %6326 = sbr.rel (0) target = $region41
    $region40: #{local_attention_mlp.1} parent=1 // pred_region
      %6328 = dma.done [#allocation4], 1024
    $region41: #{local_attention_mlp.1} parent=1 // pred_fallthru
      _
    %6329 = vsyncpa [#allocation3], 1
    %6330 = vsyncpa [#allocation6], 1
    %6331 = vsyncpa [#allocation4], 1

</llo_original>
